<compile_context>
chip_gen: v5e
topology: v5e:2x2
jax: 0.10.0
libtpu: 0.0.40
codegen_flags: <defaults>
</compile_context>

<pallas_src>
import jax
import jax.numpy as jnp
from jax.experimental import pallas as pl
from jax.experimental.pallas import tpu as pltpu

K = 5            # conv-transpose kernel size
STRIDE = 2
PAD = 2
J = 5            # fused output channels (Linear out_features)
H_IN = 32
W_IN = 32
H_OUT = (H_IN - 1) * STRIDE - 2 * PAD + K   # 63
W_OUT = (W_IN - 1) * STRIDE - 2 * PAD + K   # 63

# Packed-input scratch layout: x rows at sublanes 8..39; copy A (feeds even output
# columns) at lanes 1..32; copy B (feeds odd output columns) at lanes 65..96;
# zeros everywhere else (those zeros ARE the boundary handling).
XW_ROWS = 48
XW_COLS = 256
ROW_OFF = 8
COLA_OFF = 1
COLB_OFF = 65

# Weight-table row ordering: (row-parity p, kh-tap m, lane-shift d, channel j)
N_TAP_E = 3 * 3 * J     # 45 rows for even output rows (m=0..2, d=0..2)
N_TAP_O = 2 * 3 * J     # 30 rows for odd output rows (m=0..1, d=0..2)
WTAB_ROWS = 80          # 75 used, padded to a multiple of 8


def _ct_linear_kernel(x_ref, w_ref, b_ref, o_ref, xw_ref):
    """Fused polyphase ConvTranspose2d(1->4,k=5,s=2,p=2) + Linear(4->5).

    x_ref : (1, 1, 32, 32) f32 VMEM   raw input plane (no wrapper padding)
    w_ref : (80, 128) f32 VMEM        lane-split polyphase tap table
    b_ref : (5,) f32 SMEM             fused bias
    o_ref : (5, 64, 128) f32 VMEM     parity-separated, lane-dense output slab
    xw_ref: (48, 256) f32 VMEM        packed / zero-bordered input scratch
    """
    # ---- build the packed input plane once, fully inside the kernel ----
    xw_ref[...] = jnp.zeros_like(xw_ref)
    x = x_ref[0, 0, :, :]                                           # (32, 32)
    xw_ref[ROW_OFF:ROW_OFF + H_IN, COLA_OFF:COLA_OFF + W_IN] = x    # even-col copy
    xw_ref[ROW_OFF:ROW_OFF + H_IN, COLB_OFF:COLB_OFF + W_IN] = x    # odd-col copy

    bias = [b_ref[j] for j in range(J)]          # hoisted SMEM scalar reads

    # p = 0: even output rows (r = 2a), kh = 2m,   m = 0..2, input row = a + m - 1
    # p = 1: odd  output rows (r = 2a+1), kh = 2m+1, m = 0..1, input row = a + m
    for p, n_m, row0, base, out0 in ((0, 3, ROW_OFF - 1, 0, 0),
                                     (1, 2, ROW_OFF, N_TAP_E, 32)):
        # accumulators initialized with the fused bias splat (no final add pass)
        accs = [jnp.full((32, 128), bias[j], jnp.float32) for j in range(J)]
        for m in range(n_m):
            for d in range(3):                   # lane shift: input col = b + d - 1
                # (32,128) window straight from the ref (rides the vld slots):
                #   lane b      -> even-col input (copy A),
                #   lane 64 + b -> odd-col  input (copy B).
                sb = xw_ref[pl.ds(row0 + m, 32), pl.ds(d, 128)]
                row = base + (m * 3 + d) * J
                for j in range(J):
                    wv = w_ref[pl.ds(row + j, 1), :]   # (1,128): [even-col w | odd-col w]
                    accs[j] = accs[j] + sb * wv
        for j in range(J):                       # full, unmasked 128-lane stores
            o_ref[j, out0:out0 + 32, :] = accs[j]


def _build_tap_table(w_ct, b_ct, w_lin, b_lin):
    """Fold Linear + biases into the flipped conv-transpose taps and lane-split them."""
    f32 = jnp.float32
    wflip = w_ct[0, :, ::-1, ::-1].astype(f32)                   # (4, 5, 5)  [c, kh, kw]
    wl = w_lin.astype(f32)                                       # (5, 4)
    w_comb = jnp.einsum('jc,ckl->jkl', wl, wflip)                # (5, 5, 5)  [j, kh, kw]
    b_eff = b_lin.astype(f32) + wl @ b_ct.astype(f32)            # (5,)

    # even output cols use kw in {0,2,4} at shift d (kw = 2d);
    # odd  output cols use kw in {1,3}   at shift d (kw = 2d-1; d=0 -> zero tap).
    even_half = w_comb[:, :, 0::2]                                        # (5, 5, 3)
    odd_half = jnp.pad(w_comb, ((0, 0), (0, 0), (1, 0)))[:, :, 0::2]      # (5, 5, 3)

    def rows(p):
        e = jnp.transpose(even_half[:, p::2, :], (1, 2, 0))      # (n_m, 3, 5) [m, d, j]
        o = jnp.transpose(odd_half[:, p::2, :], (1, 2, 0))
        lane = lambda a: jnp.broadcast_to(a[..., None], a.shape + (64,))
        return jnp.concatenate([lane(e), lane(o)], axis=-1).reshape(-1, 128)

    wtab = jnp.concatenate([rows(0), rows(1)], axis=0)           # (75, 128)
    wtab = jnp.pad(wtab, ((0, WTAB_ROWS - wtab.shape[0]), (0, 0)))
    return wtab, b_eff


def _conv_transpose_linear(x, w_ct, b_ct, w_lin, b_lin):
    """x: (1, 1, 32, 32) NCHW.  Returns (1, 63, 63, 5) NHWC."""
    wtab, b_eff = _build_tap_table(w_ct, b_ct, w_lin, b_lin)

    slab = pl.pallas_call(
        _ct_linear_kernel,
        out_shape=jax.ShapeDtypeStruct((J, 64, 128), jnp.float32),
        grid=(1,),
        in_specs=[
            pl.BlockSpec((1, 1, H_IN, W_IN), lambda i: (0, 0, 0, 0)),
            pl.BlockSpec((WTAB_ROWS, 128), lambda i: (0, 0)),
            pl.BlockSpec(memory_space=pltpu.MemorySpace.SMEM),
        ],
        out_specs=pl.BlockSpec((J, 64, 128), lambda i: (0, 0, 0)),
        scratch_shapes=[pltpu.VMEM((XW_ROWS, XW_COLS), jnp.float32)],
        compiler_params=pltpu.CompilerParams(dimension_semantics=("arbitrary",)),
    )(x.astype(jnp.float32), wtab, b_eff)

    # de-interleave the parity-separated slab -> (1, 63, 63, 5) NHWC
    ee = slab[:, :32, 0:32]      # y[2a,   2b]
    eo = slab[:, :32, 64:96]     # y[2a,   2b+1]
    oe = slab[:, 32:, 0:32]      # y[2a+1, 2b]
    oo = slab[:, 32:, 64:96]     # y[2a+1, 2b+1]
    even_rows = jnp.stack([ee, eo], axis=-1).reshape(J, 32, 64)
    odd_rows = jnp.stack([oe, oo], axis=-1).reshape(J, 32, 64)
    full = jnp.stack([even_rows, odd_rows], axis=2).reshape(J, 64, 64)
    y = full[:, :H_OUT, :W_OUT]                                   # (5, 63, 63)
    return jnp.transpose(y, (1, 2, 0))[None]                      # (1, 63, 63, 5)


conv_transpose_linear = jax.jit(_conv_transpose_linear)


def reference(x, w_ct, b_ct, w_lin, b_lin):
    """Pure-JAX reference of the same semantics."""
    w_flip = jnp.transpose(w_ct, (1, 0, 2, 3))[:, :, ::-1, ::-1]  # (Cout, Cin, K, K)
    v1 = jax.lax.conv_general_dilated(
        x, w_flip, window_strides=(1, 1),
        padding=[(K - 1 - PAD, K - 1 - PAD), (K - 1 - PAD, K - 1 - PAD)],
        lhs_dilation=(STRIDE, STRIDE),
        dimension_numbers=('NCHW', 'OIHW', 'NCHW'))
    v1 = v1 + b_ct[None, :, None, None]
    v1_nhwc = jnp.transpose(v1, (0, 2, 3, 1))
    return v1_nhwc @ w_lin.T + b_lin


if __name__ == "__main__":
    key = jax.random.PRNGKey(0)
    k_x, k_wc, k_bc, k_wl, k_bl, k_x2 = jax.random.split(key, 6)

    # deterministic "parameters" (shapes from the module's __init__)
    x1 = jax.random.normal(k_x, (1, 1, 32, 32), jnp.float32)
    x2 = jax.random.normal(k_x2, (1,), jnp.float32)                   # forward ignores x2
    w_ct = jax.random.normal(k_wc, (1, 4, 5, 5), jnp.float32) * 0.2   # (Cin, Cout, K, K)
    b_ct = jax.random.normal(k_bc, (4,), jnp.float32) * 0.1
    w_lin = jax.random.normal(k_wl, (5, 4), jnp.float32) * 0.5        # (out, in)
    b_lin = jax.random.normal(k_bl, (5,), jnp.float32) * 0.1

    out = jax.block_until_ready(conv_transpose_linear(x1, w_ct, b_ct, w_lin, b_lin))
    ref = jax.block_until_ready(reference(x1, w_ct, b_ct, w_lin, b_lin))

    assert out.shape == (1, 63, 63, 5), out.shape
    assert jnp.allclose(out, ref, rtol=1e-4, atol=1e-4), float(jnp.max(jnp.abs(out - ref)))
    print("KERNEL_OK")
</pallas_src>

<mosaic_0001>
module attributes {stable_mosaic.version = 11 : i64} {
  func.func @_ct_linear_kernel(%arg0: i32, %arg1: memref<1x1x32x32xf32, #tpu.memory_space<vmem>>, %arg2: memref<80x128xf32, #tpu.memory_space<vmem>>, %arg3: memref<5xf32, #tpu.memory_space<smem>>, %arg4: memref<5x64x128xf32, #tpu.memory_space<vmem>>, %arg5: memref<48x256xf32, #tpu.memory_space<vmem>>) attributes {dimension_semantics = [#tpu.dimension_semantics<arbitrary>], iteration_bounds = array<i64: 1>, scalar_prefetch = 0 : i64, scratch_operands = 1 : i64, tpu.core_type = #tpu.core_type<tc>, window_params = [{pipeline_mode = #tpu.pipeline_mode<synchronous>, transform_indices = @transform_0, window_bounds = array<i64: 1, 1, 32, 32>}, {pipeline_mode = #tpu.pipeline_mode<synchronous>, transform_indices = @transform_1, window_bounds = array<i64: 80, 128>}, {transform_indices = @transform_2, window_bounds = array<i64: 5>}, {pipeline_mode = #tpu.pipeline_mode<synchronous>, transform_indices = @transform_3, window_bounds = array<i64: 5, 64, 128>}]} {
    %cst = arith.constant 0.000000e+00 : f32
    %0 = vector.broadcast %cst : f32 to vector<48x256xf32>
    %c0 = arith.constant 0 : index
    %c0_0 = arith.constant 0 : index
    %1 = vector.load %arg5[%c0, %c0_0] : memref<48x256xf32, #tpu.memory_space<vmem>>, vector<48x256xf32>
    tpu.vector_store %arg5[%c0, %c0_0], %0 {strides = array<i32>} : memref<48x256xf32, #tpu.memory_space<vmem>>, vector<48x256xf32>,
    %c0_1 = arith.constant 0 : index
    %c0_2 = arith.constant 0 : index
    %c0_3 = arith.constant 0 : index
    %c0_4 = arith.constant 0 : index
    %2 = vector.load %arg1[%c0_1, %c0_2, %c0_3, %c0_4] : memref<1x1x32x32xf32, #tpu.memory_space<vmem>>, vector<1x1x32x32xf32>
    %3 = vector.shape_cast %2 : vector<1x1x32x32xf32> to vector<32x32xf32>
    %c8 = arith.constant 8 : index
    %c1 = arith.constant 1 : index
    %4 = vector.load %arg5[%c8, %c1] : memref<48x256xf32, #tpu.memory_space<vmem>>, vector<32x32xf32>
    tpu.vector_store %arg5[%c8, %c1], %3 {strides = array<i32>} : memref<48x256xf32, #tpu.memory_space<vmem>>, vector<32x32xf32>,
    %c8_5 = arith.constant 8 : index
    %c65 = arith.constant 65 : index
    %5 = vector.load %arg5[%c8_5, %c65] : memref<48x256xf32, #tpu.memory_space<vmem>>, vector<32x32xf32>
    tpu.vector_store %arg5[%c8_5, %c65], %3 {strides = array<i32>} : memref<48x256xf32, #tpu.memory_space<vmem>>, vector<32x32xf32>,
    %c0_6 = arith.constant 0 : index
    %6 = memref.load %arg3[%c0_6] : memref<5xf32, #tpu.memory_space<smem>>
    %c1_7 = arith.constant 1 : index
    %7 = memref.load %arg3[%c1_7] : memref<5xf32, #tpu.memory_space<smem>>
    %c2 = arith.constant 2 : index
    %8 = memref.load %arg3[%c2] : memref<5xf32, #tpu.memory_space<smem>>
    %c3 = arith.constant 3 : index
    %9 = memref.load %arg3[%c3] : memref<5xf32, #tpu.memory_space<smem>>
    %c4 = arith.constant 4 : index
    %10 = memref.load %arg3[%c4] : memref<5xf32, #tpu.memory_space<smem>>
    %11 = vector.broadcast %6 : f32 to vector<32x128xf32>
    %12 = vector.broadcast %7 : f32 to vector<32x128xf32>
    %13 = vector.broadcast %8 : f32 to vector<32x128xf32>
    %14 = vector.broadcast %9 : f32 to vector<32x128xf32>
    %15 = vector.broadcast %10 : f32 to vector<32x128xf32>
    %c7 = arith.constant 7 : index
    %c0_8 = arith.constant 0 : index
    %16 = vector.load %arg5[%c7, %c0_8] : memref<48x256xf32, #tpu.memory_space<vmem>>, vector<32x128xf32>
    %c0_9 = arith.constant 0 : index
    %c0_10 = arith.constant 0 : index
    %17 = vector.load %arg2[%c0_9, %c0_10] : memref<80x128xf32, #tpu.memory_space<vmem>>, vector<1x128xf32>
    %18 = vector.broadcast %17 : vector<1x128xf32> to vector<32x128xf32>
    %19 = arith.mulf %16, %18 : vector<32x128xf32>
    %20 = arith.addf %11, %19 : vector<32x128xf32>
    %c1_11 = arith.constant 1 : index
    %c0_12 = arith.constant 0 : index
    %21 = vector.load %arg2[%c1_11, %c0_12] : memref<80x128xf32, #tpu.memory_space<vmem>>, vector<1x128xf32>
    %22 = vector.broadcast %21 : vector<1x128xf32> to vector<32x128xf32>
    %23 = arith.mulf %16, %22 : vector<32x128xf32>
    %24 = arith.addf %12, %23 : vector<32x128xf32>
    %c2_13 = arith.constant 2 : index
    %c0_14 = arith.constant 0 : index
    %25 = vector.load %arg2[%c2_13, %c0_14] : memref<80x128xf32, #tpu.memory_space<vmem>>, vector<1x128xf32>
    %26 = vector.broadcast %25 : vector<1x128xf32> to vector<32x128xf32>
    %27 = arith.mulf %16, %26 : vector<32x128xf32>
    %28 = arith.addf %13, %27 : vector<32x128xf32>
    %c3_15 = arith.constant 3 : index
    %c0_16 = arith.constant 0 : index
    %29 = vector.load %arg2[%c3_15, %c0_16] : memref<80x128xf32, #tpu.memory_space<vmem>>, vector<1x128xf32>
    %30 = vector.broadcast %29 : vector<1x128xf32> to vector<32x128xf32>
    %31 = arith.mulf %16, %30 : vector<32x128xf32>
    %32 = arith.addf %14, %31 : vector<32x128xf32>
    %c4_17 = arith.constant 4 : index
    %c0_18 = arith.constant 0 : index
    %33 = vector.load %arg2[%c4_17, %c0_18] : memref<80x128xf32, #tpu.memory_space<vmem>>, vector<1x128xf32>
    %34 = vector.broadcast %33 : vector<1x128xf32> to vector<32x128xf32>
    %35 = arith.mulf %16, %34 : vector<32x128xf32>
    %36 = arith.addf %15, %35 : vector<32x128xf32>
    %c7_19 = arith.constant 7 : index
    %c1_20 = arith.constant 1 : index
    %37 = vector.load %arg5[%c7_19, %c1_20] : memref<48x256xf32, #tpu.memory_space<vmem>>, vector<32x128xf32>
    %c5 = arith.constant 5 : index
    %c0_21 = arith.constant 0 : index
    %38 = vector.load %arg2[%c5, %c0_21] : memref<80x128xf32, #tpu.memory_space<vmem>>, vector<1x128xf32>
    %39 = vector.broadcast %38 : vector<1x128xf32> to vector<32x128xf32>
    %40 = arith.mulf %37, %39 : vector<32x128xf32>
    %41 = arith.addf %20, %40 : vector<32x128xf32>
    %c6 = arith.constant 6 : index
    %c0_22 = arith.constant 0 : index
    %42 = vector.load %arg2[%c6, %c0_22] : memref<80x128xf32, #tpu.memory_space<vmem>>, vector<1x128xf32>
    %43 = vector.broadcast %42 : vector<1x128xf32> to vector<32x128xf32>
    %44 = arith.mulf %37, %43 : vector<32x128xf32>
    %45 = arith.addf %24, %44 : vector<32x128xf32>
    %c7_23 = arith.constant 7 : index
    %c0_24 = arith.constant 0 : index
    %46 = vector.load %arg2[%c7_23, %c0_24] : memref<80x128xf32, #tpu.memory_space<vmem>>, vector<1x128xf32>
    %47 = vector.broadcast %46 : vector<1x128xf32> to vector<32x128xf32>
    %48 = arith.mulf %37, %47 : vector<32x128xf32>
    %49 = arith.addf %28, %48 : vector<32x128xf32>
    %c8_25 = arith.constant 8 : index
    %c0_26 = arith.constant 0 : index
    %50 = vector.load %arg2[%c8_25, %c0_26] : memref<80x128xf32, #tpu.memory_space<vmem>>, vector<1x128xf32>
    %51 = vector.broadcast %50 : vector<1x128xf32> to vector<32x128xf32>
    %52 = arith.mulf %37, %51 : vector<32x128xf32>
    %53 = arith.addf %32, %52 : vector<32x128xf32>
    %c9 = arith.constant 9 : index
    %c0_27 = arith.constant 0 : index
    %54 = vector.load %arg2[%c9, %c0_27] : memref<80x128xf32, #tpu.memory_space<vmem>>, vector<1x128xf32>
    %55 = vector.broadcast %54 : vector<1x128xf32> to vector<32x128xf32>
    %56 = arith.mulf %37, %55 : vector<32x128xf32>
    %57 = arith.addf %36, %56 : vector<32x128xf32>
    %c7_28 = arith.constant 7 : index
    %c2_29 = arith.constant 2 : index
    %58 = vector.load %arg5[%c7_28, %c2_29] : memref<48x256xf32, #tpu.memory_space<vmem>>, vector<32x128xf32>
    %c10 = arith.constant 10 : index
    %c0_30 = arith.constant 0 : index
    %59 = vector.load %arg2[%c10, %c0_30] : memref<80x128xf32, #tpu.memory_space<vmem>>, vector<1x128xf32>
    %60 = vector.broadcast %59 : vector<1x128xf32> to vector<32x128xf32>
    %61 = arith.mulf %58, %60 : vector<32x128xf32>
    %62 = arith.addf %41, %61 : vector<32x128xf32>
    %c11 = arith.constant 11 : index
    %c0_31 = arith.constant 0 : index
    %63 = vector.load %arg2[%c11, %c0_31] : memref<80x128xf32, #tpu.memory_space<vmem>>, vector<1x128xf32>
    %64 = vector.broadcast %63 : vector<1x128xf32> to vector<32x128xf32>
    %65 = arith.mulf %58, %64 : vector<32x128xf32>
    %66 = arith.addf %45, %65 : vector<32x128xf32>
    %c12 = arith.constant 12 : index
    %c0_32 = arith.constant 0 : index
    %67 = vector.load %arg2[%c12, %c0_32] : memref<80x128xf32, #tpu.memory_space<vmem>>, vector<1x128xf32>
    %68 = vector.broadcast %67 : vector<1x128xf32> to vector<32x128xf32>
    %69 = arith.mulf %58, %68 : vector<32x128xf32>
    %70 = arith.addf %49, %69 : vector<32x128xf32>
    %c13 = arith.constant 13 : index
    %c0_33 = arith.constant 0 : index
    %71 = vector.load %arg2[%c13, %c0_33] : memref<80x128xf32, #tpu.memory_space<vmem>>, vector<1x128xf32>
    %72 = vector.broadcast %71 : vector<1x128xf32> to vector<32x128xf32>
    %73 = arith.mulf %58, %72 : vector<32x128xf32>
    %74 = arith.addf %53, %73 : vector<32x128xf32>
    %c14 = arith.constant 14 : index
    %c0_34 = arith.constant 0 : index
    %75 = vector.load %arg2[%c14, %c0_34] : memref<80x128xf32, #tpu.memory_space<vmem>>, vector<1x128xf32>
    %76 = vector.broadcast %75 : vector<1x128xf32> to vector<32x128xf32>
    %77 = arith.mulf %58, %76 : vector<32x128xf32>
    %78 = arith.addf %57, %77 : vector<32x128xf32>
    %c8_35 = arith.constant 8 : index
    %c0_36 = arith.constant 0 : index
    %79 = vector.load %arg5[%c8_35, %c0_36] : memref<48x256xf32, #tpu.memory_space<vmem>>, vector<32x128xf32>
    %c15 = arith.constant 15 : index
    %c0_37 = arith.constant 0 : index
    %80 = vector.load %arg2[%c15, %c0_37] : memref<80x128xf32, #tpu.memory_space<vmem>>, vector<1x128xf32>
    %81 = vector.broadcast %80 : vector<1x128xf32> to vector<32x128xf32>
    %82 = arith.mulf %79, %81 : vector<32x128xf32>
    %83 = arith.addf %62, %82 : vector<32x128xf32>
    %c16 = arith.constant 16 : index
    %c0_38 = arith.constant 0 : index
    %84 = vector.load %arg2[%c16, %c0_38] : memref<80x128xf32, #tpu.memory_space<vmem>>, vector<1x128xf32>
    %85 = vector.broadcast %84 : vector<1x128xf32> to vector<32x128xf32>
    %86 = arith.mulf %79, %85 : vector<32x128xf32>
    %87 = arith.addf %66, %86 : vector<32x128xf32>
    %c17 = arith.constant 17 : index
    %c0_39 = arith.constant 0 : index
    %88 = vector.load %arg2[%c17, %c0_39] : memref<80x128xf32, #tpu.memory_space<vmem>>, vector<1x128xf32>
    %89 = vector.broadcast %88 : vector<1x128xf32> to vector<32x128xf32>
    %90 = arith.mulf %79, %89 : vector<32x128xf32>
    %91 = arith.addf %70, %90 : vector<32x128xf32>
    %c18 = arith.constant 18 : index
    %c0_40 = arith.constant 0 : index
    %92 = vector.load %arg2[%c18, %c0_40] : memref<80x128xf32, #tpu.memory_space<vmem>>, vector<1x128xf32>
    %93 = vector.broadcast %92 : vector<1x128xf32> to vector<32x128xf32>
    %94 = arith.mulf %79, %93 : vector<32x128xf32>
    %95 = arith.addf %74, %94 : vector<32x128xf32>
    %c19 = arith.constant 19 : index
    %c0_41 = arith.constant 0 : index
    %96 = vector.load %arg2[%c19, %c0_41] : memref<80x128xf32, #tpu.memory_space<vmem>>, vector<1x128xf32>
    %97 = vector.broadcast %96 : vector<1x128xf32> to vector<32x128xf32>
    %98 = arith.mulf %79, %97 : vector<32x128xf32>
    %99 = arith.addf %78, %98 : vector<32x128xf32>
    %c8_42 = arith.constant 8 : index
    %c1_43 = arith.constant 1 : index
    %100 = vector.load %arg5[%c8_42, %c1_43] : memref<48x256xf32, #tpu.memory_space<vmem>>, vector<32x128xf32>
    %c20 = arith.constant 20 : index
    %c0_44 = arith.constant 0 : index
    %101 = vector.load %arg2[%c20, %c0_44] : memref<80x128xf32, #tpu.memory_space<vmem>>, vector<1x128xf32>
    %102 = vector.broadcast %101 : vector<1x128xf32> to vector<32x128xf32>
    %103 = arith.mulf %100, %102 : vector<32x128xf32>
    %104 = arith.addf %83, %103 : vector<32x128xf32>
    %c21 = arith.constant 21 : index
    %c0_45 = arith.constant 0 : index
    %105 = vector.load %arg2[%c21, %c0_45] : memref<80x128xf32, #tpu.memory_space<vmem>>, vector<1x128xf32>
    %106 = vector.broadcast %105 : vector<1x128xf32> to vector<32x128xf32>
    %107 = arith.mulf %100, %106 : vector<32x128xf32>
    %108 = arith.addf %87, %107 : vector<32x128xf32>
    %c22 = arith.constant 22 : index
    %c0_46 = arith.constant 0 : index
    %109 = vector.load %arg2[%c22, %c0_46] : memref<80x128xf32, #tpu.memory_space<vmem>>, vector<1x128xf32>
    %110 = vector.broadcast %109 : vector<1x128xf32> to vector<32x128xf32>
    %111 = arith.mulf %100, %110 : vector<32x128xf32>
    %112 = arith.addf %91, %111 : vector<32x128xf32>
    %c23 = arith.constant 23 : index
    %c0_47 = arith.constant 0 : index
    %113 = vector.load %arg2[%c23, %c0_47] : memref<80x128xf32, #tpu.memory_space<vmem>>, vector<1x128xf32>
    %114 = vector.broadcast %113 : vector<1x128xf32> to vector<32x128xf32>
    %115 = arith.mulf %100, %114 : vector<32x128xf32>
    %116 = arith.addf %95, %115 : vector<32x128xf32>
    %c24 = arith.constant 24 : index
    %c0_48 = arith.constant 0 : index
    %117 = vector.load %arg2[%c24, %c0_48] : memref<80x128xf32, #tpu.memory_space<vmem>>, vector<1x128xf32>
    %118 = vector.broadcast %117 : vector<1x128xf32> to vector<32x128xf32>
    %119 = arith.mulf %100, %118 : vector<32x128xf32>
    %120 = arith.addf %99, %119 : vector<32x128xf32>
    %c8_49 = arith.constant 8 : index
    %c2_50 = arith.constant 2 : index
    %121 = vector.load %arg5[%c8_49, %c2_50] : memref<48x256xf32, #tpu.memory_space<vmem>>, vector<32x128xf32>
    %c25 = arith.constant 25 : index
    %c0_51 = arith.constant 0 : index
    %122 = vector.load %arg2[%c25, %c0_51] : memref<80x128xf32, #tpu.memory_space<vmem>>, vector<1x128xf32>
    %123 = vector.broadcast %122 : vector<1x128xf32> to vector<32x128xf32>
    %124 = arith.mulf %121, %123 : vector<32x128xf32>
    %125 = arith.addf %104, %124 : vector<32x128xf32>
    %c26 = arith.constant 26 : index
    %c0_52 = arith.constant 0 : index
    %126 = vector.load %arg2[%c26, %c0_52] : memref<80x128xf32, #tpu.memory_space<vmem>>, vector<1x128xf32>
    %127 = vector.broadcast %126 : vector<1x128xf32> to vector<32x128xf32>
    %128 = arith.mulf %121, %127 : vector<32x128xf32>
    %129 = arith.addf %108, %128 : vector<32x128xf32>
    %c27 = arith.constant 27 : index
    %c0_53 = arith.constant 0 : index
    %130 = vector.load %arg2[%c27, %c0_53] : memref<80x128xf32, #tpu.memory_space<vmem>>, vector<1x128xf32>
    %131 = vector.broadcast %130 : vector<1x128xf32> to vector<32x128xf32>
    %132 = arith.mulf %121, %131 : vector<32x128xf32>
    %133 = arith.addf %112, %132 : vector<32x128xf32>
    %c28 = arith.constant 28 : index
    %c0_54 = arith.constant 0 : index
    %134 = vector.load %arg2[%c28, %c0_54] : memref<80x128xf32, #tpu.memory_space<vmem>>, vector<1x128xf32>
    %135 = vector.broadcast %134 : vector<1x128xf32> to vector<32x128xf32>
    %136 = arith.mulf %121, %135 : vector<32x128xf32>
    %137 = arith.addf %116, %136 : vector<32x128xf32>
    %c29 = arith.constant 29 : index
    %c0_55 = arith.constant 0 : index
    %138 = vector.load %arg2[%c29, %c0_55] : memref<80x128xf32, #tpu.memory_space<vmem>>, vector<1x128xf32>
    %139 = vector.broadcast %138 : vector<1x128xf32> to vector<32x128xf32>
    %140 = arith.mulf %121, %139 : vector<32x128xf32>
    %141 = arith.addf %120, %140 : vector<32x128xf32>
    %c9_56 = arith.constant 9 : index
    %c0_57 = arith.constant 0 : index
    %142 = vector.load %arg5[%c9_56, %c0_57] : memref<48x256xf32, #tpu.memory_space<vmem>>, vector<32x128xf32>
    %c30 = arith.constant 30 : index
    %c0_58 = arith.constant 0 : index
    %143 = vector.load %arg2[%c30, %c0_58] : memref<80x128xf32, #tpu.memory_space<vmem>>, vector<1x128xf32>
    %144 = vector.broadcast %143 : vector<1x128xf32> to vector<32x128xf32>
    %145 = arith.mulf %142, %144 : vector<32x128xf32>
    %146 = arith.addf %125, %145 : vector<32x128xf32>
    %c31 = arith.constant 31 : index
    %c0_59 = arith.constant 0 : index
    %147 = vector.load %arg2[%c31, %c0_59] : memref<80x128xf32, #tpu.memory_space<vmem>>, vector<1x128xf32>
    %148 = vector.broadcast %147 : vector<1x128xf32> to vector<32x128xf32>
    %149 = arith.mulf %142, %148 : vector<32x128xf32>
    %150 = arith.addf %129, %149 : vector<32x128xf32>
    %c32 = arith.constant 32 : index
    %c0_60 = arith.constant 0 : index
    %151 = vector.load %arg2[%c32, %c0_60] : memref<80x128xf32, #tpu.memory_space<vmem>>, vector<1x128xf32>
    %152 = vector.broadcast %151 : vector<1x128xf32> to vector<32x128xf32>
    %153 = arith.mulf %142, %152 : vector<32x128xf32>
    %154 = arith.addf %133, %153 : vector<32x128xf32>
    %c33 = arith.constant 33 : index
    %c0_61 = arith.constant 0 : index
    %155 = vector.load %arg2[%c33, %c0_61] : memref<80x128xf32, #tpu.memory_space<vmem>>, vector<1x128xf32>
    %156 = vector.broadcast %155 : vector<1x128xf32> to vector<32x128xf32>
    %157 = arith.mulf %142, %156 : vector<32x128xf32>
    %158 = arith.addf %137, %157 : vector<32x128xf32>
    %c34 = arith.constant 34 : index
    %c0_62 = arith.constant 0 : index
    %159 = vector.load %arg2[%c34, %c0_62] : memref<80x128xf32, #tpu.memory_space<vmem>>, vector<1x128xf32>
    %160 = vector.broadcast %159 : vector<1x128xf32> to vector<32x128xf32>
    %161 = arith.mulf %142, %160 : vector<32x128xf32>
    %162 = arith.addf %141, %161 : vector<32x128xf32>
    %c9_63 = arith.constant 9 : index
    %c1_64 = arith.constant 1 : index
    %163 = vector.load %arg5[%c9_63, %c1_64] : memref<48x256xf32, #tpu.memory_space<vmem>>, vector<32x128xf32>
    %c35 = arith.constant 35 : index
    %c0_65 = arith.constant 0 : index
    %164 = vector.load %arg2[%c35, %c0_65] : memref<80x128xf32, #tpu.memory_space<vmem>>, vector<1x128xf32>
    %165 = vector.broadcast %164 : vector<1x128xf32> to vector<32x128xf32>
    %166 = arith.mulf %163, %165 : vector<32x128xf32>
    %167 = arith.addf %146, %166 : vector<32x128xf32>
    %c36 = arith.constant 36 : index
    %c0_66 = arith.constant 0 : index
    %168 = vector.load %arg2[%c36, %c0_66] : memref<80x128xf32, #tpu.memory_space<vmem>>, vector<1x128xf32>
    %169 = vector.broadcast %168 : vector<1x128xf32> to vector<32x128xf32>
    %170 = arith.mulf %163, %169 : vector<32x128xf32>
    %171 = arith.addf %150, %170 : vector<32x128xf32>
    %c37 = arith.constant 37 : index
    %c0_67 = arith.constant 0 : index
    %172 = vector.load %arg2[%c37, %c0_67] : memref<80x128xf32, #tpu.memory_space<vmem>>, vector<1x128xf32>
    %173 = vector.broadcast %172 : vector<1x128xf32> to vector<32x128xf32>
    %174 = arith.mulf %163, %173 : vector<32x128xf32>
    %175 = arith.addf %154, %174 : vector<32x128xf32>
    %c38 = arith.constant 38 : index
    %c0_68 = arith.constant 0 : index
    %176 = vector.load %arg2[%c38, %c0_68] : memref<80x128xf32, #tpu.memory_space<vmem>>, vector<1x128xf32>
    %177 = vector.broadcast %176 : vector<1x128xf32> to vector<32x128xf32>
    %178 = arith.mulf %163, %177 : vector<32x128xf32>
    %179 = arith.addf %158, %178 : vector<32x128xf32>
    %c39 = arith.constant 39 : index
    %c0_69 = arith.constant 0 : index
    %180 = vector.load %arg2[%c39, %c0_69] : memref<80x128xf32, #tpu.memory_space<vmem>>, vector<1x128xf32>
    %181 = vector.broadcast %180 : vector<1x128xf32> to vector<32x128xf32>
    %182 = arith.mulf %163, %181 : vector<32x128xf32>
    %183 = arith.addf %162, %182 : vector<32x128xf32>
    %c9_70 = arith.constant 9 : index
    %c2_71 = arith.constant 2 : index
    %184 = vector.load %arg5[%c9_70, %c2_71] : memref<48x256xf32, #tpu.memory_space<vmem>>, vector<32x128xf32>
    %c40 = arith.constant 40 : index
    %c0_72 = arith.constant 0 : index
    %185 = vector.load %arg2[%c40, %c0_72] : memref<80x128xf32, #tpu.memory_space<vmem>>, vector<1x128xf32>
    %186 = vector.broadcast %185 : vector<1x128xf32> to vector<32x128xf32>
    %187 = arith.mulf %184, %186 : vector<32x128xf32>
    %188 = arith.addf %167, %187 : vector<32x128xf32>
    %c41 = arith.constant 41 : index
    %c0_73 = arith.constant 0 : index
    %189 = vector.load %arg2[%c41, %c0_73] : memref<80x128xf32, #tpu.memory_space<vmem>>, vector<1x128xf32>
    %190 = vector.broadcast %189 : vector<1x128xf32> to vector<32x128xf32>
    %191 = arith.mulf %184, %190 : vector<32x128xf32>
    %192 = arith.addf %171, %191 : vector<32x128xf32>
    %c42 = arith.constant 42 : index
    %c0_74 = arith.constant 0 : index
    %193 = vector.load %arg2[%c42, %c0_74] : memref<80x128xf32, #tpu.memory_space<vmem>>, vector<1x128xf32>
    %194 = vector.broadcast %193 : vector<1x128xf32> to vector<32x128xf32>
    %195 = arith.mulf %184, %194 : vector<32x128xf32>
    %196 = arith.addf %175, %195 : vector<32x128xf32>
    %c43 = arith.constant 43 : index
    %c0_75 = arith.constant 0 : index
    %197 = vector.load %arg2[%c43, %c0_75] : memref<80x128xf32, #tpu.memory_space<vmem>>, vector<1x128xf32>
    %198 = vector.broadcast %197 : vector<1x128xf32> to vector<32x128xf32>
    %199 = arith.mulf %184, %198 : vector<32x128xf32>
    %200 = arith.addf %179, %199 : vector<32x128xf32>
    %c44 = arith.constant 44 : index
    %c0_76 = arith.constant 0 : index
    %201 = vector.load %arg2[%c44, %c0_76] : memref<80x128xf32, #tpu.memory_space<vmem>>, vector<1x128xf32>
    %202 = vector.broadcast %201 : vector<1x128xf32> to vector<32x128xf32>
    %203 = arith.mulf %184, %202 : vector<32x128xf32>
    %204 = arith.addf %183, %203 : vector<32x128xf32>
    %c0_77 = arith.constant 0 : index
    %c0_78 = arith.constant 0 : index
    %c0_79 = arith.constant 0 : index
    %205 = vector.load %arg4[%c0_77, %c0_78, %c0_79] : memref<5x64x128xf32, #tpu.memory_space<vmem>>, vector<1x32x128xf32>
    %206 = vector.shape_cast %205 : vector<1x32x128xf32> to vector<32x128xf32>
    %207 = vector.shape_cast %188 : vector<32x128xf32> to vector<1x32x128xf32>
    tpu.vector_store %arg4[%c0_77, %c0_78, %c0_79], %207 {strides = array<i32>} : memref<5x64x128xf32, #tpu.memory_space<vmem>>, vector<1x32x128xf32>,
    %c1_80 = arith.constant 1 : index
    %c0_81 = arith.constant 0 : index
    %c0_82 = arith.constant 0 : index
    %208 = vector.load %arg4[%c1_80, %c0_81, %c0_82] : memref<5x64x128xf32, #tpu.memory_space<vmem>>, vector<1x32x128xf32>
    %209 = vector.shape_cast %208 : vector<1x32x128xf32> to vector<32x128xf32>
    %210 = vector.shape_cast %192 : vector<32x128xf32> to vector<1x32x128xf32>
    tpu.vector_store %arg4[%c1_80, %c0_81, %c0_82], %210 {strides = array<i32>} : memref<5x64x128xf32, #tpu.memory_space<vmem>>, vector<1x32x128xf32>,
    %c2_83 = arith.constant 2 : index
    %c0_84 = arith.constant 0 : index
    %c0_85 = arith.constant 0 : index
    %211 = vector.load %arg4[%c2_83, %c0_84, %c0_85] : memref<5x64x128xf32, #tpu.memory_space<vmem>>, vector<1x32x128xf32>
    %212 = vector.shape_cast %211 : vector<1x32x128xf32> to vector<32x128xf32>
    %213 = vector.shape_cast %196 : vector<32x128xf32> to vector<1x32x128xf32>
    tpu.vector_store %arg4[%c2_83, %c0_84, %c0_85], %213 {strides = array<i32>} : memref<5x64x128xf32, #tpu.memory_space<vmem>>, vector<1x32x128xf32>,
    %c3_86 = arith.constant 3 : index
    %c0_87 = arith.constant 0 : index
    %c0_88 = arith.constant 0 : index
    %214 = vector.load %arg4[%c3_86, %c0_87, %c0_88] : memref<5x64x128xf32, #tpu.memory_space<vmem>>, vector<1x32x128xf32>
    %215 = vector.shape_cast %214 : vector<1x32x128xf32> to vector<32x128xf32>
    %216 = vector.shape_cast %200 : vector<32x128xf32> to vector<1x32x128xf32>
    tpu.vector_store %arg4[%c3_86, %c0_87, %c0_88], %216 {strides = array<i32>} : memref<5x64x128xf32, #tpu.memory_space<vmem>>, vector<1x32x128xf32>,
    %c4_89 = arith.constant 4 : index
    %c0_90 = arith.constant 0 : index
    %c0_91 = arith.constant 0 : index
    %217 = vector.load %arg4[%c4_89, %c0_90, %c0_91] : memref<5x64x128xf32, #tpu.memory_space<vmem>>, vector<1x32x128xf32>
    %218 = vector.shape_cast %217 : vector<1x32x128xf32> to vector<32x128xf32>
    %219 = vector.shape_cast %204 : vector<32x128xf32> to vector<1x32x128xf32>
    tpu.vector_store %arg4[%c4_89, %c0_90, %c0_91], %219 {strides = array<i32>} : memref<5x64x128xf32, #tpu.memory_space<vmem>>, vector<1x32x128xf32>,
    %220 = vector.broadcast %6 : f32 to vector<32x128xf32>
    %221 = vector.broadcast %7 : f32 to vector<32x128xf32>
    %222 = vector.broadcast %8 : f32 to vector<32x128xf32>
    %223 = vector.broadcast %9 : f32 to vector<32x128xf32>
    %224 = vector.broadcast %10 : f32 to vector<32x128xf32>
    %c8_92 = arith.constant 8 : index
    %c0_93 = arith.constant 0 : index
    %225 = vector.load %arg5[%c8_92, %c0_93] : memref<48x256xf32, #tpu.memory_space<vmem>>, vector<32x128xf32>
    %c45 = arith.constant 45 : index
    %c0_94 = arith.constant 0 : index
    %226 = vector.load %arg2[%c45, %c0_94] : memref<80x128xf32, #tpu.memory_space<vmem>>, vector<1x128xf32>
    %227 = vector.broadcast %226 : vector<1x128xf32> to vector<32x128xf32>
    %228 = arith.mulf %225, %227 : vector<32x128xf32>
    %229 = arith.addf %220, %228 : vector<32x128xf32>
    %c46 = arith.constant 46 : index
    %c0_95 = arith.constant 0 : index
    %230 = vector.load %arg2[%c46, %c0_95] : memref<80x128xf32, #tpu.memory_space<vmem>>, vector<1x128xf32>
    %231 = vector.broadcast %230 : vector<1x128xf32> to vector<32x128xf32>
    %232 = arith.mulf %225, %231 : vector<32x128xf32>
    %233 = arith.addf %221, %232 : vector<32x128xf32>
    %c47 = arith.constant 47 : index
    %c0_96 = arith.constant 0 : index
    %234 = vector.load %arg2[%c47, %c0_96] : memref<80x128xf32, #tpu.memory_space<vmem>>, vector<1x128xf32>
    %235 = vector.broadcast %234 : vector<1x128xf32> to vector<32x128xf32>
    %236 = arith.mulf %225, %235 : vector<32x128xf32>
    %237 = arith.addf %222, %236 : vector<32x128xf32>
    %c48 = arith.constant 48 : index
    %c0_97 = arith.constant 0 : index
    %238 = vector.load %arg2[%c48, %c0_97] : memref<80x128xf32, #tpu.memory_space<vmem>>, vector<1x128xf32>
    %239 = vector.broadcast %238 : vector<1x128xf32> to vector<32x128xf32>
    %240 = arith.mulf %225, %239 : vector<32x128xf32>
    %241 = arith.addf %223, %240 : vector<32x128xf32>
    %c49 = arith.constant 49 : index
    %c0_98 = arith.constant 0 : index
    %242 = vector.load %arg2[%c49, %c0_98] : memref<80x128xf32, #tpu.memory_space<vmem>>, vector<1x128xf32>
    %243 = vector.broadcast %242 : vector<1x128xf32> to vector<32x128xf32>
    %244 = arith.mulf %225, %243 : vector<32x128xf32>
    %245 = arith.addf %224, %244 : vector<32x128xf32>
    %c8_99 = arith.constant 8 : index
    %c1_100 = arith.constant 1 : index
    %246 = vector.load %arg5[%c8_99, %c1_100] : memref<48x256xf32, #tpu.memory_space<vmem>>, vector<32x128xf32>
    %c50 = arith.constant 50 : index
    %c0_101 = arith.constant 0 : index
    %247 = vector.load %arg2[%c50, %c0_101] : memref<80x128xf32, #tpu.memory_space<vmem>>, vector<1x128xf32>
    %248 = vector.broadcast %247 : vector<1x128xf32> to vector<32x128xf32>
    %249 = arith.mulf %246, %248 : vector<32x128xf32>
    %250 = arith.addf %229, %249 : vector<32x128xf32>
    %c51 = arith.constant 51 : index
    %c0_102 = arith.constant 0 : index
    %251 = vector.load %arg2[%c51, %c0_102] : memref<80x128xf32, #tpu.memory_space<vmem>>, vector<1x128xf32>
    %252 = vector.broadcast %251 : vector<1x128xf32> to vector<32x128xf32>
    %253 = arith.mulf %246, %252 : vector<32x128xf32>
    %254 = arith.addf %233, %253 : vector<32x128xf32>
    %c52 = arith.constant 52 : index
    %c0_103 = arith.constant 0 : index
    %255 = vector.load %arg2[%c52, %c0_103] : memref<80x128xf32, #tpu.memory_space<vmem>>, vector<1x128xf32>
    %256 = vector.broadcast %255 : vector<1x128xf32> to vector<32x128xf32>
    %257 = arith.mulf %246, %256 : vector<32x128xf32>
    %258 = arith.addf %237, %257 : vector<32x128xf32>
    %c53 = arith.constant 53 : index
    %c0_104 = arith.constant 0 : index
    %259 = vector.load %arg2[%c53, %c0_104] : memref<80x128xf32, #tpu.memory_space<vmem>>, vector<1x128xf32>
    %260 = vector.broadcast %259 : vector<1x128xf32> to vector<32x128xf32>
    %261 = arith.mulf %246, %260 : vector<32x128xf32>
    %262 = arith.addf %241, %261 : vector<32x128xf32>
    %c54 = arith.constant 54 : index
    %c0_105 = arith.constant 0 : index
    %263 = vector.load %arg2[%c54, %c0_105] : memref<80x128xf32, #tpu.memory_space<vmem>>, vector<1x128xf32>
    %264 = vector.broadcast %263 : vector<1x128xf32> to vector<32x128xf32>
    %265 = arith.mulf %246, %264 : vector<32x128xf32>
    %266 = arith.addf %245, %265 : vector<32x128xf32>
    %c8_106 = arith.constant 8 : index
    %c2_107 = arith.constant 2 : index
    %267 = vector.load %arg5[%c8_106, %c2_107] : memref<48x256xf32, #tpu.memory_space<vmem>>, vector<32x128xf32>
    %c55 = arith.constant 55 : index
    %c0_108 = arith.constant 0 : index
    %268 = vector.load %arg2[%c55, %c0_108] : memref<80x128xf32, #tpu.memory_space<vmem>>, vector<1x128xf32>
    %269 = vector.broadcast %268 : vector<1x128xf32> to vector<32x128xf32>
    %270 = arith.mulf %267, %269 : vector<32x128xf32>
    %271 = arith.addf %250, %270 : vector<32x128xf32>
    %c56 = arith.constant 56 : index
    %c0_109 = arith.constant 0 : index
    %272 = vector.load %arg2[%c56, %c0_109] : memref<80x128xf32, #tpu.memory_space<vmem>>, vector<1x128xf32>
    %273 = vector.broadcast %272 : vector<1x128xf32> to vector<32x128xf32>
    %274 = arith.mulf %267, %273 : vector<32x128xf32>
    %275 = arith.addf %254, %274 : vector<32x128xf32>
    %c57 = arith.constant 57 : index
    %c0_110 = arith.constant 0 : index
    %276 = vector.load %arg2[%c57, %c0_110] : memref<80x128xf32, #tpu.memory_space<vmem>>, vector<1x128xf32>
    %277 = vector.broadcast %276 : vector<1x128xf32> to vector<32x128xf32>
    %278 = arith.mulf %267, %277 : vector<32x128xf32>
    %279 = arith.addf %258, %278 : vector<32x128xf32>
    %c58 = arith.constant 58 : index
    %c0_111 = arith.constant 0 : index
    %280 = vector.load %arg2[%c58, %c0_111] : memref<80x128xf32, #tpu.memory_space<vmem>>, vector<1x128xf32>
    %281 = vector.broadcast %280 : vector<1x128xf32> to vector<32x128xf32>
    %282 = arith.mulf %267, %281 : vector<32x128xf32>
    %283 = arith.addf %262, %282 : vector<32x128xf32>
    %c59 = arith.constant 59 : index
    %c0_112 = arith.constant 0 : index
    %284 = vector.load %arg2[%c59, %c0_112] : memref<80x128xf32, #tpu.memory_space<vmem>>, vector<1x128xf32>
    %285 = vector.broadcast %284 : vector<1x128xf32> to vector<32x128xf32>
    %286 = arith.mulf %267, %285 : vector<32x128xf32>
    %287 = arith.addf %266, %286 : vector<32x128xf32>
    %c9_113 = arith.constant 9 : index
    %c0_114 = arith.constant 0 : index
    %288 = vector.load %arg5[%c9_113, %c0_114] : memref<48x256xf32, #tpu.memory_space<vmem>>, vector<32x128xf32>
    %c60 = arith.constant 60 : index
    %c0_115 = arith.constant 0 : index
    %289 = vector.load %arg2[%c60, %c0_115] : memref<80x128xf32, #tpu.memory_space<vmem>>, vector<1x128xf32>
    %290 = vector.broadcast %289 : vector<1x128xf32> to vector<32x128xf32>
    %291 = arith.mulf %288, %290 : vector<32x128xf32>
    %292 = arith.addf %271, %291 : vector<32x128xf32>
    %c61 = arith.constant 61 : index
    %c0_116 = arith.constant 0 : index
    %293 = vector.load %arg2[%c61, %c0_116] : memref<80x128xf32, #tpu.memory_space<vmem>>, vector<1x128xf32>
    %294 = vector.broadcast %293 : vector<1x128xf32> to vector<32x128xf32>
    %295 = arith.mulf %288, %294 : vector<32x128xf32>
    %296 = arith.addf %275, %295 : vector<32x128xf32>
    %c62 = arith.constant 62 : index
    %c0_117 = arith.constant 0 : index
    %297 = vector.load %arg2[%c62, %c0_117] : memref<80x128xf32, #tpu.memory_space<vmem>>, vector<1x128xf32>
    %298 = vector.broadcast %297 : vector<1x128xf32> to vector<32x128xf32>
    %299 = arith.mulf %288, %298 : vector<32x128xf32>
    %300 = arith.addf %279, %299 : vector<32x128xf32>
    %c63 = arith.constant 63 : index
    %c0_118 = arith.constant 0 : index
    %301 = vector.load %arg2[%c63, %c0_118] : memref<80x128xf32, #tpu.memory_space<vmem>>, vector<1x128xf32>
    %302 = vector.broadcast %301 : vector<1x128xf32> to vector<32x128xf32>
    %303 = arith.mulf %288, %302 : vector<32x128xf32>
    %304 = arith.addf %283, %303 : vector<32x128xf32>
    %c64 = arith.constant 64 : index
    %c0_119 = arith.constant 0 : index
    %305 = vector.load %arg2[%c64, %c0_119] : memref<80x128xf32, #tpu.memory_space<vmem>>, vector<1x128xf32>
    %306 = vector.broadcast %305 : vector<1x128xf32> to vector<32x128xf32>
    %307 = arith.mulf %288, %306 : vector<32x128xf32>
    %308 = arith.addf %287, %307 : vector<32x128xf32>
    %c9_120 = arith.constant 9 : index
    %c1_121 = arith.constant 1 : index
    %309 = vector.load %arg5[%c9_120, %c1_121] : memref<48x256xf32, #tpu.memory_space<vmem>>, vector<32x128xf32>
    %c65_122 = arith.constant 65 : index
    %c0_123 = arith.constant 0 : index
    %310 = vector.load %arg2[%c65_122, %c0_123] : memref<80x128xf32, #tpu.memory_space<vmem>>, vector<1x128xf32>
    %311 = vector.broadcast %310 : vector<1x128xf32> to vector<32x128xf32>
    %312 = arith.mulf %309, %311 : vector<32x128xf32>
    %313 = arith.addf %292, %312 : vector<32x128xf32>
    %c66 = arith.constant 66 : index
    %c0_124 = arith.constant 0 : index
    %314 = vector.load %arg2[%c66, %c0_124] : memref<80x128xf32, #tpu.memory_space<vmem>>, vector<1x128xf32>
    %315 = vector.broadcast %314 : vector<1x128xf32> to vector<32x128xf32>
    %316 = arith.mulf %309, %315 : vector<32x128xf32>
    %317 = arith.addf %296, %316 : vector<32x128xf32>
    %c67 = arith.constant 67 : index
    %c0_125 = arith.constant 0 : index
    %318 = vector.load %arg2[%c67, %c0_125] : memref<80x128xf32, #tpu.memory_space<vmem>>, vector<1x128xf32>
    %319 = vector.broadcast %318 : vector<1x128xf32> to vector<32x128xf32>
    %320 = arith.mulf %309, %319 : vector<32x128xf32>
    %321 = arith.addf %300, %320 : vector<32x128xf32>
    %c68 = arith.constant 68 : index
    %c0_126 = arith.constant 0 : index
    %322 = vector.load %arg2[%c68, %c0_126] : memref<80x128xf32, #tpu.memory_space<vmem>>, vector<1x128xf32>
    %323 = vector.broadcast %322 : vector<1x128xf32> to vector<32x128xf32>
    %324 = arith.mulf %309, %323 : vector<32x128xf32>
    %325 = arith.addf %304, %324 : vector<32x128xf32>
    %c69 = arith.constant 69 : index
    %c0_127 = arith.constant 0 : index
    %326 = vector.load %arg2[%c69, %c0_127] : memref<80x128xf32, #tpu.memory_space<vmem>>, vector<1x128xf32>
    %327 = vector.broadcast %326 : vector<1x128xf32> to vector<32x128xf32>
    %328 = arith.mulf %309, %327 : vector<32x128xf32>
    %329 = arith.addf %308, %328 : vector<32x128xf32>
    %c9_128 = arith.constant 9 : index
    %c2_129 = arith.constant 2 : index
    %330 = vector.load %arg5[%c9_128, %c2_129] : memref<48x256xf32, #tpu.memory_space<vmem>>, vector<32x128xf32>
    %c70 = arith.constant 70 : index
    %c0_130 = arith.constant 0 : index
    %331 = vector.load %arg2[%c70, %c0_130] : memref<80x128xf32, #tpu.memory_space<vmem>>, vector<1x128xf32>
    %332 = vector.broadcast %331 : vector<1x128xf32> to vector<32x128xf32>
    %333 = arith.mulf %330, %332 : vector<32x128xf32>
    %334 = arith.addf %313, %333 : vector<32x128xf32>
    %c71 = arith.constant 71 : index
    %c0_131 = arith.constant 0 : index
    %335 = vector.load %arg2[%c71, %c0_131] : memref<80x128xf32, #tpu.memory_space<vmem>>, vector<1x128xf32>
    %336 = vector.broadcast %335 : vector<1x128xf32> to vector<32x128xf32>
    %337 = arith.mulf %330, %336 : vector<32x128xf32>
    %338 = arith.addf %317, %337 : vector<32x128xf32>
    %c72 = arith.constant 72 : index
    %c0_132 = arith.constant 0 : index
    %339 = vector.load %arg2[%c72, %c0_132] : memref<80x128xf32, #tpu.memory_space<vmem>>, vector<1x128xf32>
    %340 = vector.broadcast %339 : vector<1x128xf32> to vector<32x128xf32>
    %341 = arith.mulf %330, %340 : vector<32x128xf32>
    %342 = arith.addf %321, %341 : vector<32x128xf32>
    %c73 = arith.constant 73 : index
    %c0_133 = arith.constant 0 : index
    %343 = vector.load %arg2[%c73, %c0_133] : memref<80x128xf32, #tpu.memory_space<vmem>>, vector<1x128xf32>
    %344 = vector.broadcast %343 : vector<1x128xf32> to vector<32x128xf32>
    %345 = arith.mulf %330, %344 : vector<32x128xf32>
    %346 = arith.addf %325, %345 : vector<32x128xf32>
    %c74 = arith.constant 74 : index
    %c0_134 = arith.constant 0 : index
    %347 = vector.load %arg2[%c74, %c0_134] : memref<80x128xf32, #tpu.memory_space<vmem>>, vector<1x128xf32>
    %348 = vector.broadcast %347 : vector<1x128xf32> to vector<32x128xf32>
    %349 = arith.mulf %330, %348 : vector<32x128xf32>
    %350 = arith.addf %329, %349 : vector<32x128xf32>
    %c0_135 = arith.constant 0 : index
    %c32_136 = arith.constant 32 : index
    %c0_137 = arith.constant 0 : index
    %351 = vector.load %arg4[%c0_135, %c32_136, %c0_137] : memref<5x64x128xf32, #tpu.memory_space<vmem>>, vector<1x32x128xf32>
    %352 = vector.shape_cast %351 : vector<1x32x128xf32> to vector<32x128xf32>
    %353 = vector.shape_cast %334 : vector<32x128xf32> to vector<1x32x128xf32>
    tpu.vector_store %arg4[%c0_135, %c32_136, %c0_137], %353 {strides = array<i32>} : memref<5x64x128xf32, #tpu.memory_space<vmem>>, vector<1x32x128xf32>,
    %c1_138 = arith.constant 1 : index
    %c32_139 = arith.constant 32 : index
    %c0_140 = arith.constant 0 : index
    %354 = vector.load %arg4[%c1_138, %c32_139, %c0_140] : memref<5x64x128xf32, #tpu.memory_space<vmem>>, vector<1x32x128xf32>
    %355 = vector.shape_cast %354 : vector<1x32x128xf32> to vector<32x128xf32>
    %356 = vector.shape_cast %338 : vector<32x128xf32> to vector<1x32x128xf32>
    tpu.vector_store %arg4[%c1_138, %c32_139, %c0_140], %356 {strides = array<i32>} : memref<5x64x128xf32, #tpu.memory_space<vmem>>, vector<1x32x128xf32>,
    %c2_141 = arith.constant 2 : index
    %c32_142 = arith.constant 32 : index
    %c0_143 = arith.constant 0 : index
    %357 = vector.load %arg4[%c2_141, %c32_142, %c0_143] : memref<5x64x128xf32, #tpu.memory_space<vmem>>, vector<1x32x128xf32>
    %358 = vector.shape_cast %357 : vector<1x32x128xf32> to vector<32x128xf32>
    %359 = vector.shape_cast %342 : vector<32x128xf32> to vector<1x32x128xf32>
    tpu.vector_store %arg4[%c2_141, %c32_142, %c0_143], %359 {strides = array<i32>} : memref<5x64x128xf32, #tpu.memory_space<vmem>>, vector<1x32x128xf32>,
    %c3_144 = arith.constant 3 : index
    %c32_145 = arith.constant 32 : index
    %c0_146 = arith.constant 0 : index
    %360 = vector.load %arg4[%c3_144, %c32_145, %c0_146] : memref<5x64x128xf32, #tpu.memory_space<vmem>>, vector<1x32x128xf32>
    %361 = vector.shape_cast %360 : vector<1x32x128xf32> to vector<32x128xf32>
    %362 = vector.shape_cast %346 : vector<32x128xf32> to vector<1x32x128xf32>
    tpu.vector_store %arg4[%c3_144, %c32_145, %c0_146], %362 {strides = array<i32>} : memref<5x64x128xf32, #tpu.memory_space<vmem>>, vector<1x32x128xf32>,
    %c4_147 = arith.constant 4 : index
    %c32_148 = arith.constant 32 : index
    %c0_149 = arith.constant 0 : index
    %363 = vector.load %arg4[%c4_147, %c32_148, %c0_149] : memref<5x64x128xf32, #tpu.memory_space<vmem>>, vector<1x32x128xf32>
    %364 = vector.shape_cast %363 : vector<1x32x128xf32> to vector<32x128xf32>
    %365 = vector.shape_cast %350 : vector<32x128xf32> to vector<1x32x128xf32>
    tpu.vector_store %arg4[%c4_147, %c32_148, %c0_149], %365 {strides = array<i32>} : memref<5x64x128xf32, #tpu.memory_space<vmem>>, vector<1x32x128xf32>,
    return
  }
  func.func @transform_0(%arg0: i32) -> (i32, i32, i32, i32) {
    %c0_i32 = arith.constant 0 : i32
    %c0_i32_0 = arith.constant 0 : i32
    %c0_i32_1 = arith.constant 0 : i32
    %c0_i32_2 = arith.constant 0 : i32
    %c0_i32_3 = arith.constant 0 : i32
    return %c0_i32, %c0_i32_0, %c0_i32_1, %c0_i32_2 : i32, i32, i32, i32
  }
  func.func @transform_1(%arg0: i32) -> (i32, i32) {
    %c0_i32 = arith.constant 0 : i32
    %c0_i32_0 = arith.constant 0 : i32
    %c0_i32_1 = arith.constant 0 : i32
    return %c0_i32, %c0_i32_0 : i32, i32
  }
  func.func @transform_2(%arg0: i32) -> i32 {
    %c0_i32 = arith.constant 0 : i32
    %c0_i32_0 = arith.constant 0 : i32
    return %c0_i32 : i32
  }
  func.func @transform_3(%arg0: i32) -> (i32, i32, i32) {
    %c0_i32 = arith.constant 0 : i32
    %c0_i32_0 = arith.constant 0 : i32
    %c0_i32_1 = arith.constant 0 : i32
    %c0_i32_2 = arith.constant 0 : i32
    return %c0_i32, %c0_i32_0, %c0_i32_1 : i32, i32, i32
  }
}

</mosaic_0001>

<llo_original>
// kernel: _conv_transpose_linear.1
$region0: #{_conv_transpose_linear.1}
  #allocation0 [shape = 'u32[]', space=smem, size = 0x4, offset = 0x4, fixed_abs, tag = 'smem constant byte address 0x4 - core index']
  #allocation1 [shape = 'u32[72,128]{1,0:T(1,128)}', space=vmem, size = 0x9000, scoped, tag = 'internal scratch']
  #allocation2 [shape = 'f32[48,256]{1,0:T(8,128)}', space=vmem, size = 0xc000, scoped, tag = 'scratch operand']
  %s0 = inlined_call_operand.vmem [shape: f32[1,1,32,32], index: 0, kind: input, shape index: {}]
  %s1 = inlined_call_operand.vmem [shape: f32[80,128], index: 1, kind: input, shape index: {}]
  %s2 = inlined_call_operand.vmem [shape: f32[5], index: 2, kind: input, shape index: {}]
  %s3 = inlined_call_operand.vmem [shape: f32[5,64,128], index: 3, kind: output, shape index: {}]
  %s4 = sld [smem:[#allocation0]]
  $region26: #{_conv_transpose_linear.1} parent=0
    _
  %s6 = ssub.s32 1, %s4
  %s7 = scalar_select 0, %s6, %s4
  $region1: #{_conv_transpose_linear.1} parent=0
    #allocation3 [shape = 'u8[512]{0}', space=smem, size = 0x200, scoped, tag = 'input window, operand 2, single buffered']
    #allocation4 [shape = 's32[1]{0}', space=sflag, size = 0x4, scoped, tag = 'scoped memory for _conv_transpose_linear.1']
    %8 = vsyncpa [#allocation4], 0
    // Predicated region
    $region2: #{_conv_transpose_linear.1} parent=1 // pred_check
      _
    $region3: #{_conv_transpose_linear.1} parent=1 // pred_check_branch
      %10 = sbr.rel (0) target = $region5
    $region4: #{_conv_transpose_linear.1} parent=1 // pred_region
      _
    $region5: #{_conv_transpose_linear.1} parent=1 // pred_fallthru
      _
    // Predicated region
    $region6: #{_conv_transpose_linear.1} parent=1 // pred_check
      _
    $region7: #{_conv_transpose_linear.1} parent=1 // pred_check_branch
      %12 = sbr.rel (0) target = $region9
    $region8: #{_conv_transpose_linear.1} parent=1 // pred_region
      _
    $region9: #{_conv_transpose_linear.1} parent=1 // pred_fallthru
      _
    // Predicated region
    $region10: #{_conv_transpose_linear.1} parent=1 // pred_check
      _
    $region11: #{_conv_transpose_linear.1} parent=1 // pred_check_branch
      %14 = sbr.rel (0) target = $region13
    $region12: #{_conv_transpose_linear.1} parent=1 // pred_region
      %16 = vsyncadd [#allocation4], 0
      %s18 = sshll.u32 %s2, 4
      %s19 = int_to_ptr.vmem [resolvable:$true] %s18
      %21 = dma.vmem_to_smem %s19, 16, [#allocation3], [#allocation4]
    $region13: #{_conv_transpose_linear.1} parent=1 // pred_fallthru
      _
    // Predicated region
    $region14: #{_conv_transpose_linear.1} parent=1 // pred_check
      _
    $region15: #{_conv_transpose_linear.1} parent=1 // pred_check_branch
      %23 = sbr.rel (0) target = $region17
    $region16: #{_conv_transpose_linear.1} parent=1 // pred_region
      %25 = dma.done [#allocation4], 16
    $region17: #{_conv_transpose_linear.1} parent=1 // pred_fallthru
      _
    %26 = sfence
    %27 = vst [vmem:[#allocation2] sm:$0xff] 0.0
    %28 = vst [vmem:[#allocation2 + $0x8] sm:$0xff] 0.0
    %29 = vst [vmem:[#allocation2 + $0x10] sm:$0xff] 0.0
    %30 = vst [vmem:[#allocation2 + $0x18] sm:$0xff] 0.0
    %31 = vst [vmem:[#allocation2 + $0x20] sm:$0xff] 0.0
    %32 = vst [vmem:[#allocation2 + $0x28] sm:$0xff] 0.0
    %33 = vst [vmem:[#allocation2 + $0x30] sm:$0xff] 0.0
    %34 = vst [vmem:[#allocation2 + $0x38] sm:$0xff] 0.0
    %35 = vst [vmem:[#allocation2 + $0x40] sm:$0xff] 0.0
    %36 = vst [vmem:[#allocation2 + $0x48] sm:$0xff] 0.0
    %37 = vst [vmem:[#allocation2 + $0x50] sm:$0xff] 0.0
    %38 = vst [vmem:[#allocation2 + $0x58] sm:$0xff] 0.0
    %v39 = vld [vmem:[%s0] sm:$0xff]
    %v40 = vld [vmem:[%s0 + $0x8] sm:$0xff]
    %v41 = vld [vmem:[%s0 + $0x10] sm:$0xff]
    %v42 = vld [vmem:[%s0 + $0x18] sm:$0xff]
    %47 = vrot.lane.b32.xlu0 %v39, 1
    %v48 = vpop.permute.xlu0 %47
    %49 = vrot.lane.b32.xlu0 %v40, 1
    %v50 = vpop.permute.xlu0 %49
    %51 = vrot.lane.b32.xlu0 %v41, 1
    %v52 = vpop.permute.xlu0 %51
    %53 = vrot.lane.b32.xlu0 %v42, 1
    %v54 = vpop.permute.xlu0 %53
    %vm59 = vcmask 269320
    %60 = vst.msk [vmem:[#allocation2 + $0x10] sm:$0xff] %vm59, %v48
    %61 = vst.msk [vmem:[#allocation2 + $0x20] sm:$0xff] %vm59, %v50
    %62 = vst.msk [vmem:[#allocation2 + $0x30] sm:$0xff] %vm59, %v52
    %63 = vst.msk [vmem:[#allocation2 + $0x40] sm:$0xff] %vm59, %v54
    %64 = vrot.lane.b32.xlu0 %v39, 65
    %v65 = vpop.permute.xlu0 %64
    %66 = vrot.lane.b32.xlu0 %v40, 65
    %v67 = vpop.permute.xlu0 %66
    %68 = vrot.lane.b32.xlu0 %v41, 65
    %v69 = vpop.permute.xlu0 %68
    %70 = vrot.lane.b32.xlu0 %v42, 65
    %v71 = vpop.permute.xlu0 %70
    %vm76 = vcmask 794120
    %77 = vst.msk [vmem:[#allocation2 + $0x10] sm:$0xff] %vm76, %v65
    %78 = vst.msk [vmem:[#allocation2 + $0x20] sm:$0xff] %vm76, %v67
    %79 = vst.msk [vmem:[#allocation2 + $0x30] sm:$0xff] %vm76, %v69
    %80 = vst.msk [vmem:[#allocation2 + $0x40] sm:$0xff] %vm76, %v71
    %s81 = sld [smem:[#allocation3]]
    %s82 = sld [smem:[#allocation3 + $0x1]]
    %s83 = sld [smem:[#allocation3 + $0x2]]
    %s84 = sld [smem:[#allocation3 + $0x3]]
    %s85 = sld [smem:[#allocation3 + $0x4]]
    %v86 = vstv %s81
    %v87 = vstv %s82
    %v88 = vstv %s83
    %v89 = vstv %s84
    %v90 = vstv %s85
    %v91 = vld [vmem:[#allocation2] sm:$0x80]
    %v92 = vld [vmem:[#allocation2 + $0x10] sm:$0xff]
    %v93 = vld [vmem:[#allocation2 + $0x20] sm:$0xff]
    %v94 = vld [vmem:[#allocation2 + $0x30] sm:$0xff]
    %v95 = vld [vmem:[#allocation2 + $0x40] sm:$0x7f]
    %v96 = vld [vmem:[%s1] sm:$0x1]
    %v97 = vperm.slane %v96, 0
    %v98 = vmul.f32 %v91, %v97
    %v99 = vmul.f32 %v92, %v97
    %v100 = vmul.f32 %v93, %v97
    %v101 = vmul.f32 %v94, %v97
    %v102 = vmul.f32 %v95, %v97
    %v103 = vadd.f32 %v86, %v98
    %v104 = vadd.f32 %v86, %v99
    %v105 = vadd.f32 %v86, %v100
    %v106 = vadd.f32 %v86, %v101
    %v107 = vadd.f32 %v86, %v102
    %v108 = vld [vmem:[%s1 + $0x1] sm:$0x1]
    %v109 = vperm.slane %v108, 0
    %v110 = vmul.f32 %v91, %v109
    %v111 = vmul.f32 %v92, %v109
    %v112 = vmul.f32 %v93, %v109
    %v113 = vmul.f32 %v94, %v109
    %v114 = vmul.f32 %v95, %v109
    %v115 = vadd.f32 %v87, %v110
    %v116 = vadd.f32 %v87, %v111
    %v117 = vadd.f32 %v87, %v112
    %v118 = vadd.f32 %v87, %v113
    %v119 = vadd.f32 %v87, %v114
    %v120 = vld [vmem:[%s1 + $0x2] sm:$0x1]
    %v121 = vperm.slane %v120, 0
    %v122 = vmul.f32 %v91, %v121
    %v123 = vmul.f32 %v92, %v121
    %v124 = vmul.f32 %v93, %v121
    %v125 = vmul.f32 %v94, %v121
    %v126 = vmul.f32 %v95, %v121
    %v127 = vadd.f32 %v88, %v122
    %v128 = vadd.f32 %v88, %v123
    %v129 = vadd.f32 %v88, %v124
    %v130 = vadd.f32 %v88, %v125
    %v131 = vadd.f32 %v88, %v126
    %v132 = vld [vmem:[%s1 + $0x3] sm:$0x1]
    %v133 = vperm.slane %v132, 0
    %v134 = vmul.f32 %v91, %v133
    %v135 = vmul.f32 %v92, %v133
    %v136 = vmul.f32 %v93, %v133
    %v137 = vmul.f32 %v94, %v133
    %v138 = vmul.f32 %v95, %v133
    %v139 = vadd.f32 %v89, %v134
    %v140 = vadd.f32 %v89, %v135
    %v141 = vadd.f32 %v89, %v136
    %v142 = vadd.f32 %v89, %v137
    %v143 = vadd.f32 %v89, %v138
    %v144 = vld [vmem:[%s1 + $0x4] sm:$0x1]
    %v145 = vperm.slane %v144, 0
    %v146 = vmul.f32 %v91, %v145
    %v147 = vmul.f32 %v92, %v145
    %v148 = vmul.f32 %v93, %v145
    %v149 = vmul.f32 %v94, %v145
    %v150 = vmul.f32 %v95, %v145
    %v151 = vadd.f32 %v90, %v146
    %v152 = vadd.f32 %v90, %v147
    %v153 = vadd.f32 %v90, %v148
    %v154 = vadd.f32 %v90, %v149
    %v155 = vadd.f32 %v90, %v150
    %v156 = vld [vmem:[#allocation2 + $0x8] sm:$0x80]
    %v157 = vld [vmem:[#allocation2 + $0x18] sm:$0xff]
    %v158 = vld [vmem:[#allocation2 + $0x28] sm:$0xff]
    %v159 = vld [vmem:[#allocation2 + $0x38] sm:$0xff]
    %v160 = vld [vmem:[#allocation2 + $0x48] sm:$0x7f]
    %v161 = vld [vmem:[%s1 + $0x5] sm:$0x1]
    %v162 = vperm.slane %v161, 0
    %164 = vrot.lane.b32.xlu0 %v162, 1
    %v165 = vpop.permute.xlu0 %164
    %v167 = vmul.f32 %v91, %v165
    %v168 = vmul.f32 %v156, %v165
    %v169 = vmul.f32 %v92, %v165
    %v170 = vmul.f32 %v157, %v165
    %v171 = vmul.f32 %v93, %v165
    %v172 = vmul.f32 %v158, %v165
    %v173 = vmul.f32 %v94, %v165
    %v174 = vmul.f32 %v159, %v165
    %v175 = vmul.f32 %v95, %v165
    %v176 = vmul.f32 %v160, %v165
    %187 = vrot.lane.b32.xlu0 %v167, 127
    %v188 = vpop.permute.xlu0 %187
    %189 = vrot.lane.b32.xlu0 %v168, 127
    %v190 = vpop.permute.xlu0 %189
    %191 = vrot.lane.b32.xlu0 %v169, 127
    %v192 = vpop.permute.xlu0 %191
    %193 = vrot.lane.b32.xlu0 %v170, 127
    %v194 = vpop.permute.xlu0 %193
    %195 = vrot.lane.b32.xlu0 %v171, 127
    %v196 = vpop.permute.xlu0 %195
    %197 = vrot.lane.b32.xlu0 %v172, 127
    %v198 = vpop.permute.xlu0 %197
    %199 = vrot.lane.b32.xlu0 %v173, 127
    %v200 = vpop.permute.xlu0 %199
    %201 = vrot.lane.b32.xlu0 %v174, 127
    %v202 = vpop.permute.xlu0 %201
    %203 = vrot.lane.b32.xlu0 %v175, 127
    %v204 = vpop.permute.xlu0 %203
    %205 = vrot.lane.b32.xlu0 %v176, 127
    %v206 = vpop.permute.xlu0 %205
    %vm207 = vcmask 1039360
    %v208 = vsel %vm207, %v188, %v190
    %v209 = vsel %vm207, %v192, %v194
    %v210 = vsel %vm207, %v196, %v198
    %v211 = vsel %vm207, %v200, %v202
    %v212 = vsel %vm207, %v204, %v206
    %v218 = vadd.f32 %v103, %v208
    %v219 = vadd.f32 %v104, %v209
    %v220 = vadd.f32 %v105, %v210
    %v221 = vadd.f32 %v106, %v211
    %v222 = vadd.f32 %v107, %v212
    %v223 = vld [vmem:[%s1 + $0x6] sm:$0x1]
    %v224 = vperm.slane %v223, 0
    %226 = vrot.lane.b32.xlu0 %v224, 1
    %v227 = vpop.permute.xlu0 %226
    %v229 = vmul.f32 %v91, %v227
    %v230 = vmul.f32 %v156, %v227
    %v231 = vmul.f32 %v92, %v227
    %v232 = vmul.f32 %v157, %v227
    %v233 = vmul.f32 %v93, %v227
    %v234 = vmul.f32 %v158, %v227
    %v235 = vmul.f32 %v94, %v227
    %v236 = vmul.f32 %v159, %v227
    %v237 = vmul.f32 %v95, %v227
    %v238 = vmul.f32 %v160, %v227
    %249 = vrot.lane.b32.xlu0 %v229, 127
    %v250 = vpop.permute.xlu0 %249
    %251 = vrot.lane.b32.xlu0 %v230, 127
    %v252 = vpop.permute.xlu0 %251
    %253 = vrot.lane.b32.xlu0 %v231, 127
    %v254 = vpop.permute.xlu0 %253
    %255 = vrot.lane.b32.xlu0 %v232, 127
    %v256 = vpop.permute.xlu0 %255
    %257 = vrot.lane.b32.xlu0 %v233, 127
    %v258 = vpop.permute.xlu0 %257
    %259 = vrot.lane.b32.xlu0 %v234, 127
    %v260 = vpop.permute.xlu0 %259
    %261 = vrot.lane.b32.xlu0 %v235, 127
    %v262 = vpop.permute.xlu0 %261
    %263 = vrot.lane.b32.xlu0 %v236, 127
    %v264 = vpop.permute.xlu0 %263
    %265 = vrot.lane.b32.xlu0 %v237, 127
    %v266 = vpop.permute.xlu0 %265
    %267 = vrot.lane.b32.xlu0 %v238, 127
    %v268 = vpop.permute.xlu0 %267
    %v269 = vsel %vm207, %v250, %v252
    %v270 = vsel %vm207, %v254, %v256
    %v271 = vsel %vm207, %v258, %v260
    %v272 = vsel %vm207, %v262, %v264
    %v273 = vsel %vm207, %v266, %v268
    %v279 = vadd.f32 %v115, %v269
    %v280 = vadd.f32 %v116, %v270
    %v281 = vadd.f32 %v117, %v271
    %v282 = vadd.f32 %v118, %v272
    %v283 = vadd.f32 %v119, %v273
    %v284 = vld [vmem:[%s1 + $0x7] sm:$0x1]
    %v285 = vperm.slane %v284, 0
    %287 = vrot.lane.b32.xlu0 %v285, 1
    %v288 = vpop.permute.xlu0 %287
    %v290 = vmul.f32 %v91, %v288
    %v291 = vmul.f32 %v156, %v288
    %v292 = vmul.f32 %v92, %v288
    %v293 = vmul.f32 %v157, %v288
    %v294 = vmul.f32 %v93, %v288
    %v295 = vmul.f32 %v158, %v288
    %v296 = vmul.f32 %v94, %v288
    %v297 = vmul.f32 %v159, %v288
    %v298 = vmul.f32 %v95, %v288
    %v299 = vmul.f32 %v160, %v288
    %310 = vrot.lane.b32.xlu0 %v290, 127
    %v311 = vpop.permute.xlu0 %310
    %312 = vrot.lane.b32.xlu0 %v291, 127
    %v313 = vpop.permute.xlu0 %312
    %314 = vrot.lane.b32.xlu0 %v292, 127
    %v315 = vpop.permute.xlu0 %314
    %316 = vrot.lane.b32.xlu0 %v293, 127
    %v317 = vpop.permute.xlu0 %316
    %318 = vrot.lane.b32.xlu0 %v294, 127
    %v319 = vpop.permute.xlu0 %318
    %320 = vrot.lane.b32.xlu0 %v295, 127
    %v321 = vpop.permute.xlu0 %320
    %322 = vrot.lane.b32.xlu0 %v296, 127
    %v323 = vpop.permute.xlu0 %322
    %324 = vrot.lane.b32.xlu0 %v297, 127
    %v325 = vpop.permute.xlu0 %324
    %326 = vrot.lane.b32.xlu0 %v298, 127
    %v327 = vpop.permute.xlu0 %326
    %328 = vrot.lane.b32.xlu0 %v299, 127
    %v329 = vpop.permute.xlu0 %328
    %v330 = vsel %vm207, %v311, %v313
    %v331 = vsel %vm207, %v315, %v317
    %v332 = vsel %vm207, %v319, %v321
    %v333 = vsel %vm207, %v323, %v325
    %v334 = vsel %vm207, %v327, %v329
    %v340 = vadd.f32 %v127, %v330
    %v341 = vadd.f32 %v128, %v331
    %v342 = vadd.f32 %v129, %v332
    %v343 = vadd.f32 %v130, %v333
    %v344 = vadd.f32 %v131, %v334
    %v345 = vld [vmem:[%s1 + $0x8] sm:$0x1]
    %v346 = vperm.slane %v345, 0
    %348 = vrot.lane.b32.xlu0 %v346, 1
    %v349 = vpop.permute.xlu0 %348
    %v351 = vmul.f32 %v91, %v349
    %v352 = vmul.f32 %v156, %v349
    %v353 = vmul.f32 %v92, %v349
    %v354 = vmul.f32 %v157, %v349
    %v355 = vmul.f32 %v93, %v349
    %v356 = vmul.f32 %v158, %v349
    %v357 = vmul.f32 %v94, %v349
    %v358 = vmul.f32 %v159, %v349
    %v359 = vmul.f32 %v95, %v349
    %v360 = vmul.f32 %v160, %v349
    %371 = vrot.lane.b32.xlu0 %v351, 127
    %v372 = vpop.permute.xlu0 %371
    %373 = vrot.lane.b32.xlu0 %v352, 127
    %v374 = vpop.permute.xlu0 %373
    %375 = vrot.lane.b32.xlu0 %v353, 127
    %v376 = vpop.permute.xlu0 %375
    %377 = vrot.lane.b32.xlu0 %v354, 127
    %v378 = vpop.permute.xlu0 %377
    %379 = vrot.lane.b32.xlu0 %v355, 127
    %v380 = vpop.permute.xlu0 %379
    %381 = vrot.lane.b32.xlu0 %v356, 127
    %v382 = vpop.permute.xlu0 %381
    %383 = vrot.lane.b32.xlu0 %v357, 127
    %v384 = vpop.permute.xlu0 %383
    %385 = vrot.lane.b32.xlu0 %v358, 127
    %v386 = vpop.permute.xlu0 %385
    %387 = vrot.lane.b32.xlu0 %v359, 127
    %v388 = vpop.permute.xlu0 %387
    %389 = vrot.lane.b32.xlu0 %v360, 127
    %v390 = vpop.permute.xlu0 %389
    %v391 = vsel %vm207, %v372, %v374
    %v392 = vsel %vm207, %v376, %v378
    %v393 = vsel %vm207, %v380, %v382
    %v394 = vsel %vm207, %v384, %v386
    %v395 = vsel %vm207, %v388, %v390
    %v401 = vadd.f32 %v139, %v391
    %v402 = vadd.f32 %v140, %v392
    %v403 = vadd.f32 %v141, %v393
    %v404 = vadd.f32 %v142, %v394
    %v405 = vadd.f32 %v143, %v395
    %v406 = vld [vmem:[%s1 + $0x9] sm:$0x1]
    %v407 = vperm.slane %v406, 0
    %409 = vrot.lane.b32.xlu0 %v407, 1
    %v410 = vpop.permute.xlu0 %409
    %v412 = vmul.f32 %v91, %v410
    %v413 = vmul.f32 %v156, %v410
    %v414 = vmul.f32 %v92, %v410
    %v415 = vmul.f32 %v157, %v410
    %v416 = vmul.f32 %v93, %v410
    %v417 = vmul.f32 %v158, %v410
    %v418 = vmul.f32 %v94, %v410
    %v419 = vmul.f32 %v159, %v410
    %v420 = vmul.f32 %v95, %v410
    %v421 = vmul.f32 %v160, %v410
    %432 = vrot.lane.b32.xlu0 %v412, 127
    %v433 = vpop.permute.xlu0 %432
    %434 = vrot.lane.b32.xlu0 %v413, 127
    %v435 = vpop.permute.xlu0 %434
    %436 = vrot.lane.b32.xlu0 %v414, 127
    %v437 = vpop.permute.xlu0 %436
    %438 = vrot.lane.b32.xlu0 %v415, 127
    %v439 = vpop.permute.xlu0 %438
    %440 = vrot.lane.b32.xlu0 %v416, 127
    %v441 = vpop.permute.xlu0 %440
    %442 = vrot.lane.b32.xlu0 %v417, 127
    %v443 = vpop.permute.xlu0 %442
    %444 = vrot.lane.b32.xlu0 %v418, 127
    %v445 = vpop.permute.xlu0 %444
    %446 = vrot.lane.b32.xlu0 %v419, 127
    %v447 = vpop.permute.xlu0 %446
    %448 = vrot.lane.b32.xlu0 %v420, 127
    %v449 = vpop.permute.xlu0 %448
    %450 = vrot.lane.b32.xlu0 %v421, 127
    %v451 = vpop.permute.xlu0 %450
    %v452 = vsel %vm207, %v433, %v435
    %v453 = vsel %vm207, %v437, %v439
    %v454 = vsel %vm207, %v441, %v443
    %v455 = vsel %vm207, %v445, %v447
    %v456 = vsel %vm207, %v449, %v451
    %v462 = vadd.f32 %v151, %v452
    %v463 = vadd.f32 %v152, %v453
    %v464 = vadd.f32 %v153, %v454
    %v465 = vadd.f32 %v154, %v455
    %v466 = vadd.f32 %v155, %v456
    %v467 = vld [vmem:[%s1 + $0xa] sm:$0x1]
    %v468 = vperm.slane %v467, 0
    %470 = vrot.lane.b32.xlu0 %v468, 2
    %v471 = vpop.permute.xlu0 %470
    %v473 = vmul.f32 %v91, %v471
    %v474 = vmul.f32 %v156, %v471
    %v475 = vmul.f32 %v92, %v471
    %v476 = vmul.f32 %v157, %v471
    %v477 = vmul.f32 %v93, %v471
    %v478 = vmul.f32 %v158, %v471
    %v479 = vmul.f32 %v94, %v471
    %v480 = vmul.f32 %v159, %v471
    %v481 = vmul.f32 %v95, %v471
    %v482 = vmul.f32 %v160, %v471
    %493 = vrot.lane.b32.xlu0 %v473, 126
    %v494 = vpop.permute.xlu0 %493
    %495 = vrot.lane.b32.xlu0 %v474, 126
    %v496 = vpop.permute.xlu0 %495
    %497 = vrot.lane.b32.xlu0 %v475, 126
    %v498 = vpop.permute.xlu0 %497
    %499 = vrot.lane.b32.xlu0 %v476, 126
    %v500 = vpop.permute.xlu0 %499
    %501 = vrot.lane.b32.xlu0 %v477, 126
    %v502 = vpop.permute.xlu0 %501
    %503 = vrot.lane.b32.xlu0 %v478, 126
    %v504 = vpop.permute.xlu0 %503
    %505 = vrot.lane.b32.xlu0 %v479, 126
    %v506 = vpop.permute.xlu0 %505
    %507 = vrot.lane.b32.xlu0 %v480, 126
    %v508 = vpop.permute.xlu0 %507
    %509 = vrot.lane.b32.xlu0 %v481, 126
    %v510 = vpop.permute.xlu0 %509
    %511 = vrot.lane.b32.xlu0 %v482, 126
    %v512 = vpop.permute.xlu0 %511
    %vm513 = vcmask 1031168
    %v514 = vsel %vm513, %v494, %v496
    %v515 = vsel %vm513, %v498, %v500
    %v516 = vsel %vm513, %v502, %v504
    %v517 = vsel %vm513, %v506, %v508
    %v518 = vsel %vm513, %v510, %v512
    %v524 = vadd.f32 %v218, %v514
    %v525 = vadd.f32 %v219, %v515
    %v526 = vadd.f32 %v220, %v516
    %v527 = vadd.f32 %v221, %v517
    %v528 = vadd.f32 %v222, %v518
    %v529 = vld [vmem:[%s1 + $0xb] sm:$0x1]
    %v530 = vperm.slane %v529, 0
    %532 = vrot.lane.b32.xlu0 %v530, 2
    %v533 = vpop.permute.xlu0 %532
    %v535 = vmul.f32 %v91, %v533
    %v536 = vmul.f32 %v156, %v533
    %v537 = vmul.f32 %v92, %v533
    %v538 = vmul.f32 %v157, %v533
    %v539 = vmul.f32 %v93, %v533
    %v540 = vmul.f32 %v158, %v533
    %v541 = vmul.f32 %v94, %v533
    %v542 = vmul.f32 %v159, %v533
    %v543 = vmul.f32 %v95, %v533
    %v544 = vmul.f32 %v160, %v533
    %555 = vrot.lane.b32.xlu0 %v535, 126
    %v556 = vpop.permute.xlu0 %555
    %557 = vrot.lane.b32.xlu0 %v536, 126
    %v558 = vpop.permute.xlu0 %557
    %559 = vrot.lane.b32.xlu0 %v537, 126
    %v560 = vpop.permute.xlu0 %559
    %561 = vrot.lane.b32.xlu0 %v538, 126
    %v562 = vpop.permute.xlu0 %561
    %563 = vrot.lane.b32.xlu0 %v539, 126
    %v564 = vpop.permute.xlu0 %563
    %565 = vrot.lane.b32.xlu0 %v540, 126
    %v566 = vpop.permute.xlu0 %565
    %567 = vrot.lane.b32.xlu0 %v541, 126
    %v568 = vpop.permute.xlu0 %567
    %569 = vrot.lane.b32.xlu0 %v542, 126
    %v570 = vpop.permute.xlu0 %569
    %571 = vrot.lane.b32.xlu0 %v543, 126
    %v572 = vpop.permute.xlu0 %571
    %573 = vrot.lane.b32.xlu0 %v544, 126
    %v574 = vpop.permute.xlu0 %573
    %v575 = vsel %vm513, %v556, %v558
    %v576 = vsel %vm513, %v560, %v562
    %v577 = vsel %vm513, %v564, %v566
    %v578 = vsel %vm513, %v568, %v570
    %v579 = vsel %vm513, %v572, %v574
    %v585 = vadd.f32 %v279, %v575
    %v586 = vadd.f32 %v280, %v576
    %v587 = vadd.f32 %v281, %v577
    %v588 = vadd.f32 %v282, %v578
    %v589 = vadd.f32 %v283, %v579
    %v590 = vld [vmem:[%s1 + $0xc] sm:$0x1]
    %v591 = vperm.slane %v590, 0
    %593 = vrot.lane.b32.xlu0 %v591, 2
    %v594 = vpop.permute.xlu0 %593
    %v596 = vmul.f32 %v91, %v594
    %v597 = vmul.f32 %v156, %v594
    %v598 = vmul.f32 %v92, %v594
    %v599 = vmul.f32 %v157, %v594
    %v600 = vmul.f32 %v93, %v594
    %v601 = vmul.f32 %v158, %v594
    %v602 = vmul.f32 %v94, %v594
    %v603 = vmul.f32 %v159, %v594
    %v604 = vmul.f32 %v95, %v594
    %v605 = vmul.f32 %v160, %v594
    %616 = vrot.lane.b32.xlu0 %v596, 126
    %v617 = vpop.permute.xlu0 %616
    %618 = vrot.lane.b32.xlu0 %v597, 126
    %v619 = vpop.permute.xlu0 %618
    %620 = vrot.lane.b32.xlu0 %v598, 126
    %v621 = vpop.permute.xlu0 %620
    %622 = vrot.lane.b32.xlu0 %v599, 126
    %v623 = vpop.permute.xlu0 %622
    %624 = vrot.lane.b32.xlu0 %v600, 126
    %v625 = vpop.permute.xlu0 %624
    %626 = vrot.lane.b32.xlu0 %v601, 126
    %v627 = vpop.permute.xlu0 %626
    %628 = vrot.lane.b32.xlu0 %v602, 126
    %v629 = vpop.permute.xlu0 %628
    %630 = vrot.lane.b32.xlu0 %v603, 126
    %v631 = vpop.permute.xlu0 %630
    %632 = vrot.lane.b32.xlu0 %v604, 126
    %v633 = vpop.permute.xlu0 %632
    %634 = vrot.lane.b32.xlu0 %v605, 126
    %v635 = vpop.permute.xlu0 %634
    %v636 = vsel %vm513, %v617, %v619
    %v637 = vsel %vm513, %v621, %v623
    %v638 = vsel %vm513, %v625, %v627
    %v639 = vsel %vm513, %v629, %v631
    %v640 = vsel %vm513, %v633, %v635
    %v646 = vadd.f32 %v340, %v636
    %v647 = vadd.f32 %v341, %v637
    %v648 = vadd.f32 %v342, %v638
    %v649 = vadd.f32 %v343, %v639
    %v650 = vadd.f32 %v344, %v640
    %v651 = vld [vmem:[%s1 + $0xd] sm:$0x1]
    %v652 = vperm.slane %v651, 0
    %654 = vrot.lane.b32.xlu0 %v652, 2
    %v655 = vpop.permute.xlu0 %654
    %v657 = vmul.f32 %v91, %v655
    %v658 = vmul.f32 %v156, %v655
    %v659 = vmul.f32 %v92, %v655
    %v660 = vmul.f32 %v157, %v655
    %v661 = vmul.f32 %v93, %v655
    %v662 = vmul.f32 %v158, %v655
    %v663 = vmul.f32 %v94, %v655
    %v664 = vmul.f32 %v159, %v655
    %v665 = vmul.f32 %v95, %v655
    %v666 = vmul.f32 %v160, %v655
    %677 = vrot.lane.b32.xlu0 %v657, 126
    %v678 = vpop.permute.xlu0 %677
    %679 = vrot.lane.b32.xlu0 %v658, 126
    %v680 = vpop.permute.xlu0 %679
    %681 = vrot.lane.b32.xlu0 %v659, 126
    %v682 = vpop.permute.xlu0 %681
    %683 = vrot.lane.b32.xlu0 %v660, 126
    %v684 = vpop.permute.xlu0 %683
    %685 = vrot.lane.b32.xlu0 %v661, 126
    %v686 = vpop.permute.xlu0 %685
    %687 = vrot.lane.b32.xlu0 %v662, 126
    %v688 = vpop.permute.xlu0 %687
    %689 = vrot.lane.b32.xlu0 %v663, 126
    %v690 = vpop.permute.xlu0 %689
    %691 = vrot.lane.b32.xlu0 %v664, 126
    %v692 = vpop.permute.xlu0 %691
    %693 = vrot.lane.b32.xlu0 %v665, 126
    %v694 = vpop.permute.xlu0 %693
    %695 = vrot.lane.b32.xlu0 %v666, 126
    %v696 = vpop.permute.xlu0 %695
    %v697 = vsel %vm513, %v678, %v680
    %v698 = vsel %vm513, %v682, %v684
    %v699 = vsel %vm513, %v686, %v688
    %v700 = vsel %vm513, %v690, %v692
    %v701 = vsel %vm513, %v694, %v696
    %v707 = vadd.f32 %v401, %v697
    %v708 = vadd.f32 %v402, %v698
    %v709 = vadd.f32 %v403, %v699
    %v710 = vadd.f32 %v404, %v700
    %v711 = vadd.f32 %v405, %v701
    %v712 = vld [vmem:[%s1 + $0xe] sm:$0x1]
    %v713 = vperm.slane %v712, 0
    %715 = vrot.lane.b32.xlu0 %v713, 2
    %v716 = vpop.permute.xlu0 %715
    %v718 = vmul.f32 %v91, %v716
    %v719 = vmul.f32 %v156, %v716
    %v720 = vmul.f32 %v92, %v716
    %v721 = vmul.f32 %v157, %v716
    %v722 = vmul.f32 %v93, %v716
    %v723 = vmul.f32 %v158, %v716
    %v724 = vmul.f32 %v94, %v716
    %v725 = vmul.f32 %v159, %v716
    %v726 = vmul.f32 %v95, %v716
    %v727 = vmul.f32 %v160, %v716
    %738 = vrot.lane.b32.xlu0 %v718, 126
    %v739 = vpop.permute.xlu0 %738
    %740 = vrot.lane.b32.xlu0 %v719, 126
    %v741 = vpop.permute.xlu0 %740
    %742 = vrot.lane.b32.xlu0 %v720, 126
    %v743 = vpop.permute.xlu0 %742
    %744 = vrot.lane.b32.xlu0 %v721, 126
    %v745 = vpop.permute.xlu0 %744
    %746 = vrot.lane.b32.xlu0 %v722, 126
    %v747 = vpop.permute.xlu0 %746
    %748 = vrot.lane.b32.xlu0 %v723, 126
    %v749 = vpop.permute.xlu0 %748
    %750 = vrot.lane.b32.xlu0 %v724, 126
    %v751 = vpop.permute.xlu0 %750
    %752 = vrot.lane.b32.xlu0 %v725, 126
    %v753 = vpop.permute.xlu0 %752
    %754 = vrot.lane.b32.xlu0 %v726, 126
    %v755 = vpop.permute.xlu0 %754
    %756 = vrot.lane.b32.xlu0 %v727, 126
    %v757 = vpop.permute.xlu0 %756
    %v758 = vsel %vm513, %v739, %v741
    %v759 = vsel %vm513, %v743, %v745
    %v760 = vsel %vm513, %v747, %v749
    %v761 = vsel %vm513, %v751, %v753
    %v762 = vsel %vm513, %v755, %v757
    %v768 = vadd.f32 %v462, %v758
    %v769 = vadd.f32 %v463, %v759
    %v770 = vadd.f32 %v464, %v760
    %v771 = vadd.f32 %v465, %v761
    %v772 = vadd.f32 %v466, %v762
    %v773 = vld [vmem:[#allocation2 + $0x40] sm:$0xff]
    %v774 = vld [vmem:[%s1 + $0xf] sm:$0x1]
    %v775 = vperm.slane %v774, 0
    %v776 = vmul.f32 %v92, %v775
    %v777 = vmul.f32 %v93, %v775
    %v778 = vmul.f32 %v94, %v775
    %v779 = vmul.f32 %v773, %v775
    %vm784 = vcmask 1046528
    %v785 = vrot.slane %v776, 1
    %v786 = vrot.slane %v777, 1
    %v787 = vsel %vm784, %v785, %v786
    %v788 = vrot.slane %v778, 1
    %v789 = vsel %vm784, %v786, %v788
    %v790 = vrot.slane %v779, 1
    %v791 = vsel %vm784, %v788, %v790
    %v797 = vadd.f32 %v524, %v785
    %v798 = vadd.f32 %v525, %v787
    %v799 = vadd.f32 %v526, %v789
    %v800 = vadd.f32 %v527, %v791
    %v801 = vadd.f32 %v528, %v790
    %v802 = vld [vmem:[%s1 + $0x10] sm:$0x1]
    %v803 = vperm.slane %v802, 0
    %v804 = vmul.f32 %v92, %v803
    %v805 = vmul.f32 %v93, %v803
    %v806 = vmul.f32 %v94, %v803
    %v807 = vmul.f32 %v773, %v803
    %v812 = vrot.slane %v804, 1
    %v813 = vrot.slane %v805, 1
    %v814 = vsel %vm784, %v812, %v813
    %v815 = vrot.slane %v806, 1
    %v816 = vsel %vm784, %v813, %v815
    %v817 = vrot.slane %v807, 1
    %v818 = vsel %vm784, %v815, %v817
    %v824 = vadd.f32 %v585, %v812
    %v825 = vadd.f32 %v586, %v814
    %v826 = vadd.f32 %v587, %v816
    %v827 = vadd.f32 %v588, %v818
    %v828 = vadd.f32 %v589, %v817
    %v829 = vld [vmem:[%s1 + $0x11] sm:$0x1]
    %v830 = vperm.slane %v829, 0
    %v831 = vmul.f32 %v92, %v830
    %v832 = vmul.f32 %v93, %v830
    %v833 = vmul.f32 %v94, %v830
    %v834 = vmul.f32 %v773, %v830
    %v839 = vrot.slane %v831, 1
    %v840 = vrot.slane %v832, 1
    %v841 = vsel %vm784, %v839, %v840
    %v842 = vrot.slane %v833, 1
    %v843 = vsel %vm784, %v840, %v842
    %v844 = vrot.slane %v834, 1
    %v845 = vsel %vm784, %v842, %v844
    %v851 = vadd.f32 %v646, %v839
    %v852 = vadd.f32 %v647, %v841
    %v853 = vadd.f32 %v648, %v843
    %v854 = vadd.f32 %v649, %v845
    %v855 = vadd.f32 %v650, %v844
    %v856 = vld [vmem:[%s1 + $0x12] sm:$0x1]
    %v857 = vperm.slane %v856, 0
    %v858 = vmul.f32 %v92, %v857
    %v859 = vmul.f32 %v93, %v857
    %v860 = vmul.f32 %v94, %v857
    %v861 = vmul.f32 %v773, %v857
    %v866 = vrot.slane %v858, 1
    %v867 = vrot.slane %v859, 1
    %v868 = vsel %vm784, %v866, %v867
    %v869 = vrot.slane %v860, 1
    %v870 = vsel %vm784, %v867, %v869
    %v871 = vrot.slane %v861, 1
    %v872 = vsel %vm784, %v869, %v871
    %v878 = vadd.f32 %v707, %v866
    %v879 = vadd.f32 %v708, %v868
    %v880 = vadd.f32 %v709, %v870
    %v881 = vadd.f32 %v710, %v872
    %v882 = vadd.f32 %v711, %v871
    %v883 = vld [vmem:[%s1 + $0x13] sm:$0x1]
    %v884 = vperm.slane %v883, 0
    %v885 = vmul.f32 %v92, %v884
    %v886 = vmul.f32 %v93, %v884
    %v887 = vmul.f32 %v94, %v884
    %v888 = vmul.f32 %v773, %v884
    %v893 = vrot.slane %v885, 1
    %v894 = vrot.slane %v886, 1
    %v895 = vsel %vm784, %v893, %v894
    %v896 = vrot.slane %v887, 1
    %v897 = vsel %vm784, %v894, %v896
    %v898 = vrot.slane %v888, 1
    %v899 = vsel %vm784, %v896, %v898
    %v905 = vadd.f32 %v768, %v893
    %v906 = vadd.f32 %v769, %v895
    %v907 = vadd.f32 %v770, %v897
    %v908 = vadd.f32 %v771, %v899
    %v909 = vadd.f32 %v772, %v898
    %v910 = vld [vmem:[#allocation2 + $0x48] sm:$0xff]
    %v911 = vld [vmem:[%s1 + $0x14] sm:$0x1]
    %v912 = vperm.slane %v911, 0
    %914 = vrot.lane.b32.xlu0 %v912, 1
    %v915 = vpop.permute.xlu0 %914
    %v917 = vmul.f32 %v92, %v915
    %v918 = vmul.f32 %v157, %v915
    %v919 = vmul.f32 %v93, %v915
    %v920 = vmul.f32 %v158, %v915
    %v921 = vmul.f32 %v94, %v915
    %v922 = vmul.f32 %v159, %v915
    %v923 = vmul.f32 %v773, %v915
    %v924 = vmul.f32 %v910, %v915
    %v933 = vrot.slane %v917, 1
    %v934 = vrot.slane %v918, 1
    %v935 = vrot.slane %v919, 1
    %v936 = vsel %vm784, %v933, %v935
    %v937 = vrot.slane %v920, 1
    %v938 = vsel %vm784, %v934, %v937
    %v939 = vrot.slane %v921, 1
    %v940 = vsel %vm784, %v935, %v939
    %v941 = vrot.slane %v922, 1
    %v942 = vsel %vm784, %v937, %v941
    %v943 = vrot.slane %v923, 1
    %v944 = vsel %vm784, %v939, %v943
    %v945 = vrot.slane %v924, 1
    %v946 = vsel %vm784, %v941, %v945
    %947 = vrot.lane.b32.xlu0 %v933, 127
    %v948 = vpop.permute.xlu0 %947
    %949 = vrot.lane.b32.xlu0 %v934, 127
    %v950 = vpop.permute.xlu0 %949
    %951 = vrot.lane.b32.xlu0 %v936, 127
    %v952 = vpop.permute.xlu0 %951
    %953 = vrot.lane.b32.xlu0 %v938, 127
    %v954 = vpop.permute.xlu0 %953
    %955 = vrot.lane.b32.xlu0 %v940, 127
    %v956 = vpop.permute.xlu0 %955
    %957 = vrot.lane.b32.xlu0 %v942, 127
    %v958 = vpop.permute.xlu0 %957
    %959 = vrot.lane.b32.xlu0 %v944, 127
    %v960 = vpop.permute.xlu0 %959
    %961 = vrot.lane.b32.xlu0 %v946, 127
    %v962 = vpop.permute.xlu0 %961
    %963 = vrot.lane.b32.xlu0 %v943, 127
    %v964 = vpop.permute.xlu0 %963
    %965 = vrot.lane.b32.xlu0 %v945, 127
    %v966 = vpop.permute.xlu0 %965
    %v967 = vsel %vm207, %v948, %v950
    %v968 = vsel %vm207, %v952, %v954
    %v969 = vsel %vm207, %v956, %v958
    %v970 = vsel %vm207, %v960, %v962
    %v971 = vsel %vm207, %v964, %v966
    %v977 = vadd.f32 %v797, %v967
    %v978 = vadd.f32 %v798, %v968
    %v979 = vadd.f32 %v799, %v969
    %v980 = vadd.f32 %v800, %v970
    %v981 = vadd.f32 %v801, %v971
    %v982 = vld [vmem:[%s1 + $0x15] sm:$0x1]
    %v983 = vperm.slane %v982, 0
    %985 = vrot.lane.b32.xlu0 %v983, 1
    %v986 = vpop.permute.xlu0 %985
    %v988 = vmul.f32 %v92, %v986
    %v989 = vmul.f32 %v157, %v986
    %v990 = vmul.f32 %v93, %v986
    %v991 = vmul.f32 %v158, %v986
    %v992 = vmul.f32 %v94, %v986
    %v993 = vmul.f32 %v159, %v986
    %v994 = vmul.f32 %v773, %v986
    %v995 = vmul.f32 %v910, %v986
    %v1004 = vrot.slane %v988, 1
    %v1005 = vrot.slane %v989, 1
    %v1006 = vrot.slane %v990, 1
    %v1007 = vsel %vm784, %v1004, %v1006
    %v1008 = vrot.slane %v991, 1
    %v1009 = vsel %vm784, %v1005, %v1008
    %v1010 = vrot.slane %v992, 1
    %v1011 = vsel %vm784, %v1006, %v1010
    %v1012 = vrot.slane %v993, 1
    %v1013 = vsel %vm784, %v1008, %v1012
    %v1014 = vrot.slane %v994, 1
    %v1015 = vsel %vm784, %v1010, %v1014
    %v1016 = vrot.slane %v995, 1
    %v1017 = vsel %vm784, %v1012, %v1016
    %1018 = vrot.lane.b32.xlu0 %v1004, 127
    %v1019 = vpop.permute.xlu0 %1018
    %1020 = vrot.lane.b32.xlu0 %v1005, 127
    %v1021 = vpop.permute.xlu0 %1020
    %1022 = vrot.lane.b32.xlu0 %v1007, 127
    %v1023 = vpop.permute.xlu0 %1022
    %1024 = vrot.lane.b32.xlu0 %v1009, 127
    %v1025 = vpop.permute.xlu0 %1024
    %1026 = vrot.lane.b32.xlu0 %v1011, 127
    %v1027 = vpop.permute.xlu0 %1026
    %1028 = vrot.lane.b32.xlu0 %v1013, 127
    %v1029 = vpop.permute.xlu0 %1028
    %1030 = vrot.lane.b32.xlu0 %v1015, 127
    %v1031 = vpop.permute.xlu0 %1030
    %1032 = vrot.lane.b32.xlu0 %v1017, 127
    %v1033 = vpop.permute.xlu0 %1032
    %1034 = vrot.lane.b32.xlu0 %v1014, 127
    %v1035 = vpop.permute.xlu0 %1034
    %1036 = vrot.lane.b32.xlu0 %v1016, 127
    %v1037 = vpop.permute.xlu0 %1036
    %v1038 = vsel %vm207, %v1019, %v1021
    %v1039 = vsel %vm207, %v1023, %v1025
    %v1040 = vsel %vm207, %v1027, %v1029
    %v1041 = vsel %vm207, %v1031, %v1033
    %v1042 = vsel %vm207, %v1035, %v1037
    %v1048 = vadd.f32 %v824, %v1038
    %v1049 = vadd.f32 %v825, %v1039
    %v1050 = vadd.f32 %v826, %v1040
    %v1051 = vadd.f32 %v827, %v1041
    %v1052 = vadd.f32 %v828, %v1042
    %v1053 = vld [vmem:[%s1 + $0x16] sm:$0x1]
    %v1054 = vperm.slane %v1053, 0
    %1056 = vrot.lane.b32.xlu0 %v1054, 1
    %v1057 = vpop.permute.xlu0 %1056
    %v1059 = vmul.f32 %v92, %v1057
    %v1060 = vmul.f32 %v157, %v1057
    %v1061 = vmul.f32 %v93, %v1057
    %v1062 = vmul.f32 %v158, %v1057
    %v1063 = vmul.f32 %v94, %v1057
    %v1064 = vmul.f32 %v159, %v1057
    %v1065 = vmul.f32 %v773, %v1057
    %v1066 = vmul.f32 %v910, %v1057
    %v1075 = vrot.slane %v1059, 1
    %v1076 = vrot.slane %v1060, 1
    %v1077 = vrot.slane %v1061, 1
    %v1078 = vsel %vm784, %v1075, %v1077
    %v1079 = vrot.slane %v1062, 1
    %v1080 = vsel %vm784, %v1076, %v1079
    %v1081 = vrot.slane %v1063, 1
    %v1082 = vsel %vm784, %v1077, %v1081
    %v1083 = vrot.slane %v1064, 1
    %v1084 = vsel %vm784, %v1079, %v1083
    %v1085 = vrot.slane %v1065, 1
    %v1086 = vsel %vm784, %v1081, %v1085
    %v1087 = vrot.slane %v1066, 1
    %v1088 = vsel %vm784, %v1083, %v1087
    %1089 = vrot.lane.b32.xlu0 %v1075, 127
    %v1090 = vpop.permute.xlu0 %1089
    %1091 = vrot.lane.b32.xlu0 %v1076, 127
    %v1092 = vpop.permute.xlu0 %1091
    %1093 = vrot.lane.b32.xlu0 %v1078, 127
    %v1094 = vpop.permute.xlu0 %1093
    %1095 = vrot.lane.b32.xlu0 %v1080, 127
    %v1096 = vpop.permute.xlu0 %1095
    %1097 = vrot.lane.b32.xlu0 %v1082, 127
    %v1098 = vpop.permute.xlu0 %1097
    %1099 = vrot.lane.b32.xlu0 %v1084, 127
    %v1100 = vpop.permute.xlu0 %1099
    %1101 = vrot.lane.b32.xlu0 %v1086, 127
    %v1102 = vpop.permute.xlu0 %1101
    %1103 = vrot.lane.b32.xlu0 %v1088, 127
    %v1104 = vpop.permute.xlu0 %1103
    %1105 = vrot.lane.b32.xlu0 %v1085, 127
    %v1106 = vpop.permute.xlu0 %1105
    %1107 = vrot.lane.b32.xlu0 %v1087, 127
    %v1108 = vpop.permute.xlu0 %1107
    %v1109 = vsel %vm207, %v1090, %v1092
    %v1110 = vsel %vm207, %v1094, %v1096
    %v1111 = vsel %vm207, %v1098, %v1100
    %v1112 = vsel %vm207, %v1102, %v1104
    %v1113 = vsel %vm207, %v1106, %v1108
    %v1119 = vadd.f32 %v851, %v1109
    %v1120 = vadd.f32 %v852, %v1110
    %v1121 = vadd.f32 %v853, %v1111
    %v1122 = vadd.f32 %v854, %v1112
    %v1123 = vadd.f32 %v855, %v1113
    %v1124 = vld [vmem:[%s1 + $0x17] sm:$0x1]
    %v1125 = vperm.slane %v1124, 0
    %1127 = vrot.lane.b32.xlu0 %v1125, 1
    %v1128 = vpop.permute.xlu0 %1127
    %v1130 = vmul.f32 %v92, %v1128
    %v1131 = vmul.f32 %v157, %v1128
    %v1132 = vmul.f32 %v93, %v1128
    %v1133 = vmul.f32 %v158, %v1128
    %v1134 = vmul.f32 %v94, %v1128
    %v1135 = vmul.f32 %v159, %v1128
    %v1136 = vmul.f32 %v773, %v1128
    %v1137 = vmul.f32 %v910, %v1128
    %v1146 = vrot.slane %v1130, 1
    %v1147 = vrot.slane %v1131, 1
    %v1148 = vrot.slane %v1132, 1
    %v1149 = vsel %vm784, %v1146, %v1148
    %v1150 = vrot.slane %v1133, 1
    %v1151 = vsel %vm784, %v1147, %v1150
    %v1152 = vrot.slane %v1134, 1
    %v1153 = vsel %vm784, %v1148, %v1152
    %v1154 = vrot.slane %v1135, 1
    %v1155 = vsel %vm784, %v1150, %v1154
    %v1156 = vrot.slane %v1136, 1
    %v1157 = vsel %vm784, %v1152, %v1156
    %v1158 = vrot.slane %v1137, 1
    %v1159 = vsel %vm784, %v1154, %v1158
    %1160 = vrot.lane.b32.xlu0 %v1146, 127
    %v1161 = vpop.permute.xlu0 %1160
    %1162 = vrot.lane.b32.xlu0 %v1147, 127
    %v1163 = vpop.permute.xlu0 %1162
    %1164 = vrot.lane.b32.xlu0 %v1149, 127
    %v1165 = vpop.permute.xlu0 %1164
    %1166 = vrot.lane.b32.xlu0 %v1151, 127
    %v1167 = vpop.permute.xlu0 %1166
    %1168 = vrot.lane.b32.xlu0 %v1153, 127
    %v1169 = vpop.permute.xlu0 %1168
    %1170 = vrot.lane.b32.xlu0 %v1155, 127
    %v1171 = vpop.permute.xlu0 %1170
    %1172 = vrot.lane.b32.xlu0 %v1157, 127
    %v1173 = vpop.permute.xlu0 %1172
    %1174 = vrot.lane.b32.xlu0 %v1159, 127
    %v1175 = vpop.permute.xlu0 %1174
    %1176 = vrot.lane.b32.xlu0 %v1156, 127
    %v1177 = vpop.permute.xlu0 %1176
    %1178 = vrot.lane.b32.xlu0 %v1158, 127
    %v1179 = vpop.permute.xlu0 %1178
    %v1180 = vsel %vm207, %v1161, %v1163
    %v1181 = vsel %vm207, %v1165, %v1167
    %v1182 = vsel %vm207, %v1169, %v1171
    %v1183 = vsel %vm207, %v1173, %v1175
    %v1184 = vsel %vm207, %v1177, %v1179
    %v1190 = vadd.f32 %v878, %v1180
    %v1191 = vadd.f32 %v879, %v1181
    %v1192 = vadd.f32 %v880, %v1182
    %v1193 = vadd.f32 %v881, %v1183
    %v1194 = vadd.f32 %v882, %v1184
    %v1195 = vld [vmem:[%s1 + $0x18] sm:$0x1]
    %v1196 = vperm.slane %v1195, 0
    %1198 = vrot.lane.b32.xlu0 %v1196, 1
    %v1199 = vpop.permute.xlu0 %1198
    %v1201 = vmul.f32 %v92, %v1199
    %v1202 = vmul.f32 %v157, %v1199
    %v1203 = vmul.f32 %v93, %v1199
    %v1204 = vmul.f32 %v158, %v1199
    %v1205 = vmul.f32 %v94, %v1199
    %v1206 = vmul.f32 %v159, %v1199
    %v1207 = vmul.f32 %v773, %v1199
    %v1208 = vmul.f32 %v910, %v1199
    %v1217 = vrot.slane %v1201, 1
    %v1218 = vrot.slane %v1202, 1
    %v1219 = vrot.slane %v1203, 1
    %v1220 = vsel %vm784, %v1217, %v1219
    %v1221 = vrot.slane %v1204, 1
    %v1222 = vsel %vm784, %v1218, %v1221
    %v1223 = vrot.slane %v1205, 1
    %v1224 = vsel %vm784, %v1219, %v1223
    %v1225 = vrot.slane %v1206, 1
    %v1226 = vsel %vm784, %v1221, %v1225
    %v1227 = vrot.slane %v1207, 1
    %v1228 = vsel %vm784, %v1223, %v1227
    %v1229 = vrot.slane %v1208, 1
    %v1230 = vsel %vm784, %v1225, %v1229
    %1231 = vrot.lane.b32.xlu0 %v1217, 127
    %v1232 = vpop.permute.xlu0 %1231
    %1233 = vrot.lane.b32.xlu0 %v1218, 127
    %v1234 = vpop.permute.xlu0 %1233
    %1235 = vrot.lane.b32.xlu0 %v1220, 127
    %v1236 = vpop.permute.xlu0 %1235
    %1237 = vrot.lane.b32.xlu0 %v1222, 127
    %v1238 = vpop.permute.xlu0 %1237
    %1239 = vrot.lane.b32.xlu0 %v1224, 127
    %v1240 = vpop.permute.xlu0 %1239
    %1241 = vrot.lane.b32.xlu0 %v1226, 127
    %v1242 = vpop.permute.xlu0 %1241
    %1243 = vrot.lane.b32.xlu0 %v1228, 127
    %v1244 = vpop.permute.xlu0 %1243
    %1245 = vrot.lane.b32.xlu0 %v1230, 127
    %v1246 = vpop.permute.xlu0 %1245
    %1247 = vrot.lane.b32.xlu0 %v1227, 127
    %v1248 = vpop.permute.xlu0 %1247
    %1249 = vrot.lane.b32.xlu0 %v1229, 127
    %v1250 = vpop.permute.xlu0 %1249
    %v1251 = vsel %vm207, %v1232, %v1234
    %v1252 = vsel %vm207, %v1236, %v1238
    %v1253 = vsel %vm207, %v1240, %v1242
    %v1254 = vsel %vm207, %v1244, %v1246
    %v1255 = vsel %vm207, %v1248, %v1250
    %v1261 = vadd.f32 %v905, %v1251
    %v1262 = vadd.f32 %v906, %v1252
    %v1263 = vadd.f32 %v907, %v1253
    %v1264 = vadd.f32 %v908, %v1254
    %v1265 = vadd.f32 %v909, %v1255
    %v1266 = vld [vmem:[%s1 + $0x19] sm:$0x1]
    %v1267 = vperm.slane %v1266, 0
    %1269 = vrot.lane.b32.xlu0 %v1267, 2
    %v1270 = vpop.permute.xlu0 %1269
    %v1272 = vmul.f32 %v92, %v1270
    %v1273 = vmul.f32 %v157, %v1270
    %v1274 = vmul.f32 %v93, %v1270
    %v1275 = vmul.f32 %v158, %v1270
    %v1276 = vmul.f32 %v94, %v1270
    %v1277 = vmul.f32 %v159, %v1270
    %v1278 = vmul.f32 %v773, %v1270
    %v1279 = vmul.f32 %v910, %v1270
    %v1288 = vrot.slane %v1272, 1
    %v1289 = vrot.slane %v1273, 1
    %v1290 = vrot.slane %v1274, 1
    %v1291 = vsel %vm784, %v1288, %v1290
    %v1292 = vrot.slane %v1275, 1
    %v1293 = vsel %vm784, %v1289, %v1292
    %v1294 = vrot.slane %v1276, 1
    %v1295 = vsel %vm784, %v1290, %v1294
    %v1296 = vrot.slane %v1277, 1
    %v1297 = vsel %vm784, %v1292, %v1296
    %v1298 = vrot.slane %v1278, 1
    %v1299 = vsel %vm784, %v1294, %v1298
    %v1300 = vrot.slane %v1279, 1
    %v1301 = vsel %vm784, %v1296, %v1300
    %1302 = vrot.lane.b32.xlu0 %v1288, 126
    %v1303 = vpop.permute.xlu0 %1302
    %1304 = vrot.lane.b32.xlu0 %v1289, 126
    %v1305 = vpop.permute.xlu0 %1304
    %1306 = vrot.lane.b32.xlu0 %v1291, 126
    %v1307 = vpop.permute.xlu0 %1306
    %1308 = vrot.lane.b32.xlu0 %v1293, 126
    %v1309 = vpop.permute.xlu0 %1308
    %1310 = vrot.lane.b32.xlu0 %v1295, 126
    %v1311 = vpop.permute.xlu0 %1310
    %1312 = vrot.lane.b32.xlu0 %v1297, 126
    %v1313 = vpop.permute.xlu0 %1312
    %1314 = vrot.lane.b32.xlu0 %v1299, 126
    %v1315 = vpop.permute.xlu0 %1314
    %1316 = vrot.lane.b32.xlu0 %v1301, 126
    %v1317 = vpop.permute.xlu0 %1316
    %1318 = vrot.lane.b32.xlu0 %v1298, 126
    %v1319 = vpop.permute.xlu0 %1318
    %1320 = vrot.lane.b32.xlu0 %v1300, 126
    %v1321 = vpop.permute.xlu0 %1320
    %v1322 = vsel %vm513, %v1303, %v1305
    %v1323 = vsel %vm513, %v1307, %v1309
    %v1324 = vsel %vm513, %v1311, %v1313
    %v1325 = vsel %vm513, %v1315, %v1317
    %v1326 = vsel %vm513, %v1319, %v1321
    %v1332 = vadd.f32 %v977, %v1322
    %v1333 = vadd.f32 %v978, %v1323
    %v1334 = vadd.f32 %v979, %v1324
    %v1335 = vadd.f32 %v980, %v1325
    %v1336 = vadd.f32 %v981, %v1326
    %v1337 = vld [vmem:[%s1 + $0x1a] sm:$0x1]
    %v1338 = vperm.slane %v1337, 0
    %1340 = vrot.lane.b32.xlu0 %v1338, 2
    %v1341 = vpop.permute.xlu0 %1340
    %v1343 = vmul.f32 %v92, %v1341
    %v1344 = vmul.f32 %v157, %v1341
    %v1345 = vmul.f32 %v93, %v1341
    %v1346 = vmul.f32 %v158, %v1341
    %v1347 = vmul.f32 %v94, %v1341
    %v1348 = vmul.f32 %v159, %v1341
    %v1349 = vmul.f32 %v773, %v1341
    %v1350 = vmul.f32 %v910, %v1341
    %v1359 = vrot.slane %v1343, 1
    %v1360 = vrot.slane %v1344, 1
    %v1361 = vrot.slane %v1345, 1
    %v1362 = vsel %vm784, %v1359, %v1361
    %v1363 = vrot.slane %v1346, 1
    %v1364 = vsel %vm784, %v1360, %v1363
    %v1365 = vrot.slane %v1347, 1
    %v1366 = vsel %vm784, %v1361, %v1365
    %v1367 = vrot.slane %v1348, 1
    %v1368 = vsel %vm784, %v1363, %v1367
    %v1369 = vrot.slane %v1349, 1
    %v1370 = vsel %vm784, %v1365, %v1369
    %v1371 = vrot.slane %v1350, 1
    %v1372 = vsel %vm784, %v1367, %v1371
    %1373 = vrot.lane.b32.xlu0 %v1359, 126
    %v1374 = vpop.permute.xlu0 %1373
    %1375 = vrot.lane.b32.xlu0 %v1360, 126
    %v1376 = vpop.permute.xlu0 %1375
    %1377 = vrot.lane.b32.xlu0 %v1362, 126
    %v1378 = vpop.permute.xlu0 %1377
    %1379 = vrot.lane.b32.xlu0 %v1364, 126
    %v1380 = vpop.permute.xlu0 %1379
    %1381 = vrot.lane.b32.xlu0 %v1366, 126
    %v1382 = vpop.permute.xlu0 %1381
    %1383 = vrot.lane.b32.xlu0 %v1368, 126
    %v1384 = vpop.permute.xlu0 %1383
    %1385 = vrot.lane.b32.xlu0 %v1370, 126
    %v1386 = vpop.permute.xlu0 %1385
    %1387 = vrot.lane.b32.xlu0 %v1372, 126
    %v1388 = vpop.permute.xlu0 %1387
    %1389 = vrot.lane.b32.xlu0 %v1369, 126
    %v1390 = vpop.permute.xlu0 %1389
    %1391 = vrot.lane.b32.xlu0 %v1371, 126
    %v1392 = vpop.permute.xlu0 %1391
    %v1393 = vsel %vm513, %v1374, %v1376
    %v1394 = vsel %vm513, %v1378, %v1380
    %v1395 = vsel %vm513, %v1382, %v1384
    %v1396 = vsel %vm513, %v1386, %v1388
    %v1397 = vsel %vm513, %v1390, %v1392
    %v1403 = vadd.f32 %v1048, %v1393
    %v1404 = vadd.f32 %v1049, %v1394
    %v1405 = vadd.f32 %v1050, %v1395
    %v1406 = vadd.f32 %v1051, %v1396
    %v1407 = vadd.f32 %v1052, %v1397
    %v1408 = vld [vmem:[%s1 + $0x1b] sm:$0x1]
    %v1409 = vperm.slane %v1408, 0
    %1411 = vrot.lane.b32.xlu0 %v1409, 2
    %v1412 = vpop.permute.xlu0 %1411
    %v1414 = vmul.f32 %v92, %v1412
    %v1415 = vmul.f32 %v157, %v1412
    %v1416 = vmul.f32 %v93, %v1412
    %v1417 = vmul.f32 %v158, %v1412
    %v1418 = vmul.f32 %v94, %v1412
    %v1419 = vmul.f32 %v159, %v1412
    %v1420 = vmul.f32 %v773, %v1412
    %v1421 = vmul.f32 %v910, %v1412
    %v1430 = vrot.slane %v1414, 1
    %v1431 = vrot.slane %v1415, 1
    %v1432 = vrot.slane %v1416, 1
    %v1433 = vsel %vm784, %v1430, %v1432
    %v1434 = vrot.slane %v1417, 1
    %v1435 = vsel %vm784, %v1431, %v1434
    %v1436 = vrot.slane %v1418, 1
    %v1437 = vsel %vm784, %v1432, %v1436
    %v1438 = vrot.slane %v1419, 1
    %v1439 = vsel %vm784, %v1434, %v1438
    %v1440 = vrot.slane %v1420, 1
    %v1441 = vsel %vm784, %v1436, %v1440
    %v1442 = vrot.slane %v1421, 1
    %v1443 = vsel %vm784, %v1438, %v1442
    %1444 = vrot.lane.b32.xlu0 %v1430, 126
    %v1445 = vpop.permute.xlu0 %1444
    %1446 = vrot.lane.b32.xlu0 %v1431, 126
    %v1447 = vpop.permute.xlu0 %1446
    %1448 = vrot.lane.b32.xlu0 %v1433, 126
    %v1449 = vpop.permute.xlu0 %1448
    %1450 = vrot.lane.b32.xlu0 %v1435, 126
    %v1451 = vpop.permute.xlu0 %1450
    %1452 = vrot.lane.b32.xlu0 %v1437, 126
    %v1453 = vpop.permute.xlu0 %1452
    %1454 = vrot.lane.b32.xlu0 %v1439, 126
    %v1455 = vpop.permute.xlu0 %1454
    %1456 = vrot.lane.b32.xlu0 %v1441, 126
    %v1457 = vpop.permute.xlu0 %1456
    %1458 = vrot.lane.b32.xlu0 %v1443, 126
    %v1459 = vpop.permute.xlu0 %1458
    %1460 = vrot.lane.b32.xlu0 %v1440, 126
    %v1461 = vpop.permute.xlu0 %1460
    %1462 = vrot.lane.b32.xlu0 %v1442, 126
    %v1463 = vpop.permute.xlu0 %1462
    %v1464 = vsel %vm513, %v1445, %v1447
    %v1465 = vsel %vm513, %v1449, %v1451
    %v1466 = vsel %vm513, %v1453, %v1455
    %v1467 = vsel %vm513, %v1457, %v1459
    %v1468 = vsel %vm513, %v1461, %v1463
    %v1474 = vadd.f32 %v1119, %v1464
    %v1475 = vadd.f32 %v1120, %v1465
    %v1476 = vadd.f32 %v1121, %v1466
    %v1477 = vadd.f32 %v1122, %v1467
    %v1478 = vadd.f32 %v1123, %v1468
    %v1479 = vld [vmem:[%s1 + $0x1c] sm:$0x1]
    %v1480 = vperm.slane %v1479, 0
    %1482 = vrot.lane.b32.xlu0 %v1480, 2
    %v1483 = vpop.permute.xlu0 %1482
    %v1485 = vmul.f32 %v92, %v1483
    %v1486 = vmul.f32 %v157, %v1483
    %v1487 = vmul.f32 %v93, %v1483
    %v1488 = vmul.f32 %v158, %v1483
    %v1489 = vmul.f32 %v94, %v1483
    %v1490 = vmul.f32 %v159, %v1483
    %v1491 = vmul.f32 %v773, %v1483
    %v1492 = vmul.f32 %v910, %v1483
    %v1501 = vrot.slane %v1485, 1
    %v1502 = vrot.slane %v1486, 1
    %v1503 = vrot.slane %v1487, 1
    %v1504 = vsel %vm784, %v1501, %v1503
    %v1505 = vrot.slane %v1488, 1
    %v1506 = vsel %vm784, %v1502, %v1505
    %v1507 = vrot.slane %v1489, 1
    %v1508 = vsel %vm784, %v1503, %v1507
    %v1509 = vrot.slane %v1490, 1
    %v1510 = vsel %vm784, %v1505, %v1509
    %v1511 = vrot.slane %v1491, 1
    %v1512 = vsel %vm784, %v1507, %v1511
    %v1513 = vrot.slane %v1492, 1
    %v1514 = vsel %vm784, %v1509, %v1513
    %1515 = vrot.lane.b32.xlu0 %v1501, 126
    %v1516 = vpop.permute.xlu0 %1515
    %1517 = vrot.lane.b32.xlu0 %v1502, 126
    %v1518 = vpop.permute.xlu0 %1517
    %1519 = vrot.lane.b32.xlu0 %v1504, 126
    %v1520 = vpop.permute.xlu0 %1519
    %1521 = vrot.lane.b32.xlu0 %v1506, 126
    %v1522 = vpop.permute.xlu0 %1521
    %1523 = vrot.lane.b32.xlu0 %v1508, 126
    %v1524 = vpop.permute.xlu0 %1523
    %1525 = vrot.lane.b32.xlu0 %v1510, 126
    %v1526 = vpop.permute.xlu0 %1525
    %1527 = vrot.lane.b32.xlu0 %v1512, 126
    %v1528 = vpop.permute.xlu0 %1527
    %1529 = vrot.lane.b32.xlu0 %v1514, 126
    %v1530 = vpop.permute.xlu0 %1529
    %1531 = vrot.lane.b32.xlu0 %v1511, 126
    %v1532 = vpop.permute.xlu0 %1531
    %1533 = vrot.lane.b32.xlu0 %v1513, 126
    %v1534 = vpop.permute.xlu0 %1533
    %v1535 = vsel %vm513, %v1516, %v1518
    %v1536 = vsel %vm513, %v1520, %v1522
    %v1537 = vsel %vm513, %v1524, %v1526
    %v1538 = vsel %vm513, %v1528, %v1530
    %v1539 = vsel %vm513, %v1532, %v1534
    %v1545 = vadd.f32 %v1190, %v1535
    %v1546 = vadd.f32 %v1191, %v1536
    %v1547 = vadd.f32 %v1192, %v1537
    %v1548 = vadd.f32 %v1193, %v1538
    %v1549 = vadd.f32 %v1194, %v1539
    %v1550 = vld [vmem:[%s1 + $0x1d] sm:$0x1]
    %v1551 = vperm.slane %v1550, 0
    %1553 = vrot.lane.b32.xlu0 %v1551, 2
    %v1554 = vpop.permute.xlu0 %1553
    %v1556 = vmul.f32 %v92, %v1554
    %v1557 = vmul.f32 %v157, %v1554
    %v1558 = vmul.f32 %v93, %v1554
    %v1559 = vmul.f32 %v158, %v1554
    %v1560 = vmul.f32 %v94, %v1554
    %v1561 = vmul.f32 %v159, %v1554
    %v1562 = vmul.f32 %v773, %v1554
    %v1563 = vmul.f32 %v910, %v1554
    %v1572 = vrot.slane %v1556, 1
    %v1573 = vrot.slane %v1557, 1
    %v1574 = vrot.slane %v1558, 1
    %v1575 = vsel %vm784, %v1572, %v1574
    %v1576 = vrot.slane %v1559, 1
    %v1577 = vsel %vm784, %v1573, %v1576
    %v1578 = vrot.slane %v1560, 1
    %v1579 = vsel %vm784, %v1574, %v1578
    %v1580 = vrot.slane %v1561, 1
    %v1581 = vsel %vm784, %v1576, %v1580
    %v1582 = vrot.slane %v1562, 1
    %v1583 = vsel %vm784, %v1578, %v1582
    %v1584 = vrot.slane %v1563, 1
    %v1585 = vsel %vm784, %v1580, %v1584
    %1586 = vrot.lane.b32.xlu0 %v1572, 126
    %v1587 = vpop.permute.xlu0 %1586
    %1588 = vrot.lane.b32.xlu0 %v1573, 126
    %v1589 = vpop.permute.xlu0 %1588
    %1590 = vrot.lane.b32.xlu0 %v1575, 126
    %v1591 = vpop.permute.xlu0 %1590
    %1592 = vrot.lane.b32.xlu0 %v1577, 126
    %v1593 = vpop.permute.xlu0 %1592
    %1594 = vrot.lane.b32.xlu0 %v1579, 126
    %v1595 = vpop.permute.xlu0 %1594
    %1596 = vrot.lane.b32.xlu0 %v1581, 126
    %v1597 = vpop.permute.xlu0 %1596
    %1598 = vrot.lane.b32.xlu0 %v1583, 126
    %v1599 = vpop.permute.xlu0 %1598
    %1600 = vrot.lane.b32.xlu0 %v1585, 126
    %v1601 = vpop.permute.xlu0 %1600
    %1602 = vrot.lane.b32.xlu0 %v1582, 126
    %v1603 = vpop.permute.xlu0 %1602
    %1604 = vrot.lane.b32.xlu0 %v1584, 126
    %v1605 = vpop.permute.xlu0 %1604
    %v1606 = vsel %vm513, %v1587, %v1589
    %v1607 = vsel %vm513, %v1591, %v1593
    %v1608 = vsel %vm513, %v1595, %v1597
    %v1609 = vsel %vm513, %v1599, %v1601
    %v1610 = vsel %vm513, %v1603, %v1605
    %v1616 = vadd.f32 %v1261, %v1606
    %v1617 = vadd.f32 %v1262, %v1607
    %v1618 = vadd.f32 %v1263, %v1608
    %v1619 = vadd.f32 %v1264, %v1609
    %v1620 = vadd.f32 %v1265, %v1610
    %v1621 = vld [vmem:[#allocation2 + $0x10] sm:$0xfe]
    %v1622 = vld [vmem:[#allocation2 + $0x50] sm:$0x1]
    %v1623 = vld [vmem:[%s1 + $0x1e] sm:$0x1]
    %v1624 = vperm.slane %v1623, 0
    %v1625 = vmul.f32 %v1621, %v1624
    %v1626 = vmul.f32 %v93, %v1624
    %v1627 = vmul.f32 %v94, %v1624
    %v1628 = vmul.f32 %v773, %v1624
    %v1629 = vmul.f32 %v1622, %v1624
    %vm1635 = vcmask 1045504
    %v1636 = vrot.slane %v1625, 2
    %v1637 = vrot.slane %v1626, 2
    %v1638 = vsel %vm1635, %v1636, %v1637
    %v1639 = vrot.slane %v1627, 2
    %v1640 = vsel %vm1635, %v1637, %v1639
    %v1641 = vrot.slane %v1628, 2
    %v1642 = vsel %vm1635, %v1639, %v1641
    %v1643 = vrot.slane %v1629, 2
    %v1644 = vsel %vm1635, %v1641, %v1643
    %v1650 = vadd.f32 %v1332, %v1636
    %v1651 = vadd.f32 %v1333, %v1638
    %v1652 = vadd.f32 %v1334, %v1640
    %v1653 = vadd.f32 %v1335, %v1642
    %v1654 = vadd.f32 %v1336, %v1644
    %v1655 = vld [vmem:[%s1 + $0x1f] sm:$0x1]
    %v1656 = vperm.slane %v1655, 0
    %v1657 = vmul.f32 %v1621, %v1656
    %v1658 = vmul.f32 %v93, %v1656
    %v1659 = vmul.f32 %v94, %v1656
    %v1660 = vmul.f32 %v773, %v1656
    %v1661 = vmul.f32 %v1622, %v1656
    %v1667 = vrot.slane %v1657, 2
    %v1668 = vrot.slane %v1658, 2
    %v1669 = vsel %vm1635, %v1667, %v1668
    %v1670 = vrot.slane %v1659, 2
    %v1671 = vsel %vm1635, %v1668, %v1670
    %v1672 = vrot.slane %v1660, 2
    %v1673 = vsel %vm1635, %v1670, %v1672
    %v1674 = vrot.slane %v1661, 2
    %v1675 = vsel %vm1635, %v1672, %v1674
    %v1681 = vadd.f32 %v1403, %v1667
    %v1682 = vadd.f32 %v1404, %v1669
    %v1683 = vadd.f32 %v1405, %v1671
    %v1684 = vadd.f32 %v1406, %v1673
    %v1685 = vadd.f32 %v1407, %v1675
    %v1686 = vld [vmem:[%s1 + $0x20] sm:$0x1]
    %v1687 = vperm.slane %v1686, 0
    %v1688 = vmul.f32 %v1621, %v1687
    %v1689 = vmul.f32 %v93, %v1687
    %v1690 = vmul.f32 %v94, %v1687
    %v1691 = vmul.f32 %v773, %v1687
    %v1692 = vmul.f32 %v1622, %v1687
    %v1698 = vrot.slane %v1688, 2
    %v1699 = vrot.slane %v1689, 2
    %v1700 = vsel %vm1635, %v1698, %v1699
    %v1701 = vrot.slane %v1690, 2
    %v1702 = vsel %vm1635, %v1699, %v1701
    %v1703 = vrot.slane %v1691, 2
    %v1704 = vsel %vm1635, %v1701, %v1703
    %v1705 = vrot.slane %v1692, 2
    %v1706 = vsel %vm1635, %v1703, %v1705
    %v1712 = vadd.f32 %v1474, %v1698
    %v1713 = vadd.f32 %v1475, %v1700
    %v1714 = vadd.f32 %v1476, %v1702
    %v1715 = vadd.f32 %v1477, %v1704
    %v1716 = vadd.f32 %v1478, %v1706
    %v1717 = vld [vmem:[%s1 + $0x21] sm:$0x1]
    %v1718 = vperm.slane %v1717, 0
    %v1719 = vmul.f32 %v1621, %v1718
    %v1720 = vmul.f32 %v93, %v1718
    %v1721 = vmul.f32 %v94, %v1718
    %v1722 = vmul.f32 %v773, %v1718
    %v1723 = vmul.f32 %v1622, %v1718
    %v1729 = vrot.slane %v1719, 2
    %v1730 = vrot.slane %v1720, 2
    %v1731 = vsel %vm1635, %v1729, %v1730
    %v1732 = vrot.slane %v1721, 2
    %v1733 = vsel %vm1635, %v1730, %v1732
    %v1734 = vrot.slane %v1722, 2
    %v1735 = vsel %vm1635, %v1732, %v1734
    %v1736 = vrot.slane %v1723, 2
    %v1737 = vsel %vm1635, %v1734, %v1736
    %v1743 = vadd.f32 %v1545, %v1729
    %v1744 = vadd.f32 %v1546, %v1731
    %v1745 = vadd.f32 %v1547, %v1733
    %v1746 = vadd.f32 %v1548, %v1735
    %v1747 = vadd.f32 %v1549, %v1737
    %v1748 = vld [vmem:[%s1 + $0x22] sm:$0x1]
    %v1749 = vperm.slane %v1748, 0
    %v1750 = vmul.f32 %v1621, %v1749
    %v1751 = vmul.f32 %v93, %v1749
    %v1752 = vmul.f32 %v94, %v1749
    %v1753 = vmul.f32 %v773, %v1749
    %v1754 = vmul.f32 %v1622, %v1749
    %v1760 = vrot.slane %v1750, 2
    %v1761 = vrot.slane %v1751, 2
    %v1762 = vsel %vm1635, %v1760, %v1761
    %v1763 = vrot.slane %v1752, 2
    %v1764 = vsel %vm1635, %v1761, %v1763
    %v1765 = vrot.slane %v1753, 2
    %v1766 = vsel %vm1635, %v1763, %v1765
    %v1767 = vrot.slane %v1754, 2
    %v1768 = vsel %vm1635, %v1765, %v1767
    %v1774 = vadd.f32 %v1616, %v1760
    %v1775 = vadd.f32 %v1617, %v1762
    %v1776 = vadd.f32 %v1618, %v1764
    %v1777 = vadd.f32 %v1619, %v1766
    %v1778 = vadd.f32 %v1620, %v1768
    %v1779 = vld [vmem:[#allocation2 + $0x10] sm:$0xfe]
    %v1780 = vld [vmem:[#allocation2 + $0x18] sm:$0xfe]
    %v1781 = vld [vmem:[#allocation2 + $0x20] sm:$0xff]
    %v1782 = vld [vmem:[#allocation2 + $0x28] sm:$0xff]
    %v1783 = vld [vmem:[#allocation2 + $0x30] sm:$0xff]
    %v1784 = vld [vmem:[#allocation2 + $0x38] sm:$0xff]
    %v1785 = vld [vmem:[#allocation2 + $0x40] sm:$0xff]
    %v1786 = vld [vmem:[#allocation2 + $0x48] sm:$0xff]
    %v1787 = vld [vmem:[#allocation2 + $0x50] sm:$0x1]
    %v1788 = vld [vmem:[#allocation2 + $0x58] sm:$0x1]
    %v1789 = vld [vmem:[%s1 + $0x23] sm:$0x1]
    %v1790 = vperm.slane %v1789, 0
    %1792 = vrot.lane.b32.xlu0 %v1790, 1
    %v1793 = vpop.permute.xlu0 %1792
    %v1795 = vmul.f32 %v1779, %v1793
    %v1796 = vmul.f32 %v1780, %v1793
    %v1797 = vmul.f32 %v1781, %v1793
    %v1798 = vmul.f32 %v1782, %v1793
    %v1799 = vmul.f32 %v1783, %v1793
    %v1800 = vmul.f32 %v1784, %v1793
    %v1801 = vmul.f32 %v1785, %v1793
    %v1802 = vmul.f32 %v1786, %v1793
    %v1803 = vmul.f32 %v1787, %v1793
    %v1804 = vmul.f32 %v1788, %v1793
    %v1815 = vrot.slane %v1795, 2
    %v1816 = vrot.slane %v1796, 2
    %v1817 = vrot.slane %v1797, 2
    %v1818 = vsel %vm1635, %v1815, %v1817
    %v1819 = vrot.slane %v1798, 2
    %v1820 = vsel %vm1635, %v1816, %v1819
    %v1821 = vrot.slane %v1799, 2
    %v1822 = vsel %vm1635, %v1817, %v1821
    %v1823 = vrot.slane %v1800, 2
    %v1824 = vsel %vm1635, %v1819, %v1823
    %v1825 = vrot.slane %v1801, 2
    %v1826 = vsel %vm1635, %v1821, %v1825
    %v1827 = vrot.slane %v1802, 2
    %v1828 = vsel %vm1635, %v1823, %v1827
    %v1829 = vrot.slane %v1803, 2
    %v1830 = vsel %vm1635, %v1825, %v1829
    %v1831 = vrot.slane %v1804, 2
    %v1832 = vsel %vm1635, %v1827, %v1831
    %1833 = vrot.lane.b32.xlu0 %v1815, 127
    %v1834 = vpop.permute.xlu0 %1833
    %1835 = vrot.lane.b32.xlu0 %v1816, 127
    %v1836 = vpop.permute.xlu0 %1835
    %1837 = vrot.lane.b32.xlu0 %v1818, 127
    %v1838 = vpop.permute.xlu0 %1837
    %1839 = vrot.lane.b32.xlu0 %v1820, 127
    %v1840 = vpop.permute.xlu0 %1839
    %1841 = vrot.lane.b32.xlu0 %v1822, 127
    %v1842 = vpop.permute.xlu0 %1841
    %1843 = vrot.lane.b32.xlu0 %v1824, 127
    %v1844 = vpop.permute.xlu0 %1843
    %1845 = vrot.lane.b32.xlu0 %v1826, 127
    %v1846 = vpop.permute.xlu0 %1845
    %1847 = vrot.lane.b32.xlu0 %v1828, 127
    %v1848 = vpop.permute.xlu0 %1847
    %1849 = vrot.lane.b32.xlu0 %v1830, 127
    %v1850 = vpop.permute.xlu0 %1849
    %1851 = vrot.lane.b32.xlu0 %v1832, 127
    %v1852 = vpop.permute.xlu0 %1851
    %v1853 = vsel %vm207, %v1834, %v1836
    %v1854 = vsel %vm207, %v1838, %v1840
    %v1855 = vsel %vm207, %v1842, %v1844
    %v1856 = vsel %vm207, %v1846, %v1848
    %v1857 = vsel %vm207, %v1850, %v1852
    %v1863 = vadd.f32 %v1650, %v1853
    %v1864 = vadd.f32 %v1651, %v1854
    %v1865 = vadd.f32 %v1652, %v1855
    %v1866 = vadd.f32 %v1653, %v1856
    %v1867 = vadd.f32 %v1654, %v1857
    %v1868 = vld [vmem:[%s1 + $0x24] sm:$0x1]
    %v1869 = vperm.slane %v1868, 0
    %1871 = vrot.lane.b32.xlu0 %v1869, 1
    %v1872 = vpop.permute.xlu0 %1871
    %v1874 = vmul.f32 %v1779, %v1872
    %v1875 = vmul.f32 %v1780, %v1872
    %v1876 = vmul.f32 %v1781, %v1872
    %v1877 = vmul.f32 %v1782, %v1872
    %v1878 = vmul.f32 %v1783, %v1872
    %v1879 = vmul.f32 %v1784, %v1872
    %v1880 = vmul.f32 %v1785, %v1872
    %v1881 = vmul.f32 %v1786, %v1872
    %v1882 = vmul.f32 %v1787, %v1872
    %v1883 = vmul.f32 %v1788, %v1872
    %v1894 = vrot.slane %v1874, 2
    %v1895 = vrot.slane %v1875, 2
    %v1896 = vrot.slane %v1876, 2
    %v1897 = vsel %vm1635, %v1894, %v1896
    %v1898 = vrot.slane %v1877, 2
    %v1899 = vsel %vm1635, %v1895, %v1898
    %v1900 = vrot.slane %v1878, 2
    %v1901 = vsel %vm1635, %v1896, %v1900
    %v1902 = vrot.slane %v1879, 2
    %v1903 = vsel %vm1635, %v1898, %v1902
    %v1904 = vrot.slane %v1880, 2
    %v1905 = vsel %vm1635, %v1900, %v1904
    %v1906 = vrot.slane %v1881, 2
    %v1907 = vsel %vm1635, %v1902, %v1906
    %v1908 = vrot.slane %v1882, 2
    %v1909 = vsel %vm1635, %v1904, %v1908
    %v1910 = vrot.slane %v1883, 2
    %v1911 = vsel %vm1635, %v1906, %v1910
    %1912 = vrot.lane.b32.xlu0 %v1894, 127
    %v1913 = vpop.permute.xlu0 %1912
    %1914 = vrot.lane.b32.xlu0 %v1895, 127
    %v1915 = vpop.permute.xlu0 %1914
    %1916 = vrot.lane.b32.xlu0 %v1897, 127
    %v1917 = vpop.permute.xlu0 %1916
    %1918 = vrot.lane.b32.xlu0 %v1899, 127
    %v1919 = vpop.permute.xlu0 %1918
    %1920 = vrot.lane.b32.xlu0 %v1901, 127
    %v1921 = vpop.permute.xlu0 %1920
    %1922 = vrot.lane.b32.xlu0 %v1903, 127
    %v1923 = vpop.permute.xlu0 %1922
    %1924 = vrot.lane.b32.xlu0 %v1905, 127
    %v1925 = vpop.permute.xlu0 %1924
    %1926 = vrot.lane.b32.xlu0 %v1907, 127
    %v1927 = vpop.permute.xlu0 %1926
    %1928 = vrot.lane.b32.xlu0 %v1909, 127
    %v1929 = vpop.permute.xlu0 %1928
    %1930 = vrot.lane.b32.xlu0 %v1911, 127
    %v1931 = vpop.permute.xlu0 %1930
    %v1932 = vsel %vm207, %v1913, %v1915
    %v1933 = vsel %vm207, %v1917, %v1919
    %v1934 = vsel %vm207, %v1921, %v1923
    %v1935 = vsel %vm207, %v1925, %v1927
    %v1936 = vsel %vm207, %v1929, %v1931
    %v1942 = vadd.f32 %v1681, %v1932
    %v1943 = vadd.f32 %v1682, %v1933
    %v1944 = vadd.f32 %v1683, %v1934
    %v1945 = vadd.f32 %v1684, %v1935
    %v1946 = vadd.f32 %v1685, %v1936
    %v1947 = vld [vmem:[%s1 + $0x25] sm:$0x1]
    %v1948 = vperm.slane %v1947, 0
    %1950 = vrot.lane.b32.xlu0 %v1948, 1
    %v1951 = vpop.permute.xlu0 %1950
    %v1953 = vmul.f32 %v1779, %v1951
    %v1954 = vmul.f32 %v1780, %v1951
    %v1955 = vmul.f32 %v1781, %v1951
    %v1956 = vmul.f32 %v1782, %v1951
    %v1957 = vmul.f32 %v1783, %v1951
    %v1958 = vmul.f32 %v1784, %v1951
    %v1959 = vmul.f32 %v1785, %v1951
    %v1960 = vmul.f32 %v1786, %v1951
    %v1961 = vmul.f32 %v1787, %v1951
    %v1962 = vmul.f32 %v1788, %v1951
    %v1973 = vrot.slane %v1953, 2
    %v1974 = vrot.slane %v1954, 2
    %v1975 = vrot.slane %v1955, 2
    %v1976 = vsel %vm1635, %v1973, %v1975
    %v1977 = vrot.slane %v1956, 2
    %v1978 = vsel %vm1635, %v1974, %v1977
    %v1979 = vrot.slane %v1957, 2
    %v1980 = vsel %vm1635, %v1975, %v1979
    %v1981 = vrot.slane %v1958, 2
    %v1982 = vsel %vm1635, %v1977, %v1981
    %v1983 = vrot.slane %v1959, 2
    %v1984 = vsel %vm1635, %v1979, %v1983
    %v1985 = vrot.slane %v1960, 2
    %v1986 = vsel %vm1635, %v1981, %v1985
    %v1987 = vrot.slane %v1961, 2
    %v1988 = vsel %vm1635, %v1983, %v1987
    %v1989 = vrot.slane %v1962, 2
    %v1990 = vsel %vm1635, %v1985, %v1989
    %1991 = vrot.lane.b32.xlu0 %v1973, 127
    %v1992 = vpop.permute.xlu0 %1991
    %1993 = vrot.lane.b32.xlu0 %v1974, 127
    %v1994 = vpop.permute.xlu0 %1993
    %1995 = vrot.lane.b32.xlu0 %v1976, 127
    %v1996 = vpop.permute.xlu0 %1995
    %1997 = vrot.lane.b32.xlu0 %v1978, 127
    %v1998 = vpop.permute.xlu0 %1997
    %1999 = vrot.lane.b32.xlu0 %v1980, 127
    %v2000 = vpop.permute.xlu0 %1999
    %2001 = vrot.lane.b32.xlu0 %v1982, 127
    %v2002 = vpop.permute.xlu0 %2001
    %2003 = vrot.lane.b32.xlu0 %v1984, 127
    %v2004 = vpop.permute.xlu0 %2003
    %2005 = vrot.lane.b32.xlu0 %v1986, 127
    %v2006 = vpop.permute.xlu0 %2005
    %2007 = vrot.lane.b32.xlu0 %v1988, 127
    %v2008 = vpop.permute.xlu0 %2007
    %2009 = vrot.lane.b32.xlu0 %v1990, 127
    %v2010 = vpop.permute.xlu0 %2009
    %v2011 = vsel %vm207, %v1992, %v1994
    %v2012 = vsel %vm207, %v1996, %v1998
    %v2013 = vsel %vm207, %v2000, %v2002
    %v2014 = vsel %vm207, %v2004, %v2006
    %v2015 = vsel %vm207, %v2008, %v2010
    %v2021 = vadd.f32 %v1712, %v2011
    %v2022 = vadd.f32 %v1713, %v2012
    %v2023 = vadd.f32 %v1714, %v2013
    %v2024 = vadd.f32 %v1715, %v2014
    %v2025 = vadd.f32 %v1716, %v2015
    %v2026 = vld [vmem:[%s1 + $0x26] sm:$0x1]
    %v2027 = vperm.slane %v2026, 0
    %2029 = vrot.lane.b32.xlu0 %v2027, 1
    %v2030 = vpop.permute.xlu0 %2029
    %v2032 = vmul.f32 %v1779, %v2030
    %v2033 = vmul.f32 %v1780, %v2030
    %v2034 = vmul.f32 %v1781, %v2030
    %v2035 = vmul.f32 %v1782, %v2030
    %v2036 = vmul.f32 %v1783, %v2030
    %v2037 = vmul.f32 %v1784, %v2030
    %v2038 = vmul.f32 %v1785, %v2030
    %v2039 = vmul.f32 %v1786, %v2030
    %v2040 = vmul.f32 %v1787, %v2030
    %v2041 = vmul.f32 %v1788, %v2030
    %v2052 = vrot.slane %v2032, 2
    %v2053 = vrot.slane %v2033, 2
    %v2054 = vrot.slane %v2034, 2
    %v2055 = vsel %vm1635, %v2052, %v2054
    %v2056 = vrot.slane %v2035, 2
    %v2057 = vsel %vm1635, %v2053, %v2056
    %v2058 = vrot.slane %v2036, 2
    %v2059 = vsel %vm1635, %v2054, %v2058
    %v2060 = vrot.slane %v2037, 2
    %v2061 = vsel %vm1635, %v2056, %v2060
    %v2062 = vrot.slane %v2038, 2
    %v2063 = vsel %vm1635, %v2058, %v2062
    %v2064 = vrot.slane %v2039, 2
    %v2065 = vsel %vm1635, %v2060, %v2064
    %v2066 = vrot.slane %v2040, 2
    %v2067 = vsel %vm1635, %v2062, %v2066
    %v2068 = vrot.slane %v2041, 2
    %v2069 = vsel %vm1635, %v2064, %v2068
    %2070 = vrot.lane.b32.xlu0 %v2052, 127
    %v2071 = vpop.permute.xlu0 %2070
    %2072 = vrot.lane.b32.xlu0 %v2053, 127
    %v2073 = vpop.permute.xlu0 %2072
    %2074 = vrot.lane.b32.xlu0 %v2055, 127
    %v2075 = vpop.permute.xlu0 %2074
    %2076 = vrot.lane.b32.xlu0 %v2057, 127
    %v2077 = vpop.permute.xlu0 %2076
    %2078 = vrot.lane.b32.xlu0 %v2059, 127
    %v2079 = vpop.permute.xlu0 %2078
    %2080 = vrot.lane.b32.xlu0 %v2061, 127
    %v2081 = vpop.permute.xlu0 %2080
    %2082 = vrot.lane.b32.xlu0 %v2063, 127
    %v2083 = vpop.permute.xlu0 %2082
    %2084 = vrot.lane.b32.xlu0 %v2065, 127
    %v2085 = vpop.permute.xlu0 %2084
    %2086 = vrot.lane.b32.xlu0 %v2067, 127
    %v2087 = vpop.permute.xlu0 %2086
    %2088 = vrot.lane.b32.xlu0 %v2069, 127
    %v2089 = vpop.permute.xlu0 %2088
    %v2090 = vsel %vm207, %v2071, %v2073
    %v2091 = vsel %vm207, %v2075, %v2077
    %v2092 = vsel %vm207, %v2079, %v2081
    %v2093 = vsel %vm207, %v2083, %v2085
    %v2094 = vsel %vm207, %v2087, %v2089
    %v2100 = vadd.f32 %v1743, %v2090
    %v2101 = vadd.f32 %v1744, %v2091
    %v2102 = vadd.f32 %v1745, %v2092
    %v2103 = vadd.f32 %v1746, %v2093
    %v2104 = vadd.f32 %v1747, %v2094
    %v2105 = vld [vmem:[%s1 + $0x27] sm:$0x1]
    %v2106 = vperm.slane %v2105, 0
    %2108 = vrot.lane.b32.xlu0 %v2106, 1
    %v2109 = vpop.permute.xlu0 %2108
    %v2111 = vmul.f32 %v1779, %v2109
    %v2112 = vmul.f32 %v1780, %v2109
    %v2113 = vmul.f32 %v1781, %v2109
    %v2114 = vmul.f32 %v1782, %v2109
    %v2115 = vmul.f32 %v1783, %v2109
    %v2116 = vmul.f32 %v1784, %v2109
    %v2117 = vmul.f32 %v1785, %v2109
    %v2118 = vmul.f32 %v1786, %v2109
    %v2119 = vmul.f32 %v1787, %v2109
    %v2120 = vmul.f32 %v1788, %v2109
    %v2131 = vrot.slane %v2111, 2
    %v2132 = vrot.slane %v2112, 2
    %v2133 = vrot.slane %v2113, 2
    %v2134 = vsel %vm1635, %v2131, %v2133
    %v2135 = vrot.slane %v2114, 2
    %v2136 = vsel %vm1635, %v2132, %v2135
    %v2137 = vrot.slane %v2115, 2
    %v2138 = vsel %vm1635, %v2133, %v2137
    %v2139 = vrot.slane %v2116, 2
    %v2140 = vsel %vm1635, %v2135, %v2139
    %v2141 = vrot.slane %v2117, 2
    %v2142 = vsel %vm1635, %v2137, %v2141
    %v2143 = vrot.slane %v2118, 2
    %v2144 = vsel %vm1635, %v2139, %v2143
    %v2145 = vrot.slane %v2119, 2
    %v2146 = vsel %vm1635, %v2141, %v2145
    %v2147 = vrot.slane %v2120, 2
    %v2148 = vsel %vm1635, %v2143, %v2147
    %2149 = vrot.lane.b32.xlu0 %v2131, 127
    %v2150 = vpop.permute.xlu0 %2149
    %2151 = vrot.lane.b32.xlu0 %v2132, 127
    %v2152 = vpop.permute.xlu0 %2151
    %2153 = vrot.lane.b32.xlu0 %v2134, 127
    %v2154 = vpop.permute.xlu0 %2153
    %2155 = vrot.lane.b32.xlu0 %v2136, 127
    %v2156 = vpop.permute.xlu0 %2155
    %2157 = vrot.lane.b32.xlu0 %v2138, 127
    %v2158 = vpop.permute.xlu0 %2157
    %2159 = vrot.lane.b32.xlu0 %v2140, 127
    %v2160 = vpop.permute.xlu0 %2159
    %2161 = vrot.lane.b32.xlu0 %v2142, 127
    %v2162 = vpop.permute.xlu0 %2161
    %2163 = vrot.lane.b32.xlu0 %v2144, 127
    %v2164 = vpop.permute.xlu0 %2163
    %2165 = vrot.lane.b32.xlu0 %v2146, 127
    %v2166 = vpop.permute.xlu0 %2165
    %2167 = vrot.lane.b32.xlu0 %v2148, 127
    %v2168 = vpop.permute.xlu0 %2167
    %v2169 = vsel %vm207, %v2150, %v2152
    %v2170 = vsel %vm207, %v2154, %v2156
    %v2171 = vsel %vm207, %v2158, %v2160
    %v2172 = vsel %vm207, %v2162, %v2164
    %v2173 = vsel %vm207, %v2166, %v2168
    %v2179 = vadd.f32 %v1774, %v2169
    %v2180 = vadd.f32 %v1775, %v2170
    %v2181 = vadd.f32 %v1776, %v2171
    %v2182 = vadd.f32 %v1777, %v2172
    %v2183 = vadd.f32 %v1778, %v2173
    %v2184 = vld [vmem:[%s1 + $0x28] sm:$0x1]
    %v2185 = vperm.slane %v2184, 0
    %2187 = vrot.lane.b32.xlu0 %v2185, 2
    %v2188 = vpop.permute.xlu0 %2187
    %v2190 = vmul.f32 %v1779, %v2188
    %v2191 = vmul.f32 %v1780, %v2188
    %v2192 = vmul.f32 %v1781, %v2188
    %v2193 = vmul.f32 %v1782, %v2188
    %v2194 = vmul.f32 %v1783, %v2188
    %v2195 = vmul.f32 %v1784, %v2188
    %v2196 = vmul.f32 %v1785, %v2188
    %v2197 = vmul.f32 %v1786, %v2188
    %v2198 = vmul.f32 %v1787, %v2188
    %v2199 = vmul.f32 %v1788, %v2188
    %v2210 = vrot.slane %v2190, 2
    %v2211 = vrot.slane %v2191, 2
    %v2212 = vrot.slane %v2192, 2
    %v2213 = vsel %vm1635, %v2210, %v2212
    %v2214 = vrot.slane %v2193, 2
    %v2215 = vsel %vm1635, %v2211, %v2214
    %v2216 = vrot.slane %v2194, 2
    %v2217 = vsel %vm1635, %v2212, %v2216
    %v2218 = vrot.slane %v2195, 2
    %v2219 = vsel %vm1635, %v2214, %v2218
    %v2220 = vrot.slane %v2196, 2
    %v2221 = vsel %vm1635, %v2216, %v2220
    %v2222 = vrot.slane %v2197, 2
    %v2223 = vsel %vm1635, %v2218, %v2222
    %v2224 = vrot.slane %v2198, 2
    %v2225 = vsel %vm1635, %v2220, %v2224
    %v2226 = vrot.slane %v2199, 2
    %v2227 = vsel %vm1635, %v2222, %v2226
    %2228 = vrot.lane.b32.xlu0 %v2210, 126
    %v2229 = vpop.permute.xlu0 %2228
    %2230 = vrot.lane.b32.xlu0 %v2211, 126
    %v2231 = vpop.permute.xlu0 %2230
    %2232 = vrot.lane.b32.xlu0 %v2213, 126
    %v2233 = vpop.permute.xlu0 %2232
    %2234 = vrot.lane.b32.xlu0 %v2215, 126
    %v2235 = vpop.permute.xlu0 %2234
    %2236 = vrot.lane.b32.xlu0 %v2217, 126
    %v2237 = vpop.permute.xlu0 %2236
    %2238 = vrot.lane.b32.xlu0 %v2219, 126
    %v2239 = vpop.permute.xlu0 %2238
    %2240 = vrot.lane.b32.xlu0 %v2221, 126
    %v2241 = vpop.permute.xlu0 %2240
    %2242 = vrot.lane.b32.xlu0 %v2223, 126
    %v2243 = vpop.permute.xlu0 %2242
    %2244 = vrot.lane.b32.xlu0 %v2225, 126
    %v2245 = vpop.permute.xlu0 %2244
    %2246 = vrot.lane.b32.xlu0 %v2227, 126
    %v2247 = vpop.permute.xlu0 %2246
    %v2248 = vsel %vm513, %v2229, %v2231
    %v2249 = vsel %vm513, %v2233, %v2235
    %v2250 = vsel %vm513, %v2237, %v2239
    %v2251 = vsel %vm513, %v2241, %v2243
    %v2252 = vsel %vm513, %v2245, %v2247
    %v2258 = vadd.f32 %v1863, %v2248
    %v2259 = vadd.f32 %v1864, %v2249
    %v2260 = vadd.f32 %v1865, %v2250
    %v2261 = vadd.f32 %v1866, %v2251
    %v2262 = vadd.f32 %v1867, %v2252
    %v2263 = vld [vmem:[%s1 + $0x29] sm:$0x1]
    %v2264 = vperm.slane %v2263, 0
    %2266 = vrot.lane.b32.xlu0 %v2264, 2
    %v2267 = vpop.permute.xlu0 %2266
    %v2269 = vmul.f32 %v1779, %v2267
    %v2270 = vmul.f32 %v1780, %v2267
    %v2271 = vmul.f32 %v1781, %v2267
    %v2272 = vmul.f32 %v1782, %v2267
    %v2273 = vmul.f32 %v1783, %v2267
    %v2274 = vmul.f32 %v1784, %v2267
    %v2275 = vmul.f32 %v1785, %v2267
    %v2276 = vmul.f32 %v1786, %v2267
    %v2277 = vmul.f32 %v1787, %v2267
    %v2278 = vmul.f32 %v1788, %v2267
    %v2289 = vrot.slane %v2269, 2
    %v2290 = vrot.slane %v2270, 2
    %v2291 = vrot.slane %v2271, 2
    %v2292 = vsel %vm1635, %v2289, %v2291
    %v2293 = vrot.slane %v2272, 2
    %v2294 = vsel %vm1635, %v2290, %v2293
    %v2295 = vrot.slane %v2273, 2
    %v2296 = vsel %vm1635, %v2291, %v2295
    %v2297 = vrot.slane %v2274, 2
    %v2298 = vsel %vm1635, %v2293, %v2297
    %v2299 = vrot.slane %v2275, 2
    %v2300 = vsel %vm1635, %v2295, %v2299
    %v2301 = vrot.slane %v2276, 2
    %v2302 = vsel %vm1635, %v2297, %v2301
    %v2303 = vrot.slane %v2277, 2
    %v2304 = vsel %vm1635, %v2299, %v2303
    %v2305 = vrot.slane %v2278, 2
    %v2306 = vsel %vm1635, %v2301, %v2305
    %2307 = vrot.lane.b32.xlu0 %v2289, 126
    %v2308 = vpop.permute.xlu0 %2307
    %2309 = vrot.lane.b32.xlu0 %v2290, 126
    %v2310 = vpop.permute.xlu0 %2309
    %2311 = vrot.lane.b32.xlu0 %v2292, 126
    %v2312 = vpop.permute.xlu0 %2311
    %2313 = vrot.lane.b32.xlu0 %v2294, 126
    %v2314 = vpop.permute.xlu0 %2313
    %2315 = vrot.lane.b32.xlu0 %v2296, 126
    %v2316 = vpop.permute.xlu0 %2315
    %2317 = vrot.lane.b32.xlu0 %v2298, 126
    %v2318 = vpop.permute.xlu0 %2317
    %2319 = vrot.lane.b32.xlu0 %v2300, 126
    %v2320 = vpop.permute.xlu0 %2319
    %2321 = vrot.lane.b32.xlu0 %v2302, 126
    %v2322 = vpop.permute.xlu0 %2321
    %2323 = vrot.lane.b32.xlu0 %v2304, 126
    %v2324 = vpop.permute.xlu0 %2323
    %2325 = vrot.lane.b32.xlu0 %v2306, 126
    %v2326 = vpop.permute.xlu0 %2325
    %v2327 = vsel %vm513, %v2308, %v2310
    %v2328 = vsel %vm513, %v2312, %v2314
    %v2329 = vsel %vm513, %v2316, %v2318
    %v2330 = vsel %vm513, %v2320, %v2322
    %v2331 = vsel %vm513, %v2324, %v2326
    %v2337 = vadd.f32 %v1942, %v2327
    %v2338 = vadd.f32 %v1943, %v2328
    %v2339 = vadd.f32 %v1944, %v2329
    %v2340 = vadd.f32 %v1945, %v2330
    %v2341 = vadd.f32 %v1946, %v2331
    %v2342 = vld [vmem:[%s1 + $0x2a] sm:$0x1]
    %v2343 = vperm.slane %v2342, 0
    %2345 = vrot.lane.b32.xlu0 %v2343, 2
    %v2346 = vpop.permute.xlu0 %2345
    %v2348 = vmul.f32 %v1779, %v2346
    %v2349 = vmul.f32 %v1780, %v2346
    %v2350 = vmul.f32 %v1781, %v2346
    %v2351 = vmul.f32 %v1782, %v2346
    %v2352 = vmul.f32 %v1783, %v2346
    %v2353 = vmul.f32 %v1784, %v2346
    %v2354 = vmul.f32 %v1785, %v2346
    %v2355 = vmul.f32 %v1786, %v2346
    %v2356 = vmul.f32 %v1787, %v2346
    %v2357 = vmul.f32 %v1788, %v2346
    %v2368 = vrot.slane %v2348, 2
    %v2369 = vrot.slane %v2349, 2
    %v2370 = vrot.slane %v2350, 2
    %v2371 = vsel %vm1635, %v2368, %v2370
    %v2372 = vrot.slane %v2351, 2
    %v2373 = vsel %vm1635, %v2369, %v2372
    %v2374 = vrot.slane %v2352, 2
    %v2375 = vsel %vm1635, %v2370, %v2374
    %v2376 = vrot.slane %v2353, 2
    %v2377 = vsel %vm1635, %v2372, %v2376
    %v2378 = vrot.slane %v2354, 2
    %v2379 = vsel %vm1635, %v2374, %v2378
    %v2380 = vrot.slane %v2355, 2
    %v2381 = vsel %vm1635, %v2376, %v2380
    %v2382 = vrot.slane %v2356, 2
    %v2383 = vsel %vm1635, %v2378, %v2382
    %v2384 = vrot.slane %v2357, 2
    %v2385 = vsel %vm1635, %v2380, %v2384
    %2386 = vrot.lane.b32.xlu0 %v2368, 126
    %v2387 = vpop.permute.xlu0 %2386
    %2388 = vrot.lane.b32.xlu0 %v2369, 126
    %v2389 = vpop.permute.xlu0 %2388
    %2390 = vrot.lane.b32.xlu0 %v2371, 126
    %v2391 = vpop.permute.xlu0 %2390
    %2392 = vrot.lane.b32.xlu0 %v2373, 126
    %v2393 = vpop.permute.xlu0 %2392
    %2394 = vrot.lane.b32.xlu0 %v2375, 126
    %v2395 = vpop.permute.xlu0 %2394
    %2396 = vrot.lane.b32.xlu0 %v2377, 126
    %v2397 = vpop.permute.xlu0 %2396
    %2398 = vrot.lane.b32.xlu0 %v2379, 126
    %v2399 = vpop.permute.xlu0 %2398
    %2400 = vrot.lane.b32.xlu0 %v2381, 126
    %v2401 = vpop.permute.xlu0 %2400
    %2402 = vrot.lane.b32.xlu0 %v2383, 126
    %v2403 = vpop.permute.xlu0 %2402
    %2404 = vrot.lane.b32.xlu0 %v2385, 126
    %v2405 = vpop.permute.xlu0 %2404
    %v2406 = vsel %vm513, %v2387, %v2389
    %v2407 = vsel %vm513, %v2391, %v2393
    %v2408 = vsel %vm513, %v2395, %v2397
    %v2409 = vsel %vm513, %v2399, %v2401
    %v2410 = vsel %vm513, %v2403, %v2405
    %v2416 = vadd.f32 %v2021, %v2406
    %v2417 = vadd.f32 %v2022, %v2407
    %v2418 = vadd.f32 %v2023, %v2408
    %v2419 = vadd.f32 %v2024, %v2409
    %v2420 = vadd.f32 %v2025, %v2410
    %v2421 = vld [vmem:[%s1 + $0x2b] sm:$0x1]
    %v2422 = vperm.slane %v2421, 0
    %2424 = vrot.lane.b32.xlu0 %v2422, 2
    %v2425 = vpop.permute.xlu0 %2424
    %v2427 = vmul.f32 %v1779, %v2425
    %v2428 = vmul.f32 %v1780, %v2425
    %v2429 = vmul.f32 %v1781, %v2425
    %v2430 = vmul.f32 %v1782, %v2425
    %v2431 = vmul.f32 %v1783, %v2425
    %v2432 = vmul.f32 %v1784, %v2425
    %v2433 = vmul.f32 %v1785, %v2425
    %v2434 = vmul.f32 %v1786, %v2425
    %v2435 = vmul.f32 %v1787, %v2425
    %v2436 = vmul.f32 %v1788, %v2425
    %v2447 = vrot.slane %v2427, 2
    %v2448 = vrot.slane %v2428, 2
    %v2449 = vrot.slane %v2429, 2
    %v2450 = vsel %vm1635, %v2447, %v2449
    %v2451 = vrot.slane %v2430, 2
    %v2452 = vsel %vm1635, %v2448, %v2451
    %v2453 = vrot.slane %v2431, 2
    %v2454 = vsel %vm1635, %v2449, %v2453
    %v2455 = vrot.slane %v2432, 2
    %v2456 = vsel %vm1635, %v2451, %v2455
    %v2457 = vrot.slane %v2433, 2
    %v2458 = vsel %vm1635, %v2453, %v2457
    %v2459 = vrot.slane %v2434, 2
    %v2460 = vsel %vm1635, %v2455, %v2459
    %v2461 = vrot.slane %v2435, 2
    %v2462 = vsel %vm1635, %v2457, %v2461
    %v2463 = vrot.slane %v2436, 2
    %v2464 = vsel %vm1635, %v2459, %v2463
    %2465 = vrot.lane.b32.xlu0 %v2447, 126
    %v2466 = vpop.permute.xlu0 %2465
    %2467 = vrot.lane.b32.xlu0 %v2448, 126
    %v2468 = vpop.permute.xlu0 %2467
    %2469 = vrot.lane.b32.xlu0 %v2450, 126
    %v2470 = vpop.permute.xlu0 %2469
    %2471 = vrot.lane.b32.xlu0 %v2452, 126
    %v2472 = vpop.permute.xlu0 %2471
    %2473 = vrot.lane.b32.xlu0 %v2454, 126
    %v2474 = vpop.permute.xlu0 %2473
    %2475 = vrot.lane.b32.xlu0 %v2456, 126
    %v2476 = vpop.permute.xlu0 %2475
    %2477 = vrot.lane.b32.xlu0 %v2458, 126
    %v2478 = vpop.permute.xlu0 %2477
    %2479 = vrot.lane.b32.xlu0 %v2460, 126
    %v2480 = vpop.permute.xlu0 %2479
    %2481 = vrot.lane.b32.xlu0 %v2462, 126
    %v2482 = vpop.permute.xlu0 %2481
    %2483 = vrot.lane.b32.xlu0 %v2464, 126
    %v2484 = vpop.permute.xlu0 %2483
    %v2485 = vsel %vm513, %v2466, %v2468
    %v2486 = vsel %vm513, %v2470, %v2472
    %v2487 = vsel %vm513, %v2474, %v2476
    %v2488 = vsel %vm513, %v2478, %v2480
    %v2489 = vsel %vm513, %v2482, %v2484
    %v2495 = vadd.f32 %v2100, %v2485
    %v2496 = vadd.f32 %v2101, %v2486
    %v2497 = vadd.f32 %v2102, %v2487
    %v2498 = vadd.f32 %v2103, %v2488
    %v2499 = vadd.f32 %v2104, %v2489
    %v2500 = vld [vmem:[%s1 + $0x2c] sm:$0x1]
    %v2501 = vperm.slane %v2500, 0
    %2503 = vrot.lane.b32.xlu0 %v2501, 2
    %v2504 = vpop.permute.xlu0 %2503
    %v2506 = vmul.f32 %v1779, %v2504
    %v2507 = vmul.f32 %v1780, %v2504
    %v2508 = vmul.f32 %v1781, %v2504
    %v2509 = vmul.f32 %v1782, %v2504
    %v2510 = vmul.f32 %v1783, %v2504
    %v2511 = vmul.f32 %v1784, %v2504
    %v2512 = vmul.f32 %v1785, %v2504
    %v2513 = vmul.f32 %v1786, %v2504
    %v2514 = vmul.f32 %v1787, %v2504
    %v2515 = vmul.f32 %v1788, %v2504
    %v2526 = vrot.slane %v2506, 2
    %v2527 = vrot.slane %v2507, 2
    %v2528 = vrot.slane %v2508, 2
    %v2529 = vsel %vm1635, %v2526, %v2528
    %v2530 = vrot.slane %v2509, 2
    %v2531 = vsel %vm1635, %v2527, %v2530
    %v2532 = vrot.slane %v2510, 2
    %v2533 = vsel %vm1635, %v2528, %v2532
    %v2534 = vrot.slane %v2511, 2
    %v2535 = vsel %vm1635, %v2530, %v2534
    %v2536 = vrot.slane %v2512, 2
    %v2537 = vsel %vm1635, %v2532, %v2536
    %v2538 = vrot.slane %v2513, 2
    %v2539 = vsel %vm1635, %v2534, %v2538
    %v2540 = vrot.slane %v2514, 2
    %v2541 = vsel %vm1635, %v2536, %v2540
    %v2542 = vrot.slane %v2515, 2
    %v2543 = vsel %vm1635, %v2538, %v2542
    %2544 = vrot.lane.b32.xlu0 %v2526, 126
    %v2545 = vpop.permute.xlu0 %2544
    %2546 = vrot.lane.b32.xlu0 %v2527, 126
    %v2547 = vpop.permute.xlu0 %2546
    %2548 = vrot.lane.b32.xlu0 %v2529, 126
    %v2549 = vpop.permute.xlu0 %2548
    %2550 = vrot.lane.b32.xlu0 %v2531, 126
    %v2551 = vpop.permute.xlu0 %2550
    %2552 = vrot.lane.b32.xlu0 %v2533, 126
    %v2553 = vpop.permute.xlu0 %2552
    %2554 = vrot.lane.b32.xlu0 %v2535, 126
    %v2555 = vpop.permute.xlu0 %2554
    %2556 = vrot.lane.b32.xlu0 %v2537, 126
    %v2557 = vpop.permute.xlu0 %2556
    %2558 = vrot.lane.b32.xlu0 %v2539, 126
    %v2559 = vpop.permute.xlu0 %2558
    %2560 = vrot.lane.b32.xlu0 %v2541, 126
    %v2561 = vpop.permute.xlu0 %2560
    %2562 = vrot.lane.b32.xlu0 %v2543, 126
    %v2563 = vpop.permute.xlu0 %2562
    %v2564 = vsel %vm513, %v2545, %v2547
    %v2565 = vsel %vm513, %v2549, %v2551
    %v2566 = vsel %vm513, %v2553, %v2555
    %v2567 = vsel %vm513, %v2557, %v2559
    %v2568 = vsel %vm513, %v2561, %v2563
    %v2574 = vadd.f32 %v2179, %v2564
    %v2575 = vadd.f32 %v2180, %v2565
    %v2576 = vadd.f32 %v2181, %v2566
    %v2577 = vadd.f32 %v2182, %v2567
    %v2578 = vadd.f32 %v2183, %v2568
    %2579 = vst [vmem:[%s3 - $0x7] sm:$0x80] %v2258
    %2580 = vst [vmem:[%s3 + $0x1] sm:$0xff] %v2259
    %2581 = vst [vmem:[%s3 + $0x9] sm:$0xff] %v2260
    %2582 = vst [vmem:[%s3 + $0x11] sm:$0xff] %v2261
    %2583 = vst [vmem:[%s3 + $0x19] sm:$0x7f] %v2262
    %s2584 = scalar_lea.vmem %s3, 64
    %2585 = vst [vmem:[%s2584 - $0x7] sm:$0x80] %v2337
    %2586 = vst [vmem:[%s2584 + $0x1] sm:$0xff] %v2338
    %2587 = vst [vmem:[%s2584 + $0x9] sm:$0xff] %v2339
    %2588 = vst [vmem:[%s2584 + $0x11] sm:$0xff] %v2340
    %2589 = vst [vmem:[%s2584 + $0x19] sm:$0x7f] %v2341
    %s2590 = scalar_lea.vmem %s3, 128
    %2591 = vst [vmem:[%s2590 - $0x7] sm:$0x80] %v2416
    %2592 = vst [vmem:[%s2590 + $0x1] sm:$0xff] %v2417
    %2593 = vst [vmem:[%s2590 + $0x9] sm:$0xff] %v2418
    %2594 = vst [vmem:[%s2590 + $0x11] sm:$0xff] %v2419
    %2595 = vst [vmem:[%s2590 + $0x19] sm:$0x7f] %v2420
    %s2596 = scalar_lea.vmem %s3, 192
    %2597 = vst [vmem:[%s2596 - $0x7] sm:$0x80] %v2495
    %2598 = vst [vmem:[%s2596 + $0x1] sm:$0xff] %v2496
    %2599 = vst [vmem:[%s2596 + $0x9] sm:$0xff] %v2497
    %2600 = vst [vmem:[%s2596 + $0x11] sm:$0xff] %v2498
    %2601 = vst [vmem:[%s2596 + $0x19] sm:$0x7f] %v2499
    %s2602 = scalar_lea.vmem %s3, 256
    %2603 = vst [vmem:[%s2602 - $0x7] sm:$0x80] %v2574
    %2604 = vst [vmem:[%s2602 + $0x1] sm:$0xff] %v2575
    %2605 = vst [vmem:[%s2602 + $0x9] sm:$0xff] %v2576
    %2606 = vst [vmem:[%s2602 + $0x11] sm:$0xff] %v2577
    %2607 = vst [vmem:[%s2602 + $0x19] sm:$0x7f] %v2578
    %v2608 = vld [vmem:[#allocation2 + $0x10] sm:$0xff]
    %v2609 = vld [vmem:[#allocation2 + $0x20] sm:$0xff]
    %v2610 = vld [vmem:[#allocation2 + $0x30] sm:$0xff]
    %v2611 = vld [vmem:[#allocation2 + $0x40] sm:$0xff]
    %v2612 = vld [vmem:[%s1 + $0x2d] sm:$0x1]
    %v2613 = vperm.slane %v2612, 0
    %v2614 = vmul.f32 %v2608, %v2613
    %v2615 = vmul.f32 %v2609, %v2613
    %v2616 = vmul.f32 %v2610, %v2613
    %v2617 = vmul.f32 %v2611, %v2613
    %v2618 = vadd.f32 %v86, %v2614
    %v2619 = vadd.f32 %v86, %v2615
    %v2620 = vadd.f32 %v86, %v2616
    %v2621 = vadd.f32 %v86, %v2617
    %v2622 = vld [vmem:[%s1 + $0x2e] sm:$0x1]
    %v2623 = vperm.slane %v2622, 0
    %v2624 = vmul.f32 %v2608, %v2623
    %v2625 = vmul.f32 %v2609, %v2623
    %v2626 = vmul.f32 %v2610, %v2623
    %v2627 = vmul.f32 %v2611, %v2623
    %v2628 = vadd.f32 %v87, %v2624
    %v2629 = vadd.f32 %v87, %v2625
    %v2630 = vadd.f32 %v87, %v2626
    %v2631 = vadd.f32 %v87, %v2627
    %v2632 = vld [vmem:[%s1 + $0x2f] sm:$0x1]
    %v2633 = vperm.slane %v2632, 0
    %v2634 = vmul.f32 %v2608, %v2633
    %v2635 = vmul.f32 %v2609, %v2633
    %v2636 = vmul.f32 %v2610, %v2633
    %v2637 = vmul.f32 %v2611, %v2633
    %v2638 = vadd.f32 %v88, %v2634
    %v2639 = vadd.f32 %v88, %v2635
    %v2640 = vadd.f32 %v88, %v2636
    %v2641 = vadd.f32 %v88, %v2637
    %v2642 = vld [vmem:[%s1 + $0x30] sm:$0x1]
    %v2643 = vperm.slane %v2642, 0
    %v2644 = vmul.f32 %v2608, %v2643
    %v2645 = vmul.f32 %v2609, %v2643
    %v2646 = vmul.f32 %v2610, %v2643
    %v2647 = vmul.f32 %v2611, %v2643
    %v2648 = vadd.f32 %v89, %v2644
    %v2649 = vadd.f32 %v89, %v2645
    %v2650 = vadd.f32 %v89, %v2646
    %v2651 = vadd.f32 %v89, %v2647
    %v2652 = vld [vmem:[%s1 + $0x31] sm:$0x1]
    %v2653 = vperm.slane %v2652, 0
    %v2654 = vmul.f32 %v2608, %v2653
    %v2655 = vmul.f32 %v2609, %v2653
    %v2656 = vmul.f32 %v2610, %v2653
    %v2657 = vmul.f32 %v2611, %v2653
    %v2658 = vadd.f32 %v90, %v2654
    %v2659 = vadd.f32 %v90, %v2655
    %v2660 = vadd.f32 %v90, %v2656
    %v2661 = vadd.f32 %v90, %v2657
    %v2662 = vld [vmem:[#allocation2 + $0x18] sm:$0xff]
    %v2663 = vld [vmem:[#allocation2 + $0x28] sm:$0xff]
    %v2664 = vld [vmem:[#allocation2 + $0x38] sm:$0xff]
    %v2665 = vld [vmem:[#allocation2 + $0x48] sm:$0xff]
    %v2666 = vld [vmem:[%s1 + $0x32] sm:$0x1]
    %v2667 = vperm.slane %v2666, 0
    %2669 = vrot.lane.b32.xlu0 %v2667, 1
    %v2670 = vpop.permute.xlu0 %2669
    %v2672 = vmul.f32 %v2608, %v2670
    %v2673 = vmul.f32 %v2662, %v2670
    %v2674 = vmul.f32 %v2609, %v2670
    %v2675 = vmul.f32 %v2663, %v2670
    %v2676 = vmul.f32 %v2610, %v2670
    %v2677 = vmul.f32 %v2664, %v2670
    %v2678 = vmul.f32 %v2611, %v2670
    %v2679 = vmul.f32 %v2665, %v2670
    %2688 = vrot.lane.b32.xlu0 %v2672, 127
    %v2689 = vpop.permute.xlu0 %2688
    %2690 = vrot.lane.b32.xlu0 %v2673, 127
    %v2691 = vpop.permute.xlu0 %2690
    %2692 = vrot.lane.b32.xlu0 %v2674, 127
    %v2693 = vpop.permute.xlu0 %2692
    %2694 = vrot.lane.b32.xlu0 %v2675, 127
    %v2695 = vpop.permute.xlu0 %2694
    %2696 = vrot.lane.b32.xlu0 %v2676, 127
    %v2697 = vpop.permute.xlu0 %2696
    %2698 = vrot.lane.b32.xlu0 %v2677, 127
    %v2699 = vpop.permute.xlu0 %2698
    %2700 = vrot.lane.b32.xlu0 %v2678, 127
    %v2701 = vpop.permute.xlu0 %2700
    %2702 = vrot.lane.b32.xlu0 %v2679, 127
    %v2703 = vpop.permute.xlu0 %2702
    %v2704 = vsel %vm207, %v2689, %v2691
    %v2705 = vsel %vm207, %v2693, %v2695
    %v2706 = vsel %vm207, %v2697, %v2699
    %v2707 = vsel %vm207, %v2701, %v2703
    %v2712 = vadd.f32 %v2618, %v2704
    %v2713 = vadd.f32 %v2619, %v2705
    %v2714 = vadd.f32 %v2620, %v2706
    %v2715 = vadd.f32 %v2621, %v2707
    %v2716 = vld [vmem:[%s1 + $0x33] sm:$0x1]
    %v2717 = vperm.slane %v2716, 0
    %2719 = vrot.lane.b32.xlu0 %v2717, 1
    %v2720 = vpop.permute.xlu0 %2719
    %v2722 = vmul.f32 %v2608, %v2720
    %v2723 = vmul.f32 %v2662, %v2720
    %v2724 = vmul.f32 %v2609, %v2720
    %v2725 = vmul.f32 %v2663, %v2720
    %v2726 = vmul.f32 %v2610, %v2720
    %v2727 = vmul.f32 %v2664, %v2720
    %v2728 = vmul.f32 %v2611, %v2720
    %v2729 = vmul.f32 %v2665, %v2720
    %2738 = vrot.lane.b32.xlu0 %v2722, 127
    %v2739 = vpop.permute.xlu0 %2738
    %2740 = vrot.lane.b32.xlu0 %v2723, 127
    %v2741 = vpop.permute.xlu0 %2740
    %2742 = vrot.lane.b32.xlu0 %v2724, 127
    %v2743 = vpop.permute.xlu0 %2742
    %2744 = vrot.lane.b32.xlu0 %v2725, 127
    %v2745 = vpop.permute.xlu0 %2744
    %2746 = vrot.lane.b32.xlu0 %v2726, 127
    %v2747 = vpop.permute.xlu0 %2746
    %2748 = vrot.lane.b32.xlu0 %v2727, 127
    %v2749 = vpop.permute.xlu0 %2748
    %2750 = vrot.lane.b32.xlu0 %v2728, 127
    %v2751 = vpop.permute.xlu0 %2750
    %2752 = vrot.lane.b32.xlu0 %v2729, 127
    %v2753 = vpop.permute.xlu0 %2752
    %v2754 = vsel %vm207, %v2739, %v2741
    %v2755 = vsel %vm207, %v2743, %v2745
    %v2756 = vsel %vm207, %v2747, %v2749
    %v2757 = vsel %vm207, %v2751, %v2753
    %v2762 = vadd.f32 %v2628, %v2754
    %v2763 = vadd.f32 %v2629, %v2755
    %v2764 = vadd.f32 %v2630, %v2756
    %v2765 = vadd.f32 %v2631, %v2757
    %v2766 = vld [vmem:[%s1 + $0x34] sm:$0x1]
    %v2767 = vperm.slane %v2766, 0
    %2769 = vrot.lane.b32.xlu0 %v2767, 1
    %v2770 = vpop.permute.xlu0 %2769
    %v2772 = vmul.f32 %v2608, %v2770
    %v2773 = vmul.f32 %v2662, %v2770
    %v2774 = vmul.f32 %v2609, %v2770
    %v2775 = vmul.f32 %v2663, %v2770
    %v2776 = vmul.f32 %v2610, %v2770
    %v2777 = vmul.f32 %v2664, %v2770
    %v2778 = vmul.f32 %v2611, %v2770
    %v2779 = vmul.f32 %v2665, %v2770
    %2788 = vrot.lane.b32.xlu0 %v2772, 127
    %v2789 = vpop.permute.xlu0 %2788
    %2790 = vrot.lane.b32.xlu0 %v2773, 127
    %v2791 = vpop.permute.xlu0 %2790
    %2792 = vrot.lane.b32.xlu0 %v2774, 127
    %v2793 = vpop.permute.xlu0 %2792
    %2794 = vrot.lane.b32.xlu0 %v2775, 127
    %v2795 = vpop.permute.xlu0 %2794
    %2796 = vrot.lane.b32.xlu0 %v2776, 127
    %v2797 = vpop.permute.xlu0 %2796
    %2798 = vrot.lane.b32.xlu0 %v2777, 127
    %v2799 = vpop.permute.xlu0 %2798
    %2800 = vrot.lane.b32.xlu0 %v2778, 127
    %v2801 = vpop.permute.xlu0 %2800
    %2802 = vrot.lane.b32.xlu0 %v2779, 127
    %v2803 = vpop.permute.xlu0 %2802
    %v2804 = vsel %vm207, %v2789, %v2791
    %v2805 = vsel %vm207, %v2793, %v2795
    %v2806 = vsel %vm207, %v2797, %v2799
    %v2807 = vsel %vm207, %v2801, %v2803
    %v2812 = vadd.f32 %v2638, %v2804
    %v2813 = vadd.f32 %v2639, %v2805
    %v2814 = vadd.f32 %v2640, %v2806
    %v2815 = vadd.f32 %v2641, %v2807
    %v2816 = vld [vmem:[%s1 + $0x35] sm:$0x1]
    %v2817 = vperm.slane %v2816, 0
    %2819 = vrot.lane.b32.xlu0 %v2817, 1
    %v2820 = vpop.permute.xlu0 %2819
    %v2822 = vmul.f32 %v2608, %v2820
    %v2823 = vmul.f32 %v2662, %v2820
    %v2824 = vmul.f32 %v2609, %v2820
    %v2825 = vmul.f32 %v2663, %v2820
    %v2826 = vmul.f32 %v2610, %v2820
    %v2827 = vmul.f32 %v2664, %v2820
    %v2828 = vmul.f32 %v2611, %v2820
    %v2829 = vmul.f32 %v2665, %v2820
    %2838 = vrot.lane.b32.xlu0 %v2822, 127
    %v2839 = vpop.permute.xlu0 %2838
    %2840 = vrot.lane.b32.xlu0 %v2823, 127
    %v2841 = vpop.permute.xlu0 %2840
    %2842 = vrot.lane.b32.xlu0 %v2824, 127
    %v2843 = vpop.permute.xlu0 %2842
    %2844 = vrot.lane.b32.xlu0 %v2825, 127
    %v2845 = vpop.permute.xlu0 %2844
    %2846 = vrot.lane.b32.xlu0 %v2826, 127
    %v2847 = vpop.permute.xlu0 %2846
    %2848 = vrot.lane.b32.xlu0 %v2827, 127
    %v2849 = vpop.permute.xlu0 %2848
    %2850 = vrot.lane.b32.xlu0 %v2828, 127
    %v2851 = vpop.permute.xlu0 %2850
    %2852 = vrot.lane.b32.xlu0 %v2829, 127
    %v2853 = vpop.permute.xlu0 %2852
    %v2854 = vsel %vm207, %v2839, %v2841
    %v2855 = vsel %vm207, %v2843, %v2845
    %v2856 = vsel %vm207, %v2847, %v2849
    %v2857 = vsel %vm207, %v2851, %v2853
    %v2862 = vadd.f32 %v2648, %v2854
    %v2863 = vadd.f32 %v2649, %v2855
    %v2864 = vadd.f32 %v2650, %v2856
    %v2865 = vadd.f32 %v2651, %v2857
    %v2866 = vld [vmem:[%s1 + $0x36] sm:$0x1]
    %v2867 = vperm.slane %v2866, 0
    %2869 = vrot.lane.b32.xlu0 %v2867, 1
    %v2870 = vpop.permute.xlu0 %2869
    %v2872 = vmul.f32 %v2608, %v2870
    %v2873 = vmul.f32 %v2662, %v2870
    %v2874 = vmul.f32 %v2609, %v2870
    %v2875 = vmul.f32 %v2663, %v2870
    %v2876 = vmul.f32 %v2610, %v2870
    %v2877 = vmul.f32 %v2664, %v2870
    %v2878 = vmul.f32 %v2611, %v2870
    %v2879 = vmul.f32 %v2665, %v2870
    %2888 = vrot.lane.b32.xlu0 %v2872, 127
    %v2889 = vpop.permute.xlu0 %2888
    %2890 = vrot.lane.b32.xlu0 %v2873, 127
    %v2891 = vpop.permute.xlu0 %2890
    %2892 = vrot.lane.b32.xlu0 %v2874, 127
    %v2893 = vpop.permute.xlu0 %2892
    %2894 = vrot.lane.b32.xlu0 %v2875, 127
    %v2895 = vpop.permute.xlu0 %2894
    %2896 = vrot.lane.b32.xlu0 %v2876, 127
    %v2897 = vpop.permute.xlu0 %2896
    %2898 = vrot.lane.b32.xlu0 %v2877, 127
    %v2899 = vpop.permute.xlu0 %2898
    %2900 = vrot.lane.b32.xlu0 %v2878, 127
    %v2901 = vpop.permute.xlu0 %2900
    %2902 = vrot.lane.b32.xlu0 %v2879, 127
    %v2903 = vpop.permute.xlu0 %2902
    %v2904 = vsel %vm207, %v2889, %v2891
    %v2905 = vsel %vm207, %v2893, %v2895
    %v2906 = vsel %vm207, %v2897, %v2899
    %v2907 = vsel %vm207, %v2901, %v2903
    %v2912 = vadd.f32 %v2658, %v2904
    %v2913 = vadd.f32 %v2659, %v2905
    %v2914 = vadd.f32 %v2660, %v2906
    %v2915 = vadd.f32 %v2661, %v2907
    %v2916 = vld [vmem:[%s1 + $0x37] sm:$0x1]
    %v2917 = vperm.slane %v2916, 0
    %2919 = vrot.lane.b32.xlu0 %v2917, 2
    %v2920 = vpop.permute.xlu0 %2919
    %v2922 = vmul.f32 %v2608, %v2920
    %v2923 = vmul.f32 %v2662, %v2920
    %v2924 = vmul.f32 %v2609, %v2920
    %v2925 = vmul.f32 %v2663, %v2920
    %v2926 = vmul.f32 %v2610, %v2920
    %v2927 = vmul.f32 %v2664, %v2920
    %v2928 = vmul.f32 %v2611, %v2920
    %v2929 = vmul.f32 %v2665, %v2920
    %2938 = vrot.lane.b32.xlu0 %v2922, 126
    %v2939 = vpop.permute.xlu0 %2938
    %2940 = vrot.lane.b32.xlu0 %v2923, 126
    %v2941 = vpop.permute.xlu0 %2940
    %2942 = vrot.lane.b32.xlu0 %v2924, 126
    %v2943 = vpop.permute.xlu0 %2942
    %2944 = vrot.lane.b32.xlu0 %v2925, 126
    %v2945 = vpop.permute.xlu0 %2944
    %2946 = vrot.lane.b32.xlu0 %v2926, 126
    %v2947 = vpop.permute.xlu0 %2946
    %2948 = vrot.lane.b32.xlu0 %v2927, 126
    %v2949 = vpop.permute.xlu0 %2948
    %2950 = vrot.lane.b32.xlu0 %v2928, 126
    %v2951 = vpop.permute.xlu0 %2950
    %2952 = vrot.lane.b32.xlu0 %v2929, 126
    %v2953 = vpop.permute.xlu0 %2952
    %v2954 = vsel %vm513, %v2939, %v2941
    %v2955 = vsel %vm513, %v2943, %v2945
    %v2956 = vsel %vm513, %v2947, %v2949
    %v2957 = vsel %vm513, %v2951, %v2953
    %v2962 = vadd.f32 %v2712, %v2954
    %v2963 = vadd.f32 %v2713, %v2955
    %v2964 = vadd.f32 %v2714, %v2956
    %v2965 = vadd.f32 %v2715, %v2957
    %v2966 = vld [vmem:[%s1 + $0x38] sm:$0x1]
    %v2967 = vperm.slane %v2966, 0
    %2969 = vrot.lane.b32.xlu0 %v2967, 2
    %v2970 = vpop.permute.xlu0 %2969
    %v2972 = vmul.f32 %v2608, %v2970
    %v2973 = vmul.f32 %v2662, %v2970
    %v2974 = vmul.f32 %v2609, %v2970
    %v2975 = vmul.f32 %v2663, %v2970
    %v2976 = vmul.f32 %v2610, %v2970
    %v2977 = vmul.f32 %v2664, %v2970
    %v2978 = vmul.f32 %v2611, %v2970
    %v2979 = vmul.f32 %v2665, %v2970
    %2988 = vrot.lane.b32.xlu0 %v2972, 126
    %v2989 = vpop.permute.xlu0 %2988
    %2990 = vrot.lane.b32.xlu0 %v2973, 126
    %v2991 = vpop.permute.xlu0 %2990
    %2992 = vrot.lane.b32.xlu0 %v2974, 126
    %v2993 = vpop.permute.xlu0 %2992
    %2994 = vrot.lane.b32.xlu0 %v2975, 126
    %v2995 = vpop.permute.xlu0 %2994
    %2996 = vrot.lane.b32.xlu0 %v2976, 126
    %v2997 = vpop.permute.xlu0 %2996
    %2998 = vrot.lane.b32.xlu0 %v2977, 126
    %v2999 = vpop.permute.xlu0 %2998
    %3000 = vrot.lane.b32.xlu0 %v2978, 126
    %v3001 = vpop.permute.xlu0 %3000
    %3002 = vrot.lane.b32.xlu0 %v2979, 126
    %v3003 = vpop.permute.xlu0 %3002
    %v3004 = vsel %vm513, %v2989, %v2991
    %v3005 = vsel %vm513, %v2993, %v2995
    %v3006 = vsel %vm513, %v2997, %v2999
    %v3007 = vsel %vm513, %v3001, %v3003
    %v3012 = vadd.f32 %v2762, %v3004
    %v3013 = vadd.f32 %v2763, %v3005
    %v3014 = vadd.f32 %v2764, %v3006
    %v3015 = vadd.f32 %v2765, %v3007
    %v3016 = vld [vmem:[%s1 + $0x39] sm:$0x1]
    %v3017 = vperm.slane %v3016, 0
    %3019 = vrot.lane.b32.xlu0 %v3017, 2
    %v3020 = vpop.permute.xlu0 %3019
    %v3022 = vmul.f32 %v2608, %v3020
    %v3023 = vmul.f32 %v2662, %v3020
    %v3024 = vmul.f32 %v2609, %v3020
    %v3025 = vmul.f32 %v2663, %v3020
    %v3026 = vmul.f32 %v2610, %v3020
    %v3027 = vmul.f32 %v2664, %v3020
    %v3028 = vmul.f32 %v2611, %v3020
    %v3029 = vmul.f32 %v2665, %v3020
    %3038 = vrot.lane.b32.xlu0 %v3022, 126
    %v3039 = vpop.permute.xlu0 %3038
    %3040 = vrot.lane.b32.xlu0 %v3023, 126
    %v3041 = vpop.permute.xlu0 %3040
    %3042 = vrot.lane.b32.xlu0 %v3024, 126
    %v3043 = vpop.permute.xlu0 %3042
    %3044 = vrot.lane.b32.xlu0 %v3025, 126
    %v3045 = vpop.permute.xlu0 %3044
    %3046 = vrot.lane.b32.xlu0 %v3026, 126
    %v3047 = vpop.permute.xlu0 %3046
    %3048 = vrot.lane.b32.xlu0 %v3027, 126
    %v3049 = vpop.permute.xlu0 %3048
    %3050 = vrot.lane.b32.xlu0 %v3028, 126
    %v3051 = vpop.permute.xlu0 %3050
    %3052 = vrot.lane.b32.xlu0 %v3029, 126
    %v3053 = vpop.permute.xlu0 %3052
    %v3054 = vsel %vm513, %v3039, %v3041
    %v3055 = vsel %vm513, %v3043, %v3045
    %v3056 = vsel %vm513, %v3047, %v3049
    %v3057 = vsel %vm513, %v3051, %v3053
    %v3062 = vadd.f32 %v2812, %v3054
    %v3063 = vadd.f32 %v2813, %v3055
    %v3064 = vadd.f32 %v2814, %v3056
    %v3065 = vadd.f32 %v2815, %v3057
    %v3066 = vld [vmem:[%s1 + $0x3a] sm:$0x1]
    %v3067 = vperm.slane %v3066, 0
    %3069 = vrot.lane.b32.xlu0 %v3067, 2
    %v3070 = vpop.permute.xlu0 %3069
    %v3072 = vmul.f32 %v2608, %v3070
    %v3073 = vmul.f32 %v2662, %v3070
    %v3074 = vmul.f32 %v2609, %v3070
    %v3075 = vmul.f32 %v2663, %v3070
    %v3076 = vmul.f32 %v2610, %v3070
    %v3077 = vmul.f32 %v2664, %v3070
    %v3078 = vmul.f32 %v2611, %v3070
    %v3079 = vmul.f32 %v2665, %v3070
    %3088 = vrot.lane.b32.xlu0 %v3072, 126
    %v3089 = vpop.permute.xlu0 %3088
    %3090 = vrot.lane.b32.xlu0 %v3073, 126
    %v3091 = vpop.permute.xlu0 %3090
    %3092 = vrot.lane.b32.xlu0 %v3074, 126
    %v3093 = vpop.permute.xlu0 %3092
    %3094 = vrot.lane.b32.xlu0 %v3075, 126
    %v3095 = vpop.permute.xlu0 %3094
    %3096 = vrot.lane.b32.xlu0 %v3076, 126
    %v3097 = vpop.permute.xlu0 %3096
    %3098 = vrot.lane.b32.xlu0 %v3077, 126
    %v3099 = vpop.permute.xlu0 %3098
    %3100 = vrot.lane.b32.xlu0 %v3078, 126
    %v3101 = vpop.permute.xlu0 %3100
    %3102 = vrot.lane.b32.xlu0 %v3079, 126
    %v3103 = vpop.permute.xlu0 %3102
    %v3104 = vsel %vm513, %v3089, %v3091
    %v3105 = vsel %vm513, %v3093, %v3095
    %v3106 = vsel %vm513, %v3097, %v3099
    %v3107 = vsel %vm513, %v3101, %v3103
    %v3112 = vadd.f32 %v2862, %v3104
    %v3113 = vadd.f32 %v2863, %v3105
    %v3114 = vadd.f32 %v2864, %v3106
    %v3115 = vadd.f32 %v2865, %v3107
    %v3116 = vld [vmem:[%s1 + $0x3b] sm:$0x1]
    %v3117 = vperm.slane %v3116, 0
    %3119 = vrot.lane.b32.xlu0 %v3117, 2
    %v3120 = vpop.permute.xlu0 %3119
    %v3122 = vmul.f32 %v2608, %v3120
    %v3123 = vmul.f32 %v2662, %v3120
    %v3124 = vmul.f32 %v2609, %v3120
    %v3125 = vmul.f32 %v2663, %v3120
    %v3126 = vmul.f32 %v2610, %v3120
    %v3127 = vmul.f32 %v2664, %v3120
    %v3128 = vmul.f32 %v2611, %v3120
    %v3129 = vmul.f32 %v2665, %v3120
    %3138 = vrot.lane.b32.xlu0 %v3122, 126
    %v3139 = vpop.permute.xlu0 %3138
    %3140 = vrot.lane.b32.xlu0 %v3123, 126
    %v3141 = vpop.permute.xlu0 %3140
    %3142 = vrot.lane.b32.xlu0 %v3124, 126
    %v3143 = vpop.permute.xlu0 %3142
    %3144 = vrot.lane.b32.xlu0 %v3125, 126
    %v3145 = vpop.permute.xlu0 %3144
    %3146 = vrot.lane.b32.xlu0 %v3126, 126
    %v3147 = vpop.permute.xlu0 %3146
    %3148 = vrot.lane.b32.xlu0 %v3127, 126
    %v3149 = vpop.permute.xlu0 %3148
    %3150 = vrot.lane.b32.xlu0 %v3128, 126
    %v3151 = vpop.permute.xlu0 %3150
    %3152 = vrot.lane.b32.xlu0 %v3129, 126
    %v3153 = vpop.permute.xlu0 %3152
    %v3154 = vsel %vm513, %v3139, %v3141
    %v3155 = vsel %vm513, %v3143, %v3145
    %v3156 = vsel %vm513, %v3147, %v3149
    %v3157 = vsel %vm513, %v3151, %v3153
    %v3162 = vadd.f32 %v2912, %v3154
    %v3163 = vadd.f32 %v2913, %v3155
    %v3164 = vadd.f32 %v2914, %v3156
    %v3165 = vadd.f32 %v2915, %v3157
    %v3166 = vld [vmem:[#allocation2 + $0x10] sm:$0xfe]
    %v3167 = vld [vmem:[#allocation2 + $0x50] sm:$0x1]
    %v3168 = vld [vmem:[%s1 + $0x3c] sm:$0x1]
    %v3169 = vperm.slane %v3168, 0
    %v3170 = vmul.f32 %v3166, %v3169
    %v3171 = vmul.f32 %v2609, %v3169
    %v3172 = vmul.f32 %v2610, %v3169
    %v3173 = vmul.f32 %v2611, %v3169
    %v3174 = vmul.f32 %v3167, %v3169
    %v3180 = vrot.slane %v3170, 1
    %v3181 = vrot.slane %v3171, 1
    %v3182 = vsel %vm784, %v3180, %v3181
    %v3183 = vrot.slane %v3172, 1
    %v3184 = vsel %vm784, %v3181, %v3183
    %v3185 = vrot.slane %v3173, 1
    %v3186 = vsel %vm784, %v3183, %v3185
    %v3187 = vrot.slane %v3174, 1
    %v3188 = vsel %vm784, %v3185, %v3187
    %v3193 = vadd.f32 %v2962, %v3182
    %v3194 = vadd.f32 %v2963, %v3184
    %v3195 = vadd.f32 %v2964, %v3186
    %v3196 = vadd.f32 %v2965, %v3188
    %v3197 = vld [vmem:[%s1 + $0x3d] sm:$0x1]
    %v3198 = vperm.slane %v3197, 0
    %v3199 = vmul.f32 %v3166, %v3198
    %v3200 = vmul.f32 %v2609, %v3198
    %v3201 = vmul.f32 %v2610, %v3198
    %v3202 = vmul.f32 %v2611, %v3198
    %v3203 = vmul.f32 %v3167, %v3198
    %v3209 = vrot.slane %v3199, 1
    %v3210 = vrot.slane %v3200, 1
    %v3211 = vsel %vm784, %v3209, %v3210
    %v3212 = vrot.slane %v3201, 1
    %v3213 = vsel %vm784, %v3210, %v3212
    %v3214 = vrot.slane %v3202, 1
    %v3215 = vsel %vm784, %v3212, %v3214
    %v3216 = vrot.slane %v3203, 1
    %v3217 = vsel %vm784, %v3214, %v3216
    %v3222 = vadd.f32 %v3012, %v3211
    %v3223 = vadd.f32 %v3013, %v3213
    %v3224 = vadd.f32 %v3014, %v3215
    %v3225 = vadd.f32 %v3015, %v3217
    %v3226 = vld [vmem:[%s1 + $0x3e] sm:$0x1]
    %v3227 = vperm.slane %v3226, 0
    %v3228 = vmul.f32 %v3166, %v3227
    %v3229 = vmul.f32 %v2609, %v3227
    %v3230 = vmul.f32 %v2610, %v3227
    %v3231 = vmul.f32 %v2611, %v3227
    %v3232 = vmul.f32 %v3167, %v3227
    %v3238 = vrot.slane %v3228, 1
    %v3239 = vrot.slane %v3229, 1
    %v3240 = vsel %vm784, %v3238, %v3239
    %v3241 = vrot.slane %v3230, 1
    %v3242 = vsel %vm784, %v3239, %v3241
    %v3243 = vrot.slane %v3231, 1
    %v3244 = vsel %vm784, %v3241, %v3243
    %v3245 = vrot.slane %v3232, 1
    %v3246 = vsel %vm784, %v3243, %v3245
    %v3251 = vadd.f32 %v3062, %v3240
    %v3252 = vadd.f32 %v3063, %v3242
    %v3253 = vadd.f32 %v3064, %v3244
    %v3254 = vadd.f32 %v3065, %v3246
    %v3255 = vld [vmem:[%s1 + $0x3f] sm:$0x1]
    %v3256 = vperm.slane %v3255, 0
    %v3257 = vmul.f32 %v3166, %v3256
    %v3258 = vmul.f32 %v2609, %v3256
    %v3259 = vmul.f32 %v2610, %v3256
    %v3260 = vmul.f32 %v2611, %v3256
    %v3261 = vmul.f32 %v3167, %v3256
    %v3267 = vrot.slane %v3257, 1
    %v3268 = vrot.slane %v3258, 1
    %v3269 = vsel %vm784, %v3267, %v3268
    %v3270 = vrot.slane %v3259, 1
    %v3271 = vsel %vm784, %v3268, %v3270
    %v3272 = vrot.slane %v3260, 1
    %v3273 = vsel %vm784, %v3270, %v3272
    %v3274 = vrot.slane %v3261, 1
    %v3275 = vsel %vm784, %v3272, %v3274
    %v3280 = vadd.f32 %v3112, %v3269
    %v3281 = vadd.f32 %v3113, %v3271
    %v3282 = vadd.f32 %v3114, %v3273
    %v3283 = vadd.f32 %v3115, %v3275
    %v3284 = vld [vmem:[%s1 + $0x40] sm:$0x1]
    %v3285 = vperm.slane %v3284, 0
    %v3286 = vmul.f32 %v3166, %v3285
    %v3287 = vmul.f32 %v2609, %v3285
    %v3288 = vmul.f32 %v2610, %v3285
    %v3289 = vmul.f32 %v2611, %v3285
    %v3290 = vmul.f32 %v3167, %v3285
    %v3296 = vrot.slane %v3286, 1
    %v3297 = vrot.slane %v3287, 1
    %v3298 = vsel %vm784, %v3296, %v3297
    %v3299 = vrot.slane %v3288, 1
    %v3300 = vsel %vm784, %v3297, %v3299
    %v3301 = vrot.slane %v3289, 1
    %v3302 = vsel %vm784, %v3299, %v3301
    %v3303 = vrot.slane %v3290, 1
    %v3304 = vsel %vm784, %v3301, %v3303
    %v3309 = vadd.f32 %v3162, %v3298
    %v3310 = vadd.f32 %v3163, %v3300
    %v3311 = vadd.f32 %v3164, %v3302
    %v3312 = vadd.f32 %v3165, %v3304
    %v3313 = vld [vmem:[#allocation2 + $0x10] sm:$0xfe]
    %v3314 = vld [vmem:[#allocation2 + $0x18] sm:$0xfe]
    %v3315 = vld [vmem:[#allocation2 + $0x20] sm:$0xff]
    %v3316 = vld [vmem:[#allocation2 + $0x28] sm:$0xff]
    %v3317 = vld [vmem:[#allocation2 + $0x30] sm:$0xff]
    %v3318 = vld [vmem:[#allocation2 + $0x38] sm:$0xff]
    %v3319 = vld [vmem:[#allocation2 + $0x40] sm:$0xff]
    %v3320 = vld [vmem:[#allocation2 + $0x48] sm:$0xff]
    %v3321 = vld [vmem:[#allocation2 + $0x50] sm:$0x1]
    %v3322 = vld [vmem:[#allocation2 + $0x58] sm:$0x1]
    %v3323 = vld [vmem:[%s1 + $0x41] sm:$0x1]
    %v3324 = vperm.slane %v3323, 0
    %3326 = vrot.lane.b32.xlu0 %v3324, 1
    %v3327 = vpop.permute.xlu0 %3326
    %v3329 = vmul.f32 %v3313, %v3327
    %v3330 = vmul.f32 %v3314, %v3327
    %v3331 = vmul.f32 %v3315, %v3327
    %v3332 = vmul.f32 %v3316, %v3327
    %v3333 = vmul.f32 %v3317, %v3327
    %v3334 = vmul.f32 %v3318, %v3327
    %v3335 = vmul.f32 %v3319, %v3327
    %v3336 = vmul.f32 %v3320, %v3327
    %v3337 = vmul.f32 %v3321, %v3327
    %v3338 = vmul.f32 %v3322, %v3327
    %v3349 = vrot.slane %v3329, 1
    %v3350 = vrot.slane %v3331, 1
    %v3351 = vsel %vm784, %v3349, %v3350
    %v3352 = vrot.slane %v3330, 1
    %v3353 = vrot.slane %v3332, 1
    %v3354 = vsel %vm784, %v3352, %v3353
    %v3355 = vrot.slane %v3333, 1
    %v3356 = vsel %vm784, %v3350, %v3355
    %v3357 = vrot.slane %v3334, 1
    %v3358 = vsel %vm784, %v3353, %v3357
    %v3359 = vrot.slane %v3335, 1
    %v3360 = vsel %vm784, %v3355, %v3359
    %v3361 = vrot.slane %v3336, 1
    %v3362 = vsel %vm784, %v3357, %v3361
    %v3363 = vrot.slane %v3337, 1
    %v3364 = vsel %vm784, %v3359, %v3363
    %v3365 = vrot.slane %v3338, 1
    %v3366 = vsel %vm784, %v3361, %v3365
    %3367 = vrot.lane.b32.xlu0 %v3351, 127
    %v3368 = vpop.permute.xlu0 %3367
    %3369 = vrot.lane.b32.xlu0 %v3354, 127
    %v3370 = vpop.permute.xlu0 %3369
    %3371 = vrot.lane.b32.xlu0 %v3356, 127
    %v3372 = vpop.permute.xlu0 %3371
    %3373 = vrot.lane.b32.xlu0 %v3358, 127
    %v3374 = vpop.permute.xlu0 %3373
    %3375 = vrot.lane.b32.xlu0 %v3360, 127
    %v3376 = vpop.permute.xlu0 %3375
    %3377 = vrot.lane.b32.xlu0 %v3362, 127
    %v3378 = vpop.permute.xlu0 %3377
    %3379 = vrot.lane.b32.xlu0 %v3364, 127
    %v3380 = vpop.permute.xlu0 %3379
    %3381 = vrot.lane.b32.xlu0 %v3366, 127
    %v3382 = vpop.permute.xlu0 %3381
    %v3383 = vsel %vm207, %v3368, %v3370
    %v3384 = vsel %vm207, %v3372, %v3374
    %v3385 = vsel %vm207, %v3376, %v3378
    %v3386 = vsel %vm207, %v3380, %v3382
    %v3391 = vadd.f32 %v3193, %v3383
    %v3392 = vadd.f32 %v3194, %v3384
    %v3393 = vadd.f32 %v3195, %v3385
    %v3394 = vadd.f32 %v3196, %v3386
    %v3395 = vld [vmem:[%s1 + $0x42] sm:$0x1]
    %v3396 = vperm.slane %v3395, 0
    %3398 = vrot.lane.b32.xlu0 %v3396, 1
    %v3399 = vpop.permute.xlu0 %3398
    %v3401 = vmul.f32 %v3313, %v3399
    %v3402 = vmul.f32 %v3314, %v3399
    %v3403 = vmul.f32 %v3315, %v3399
    %v3404 = vmul.f32 %v3316, %v3399
    %v3405 = vmul.f32 %v3317, %v3399
    %v3406 = vmul.f32 %v3318, %v3399
    %v3407 = vmul.f32 %v3319, %v3399
    %v3408 = vmul.f32 %v3320, %v3399
    %v3409 = vmul.f32 %v3321, %v3399
    %v3410 = vmul.f32 %v3322, %v3399
    %v3421 = vrot.slane %v3401, 1
    %v3422 = vrot.slane %v3403, 1
    %v3423 = vsel %vm784, %v3421, %v3422
    %v3424 = vrot.slane %v3402, 1
    %v3425 = vrot.slane %v3404, 1
    %v3426 = vsel %vm784, %v3424, %v3425
    %v3427 = vrot.slane %v3405, 1
    %v3428 = vsel %vm784, %v3422, %v3427
    %v3429 = vrot.slane %v3406, 1
    %v3430 = vsel %vm784, %v3425, %v3429
    %v3431 = vrot.slane %v3407, 1
    %v3432 = vsel %vm784, %v3427, %v3431
    %v3433 = vrot.slane %v3408, 1
    %v3434 = vsel %vm784, %v3429, %v3433
    %v3435 = vrot.slane %v3409, 1
    %v3436 = vsel %vm784, %v3431, %v3435
    %v3437 = vrot.slane %v3410, 1
    %v3438 = vsel %vm784, %v3433, %v3437
    %3439 = vrot.lane.b32.xlu0 %v3423, 127
    %v3440 = vpop.permute.xlu0 %3439
    %3441 = vrot.lane.b32.xlu0 %v3426, 127
    %v3442 = vpop.permute.xlu0 %3441
    %3443 = vrot.lane.b32.xlu0 %v3428, 127
    %v3444 = vpop.permute.xlu0 %3443
    %3445 = vrot.lane.b32.xlu0 %v3430, 127
    %v3446 = vpop.permute.xlu0 %3445
    %3447 = vrot.lane.b32.xlu0 %v3432, 127
    %v3448 = vpop.permute.xlu0 %3447
    %3449 = vrot.lane.b32.xlu0 %v3434, 127
    %v3450 = vpop.permute.xlu0 %3449
    %3451 = vrot.lane.b32.xlu0 %v3436, 127
    %v3452 = vpop.permute.xlu0 %3451
    %3453 = vrot.lane.b32.xlu0 %v3438, 127
    %v3454 = vpop.permute.xlu0 %3453
    %v3455 = vsel %vm207, %v3440, %v3442
    %v3456 = vsel %vm207, %v3444, %v3446
    %v3457 = vsel %vm207, %v3448, %v3450
    %v3458 = vsel %vm207, %v3452, %v3454
    %v3463 = vadd.f32 %v3222, %v3455
    %v3464 = vadd.f32 %v3223, %v3456
    %v3465 = vadd.f32 %v3224, %v3457
    %v3466 = vadd.f32 %v3225, %v3458
    %v3467 = vld [vmem:[%s1 + $0x43] sm:$0x1]
    %v3468 = vperm.slane %v3467, 0
    %3470 = vrot.lane.b32.xlu0 %v3468, 1
    %v3471 = vpop.permute.xlu0 %3470
    %v3473 = vmul.f32 %v3313, %v3471
    %v3474 = vmul.f32 %v3314, %v3471
    %v3475 = vmul.f32 %v3315, %v3471
    %v3476 = vmul.f32 %v3316, %v3471
    %v3477 = vmul.f32 %v3317, %v3471
    %v3478 = vmul.f32 %v3318, %v3471
    %v3479 = vmul.f32 %v3319, %v3471
    %v3480 = vmul.f32 %v3320, %v3471
    %v3481 = vmul.f32 %v3321, %v3471
    %v3482 = vmul.f32 %v3322, %v3471
    %v3493 = vrot.slane %v3473, 1
    %v3494 = vrot.slane %v3475, 1
    %v3495 = vsel %vm784, %v3493, %v3494
    %v3496 = vrot.slane %v3474, 1
    %v3497 = vrot.slane %v3476, 1
    %v3498 = vsel %vm784, %v3496, %v3497
    %v3499 = vrot.slane %v3477, 1
    %v3500 = vsel %vm784, %v3494, %v3499
    %v3501 = vrot.slane %v3478, 1
    %v3502 = vsel %vm784, %v3497, %v3501
    %v3503 = vrot.slane %v3479, 1
    %v3504 = vsel %vm784, %v3499, %v3503
    %v3505 = vrot.slane %v3480, 1
    %v3506 = vsel %vm784, %v3501, %v3505
    %v3507 = vrot.slane %v3481, 1
    %v3508 = vsel %vm784, %v3503, %v3507
    %v3509 = vrot.slane %v3482, 1
    %v3510 = vsel %vm784, %v3505, %v3509
    %3511 = vrot.lane.b32.xlu0 %v3495, 127
    %v3512 = vpop.permute.xlu0 %3511
    %3513 = vrot.lane.b32.xlu0 %v3498, 127
    %v3514 = vpop.permute.xlu0 %3513
    %3515 = vrot.lane.b32.xlu0 %v3500, 127
    %v3516 = vpop.permute.xlu0 %3515
    %3517 = vrot.lane.b32.xlu0 %v3502, 127
    %v3518 = vpop.permute.xlu0 %3517
    %3519 = vrot.lane.b32.xlu0 %v3504, 127
    %v3520 = vpop.permute.xlu0 %3519
    %3521 = vrot.lane.b32.xlu0 %v3506, 127
    %v3522 = vpop.permute.xlu0 %3521
    %3523 = vrot.lane.b32.xlu0 %v3508, 127
    %v3524 = vpop.permute.xlu0 %3523
    %3525 = vrot.lane.b32.xlu0 %v3510, 127
    %v3526 = vpop.permute.xlu0 %3525
    %v3527 = vsel %vm207, %v3512, %v3514
    %v3528 = vsel %vm207, %v3516, %v3518
    %v3529 = vsel %vm207, %v3520, %v3522
    %v3530 = vsel %vm207, %v3524, %v3526
    %v3535 = vadd.f32 %v3251, %v3527
    %v3536 = vadd.f32 %v3252, %v3528
    %v3537 = vadd.f32 %v3253, %v3529
    %v3538 = vadd.f32 %v3254, %v3530
    %v3539 = vld [vmem:[%s1 + $0x44] sm:$0x1]
    %v3540 = vperm.slane %v3539, 0
    %3542 = vrot.lane.b32.xlu0 %v3540, 1
    %v3543 = vpop.permute.xlu0 %3542
    %v3545 = vmul.f32 %v3313, %v3543
    %v3546 = vmul.f32 %v3314, %v3543
    %v3547 = vmul.f32 %v3315, %v3543
    %v3548 = vmul.f32 %v3316, %v3543
    %v3549 = vmul.f32 %v3317, %v3543
    %v3550 = vmul.f32 %v3318, %v3543
    %v3551 = vmul.f32 %v3319, %v3543
    %v3552 = vmul.f32 %v3320, %v3543
    %v3553 = vmul.f32 %v3321, %v3543
    %v3554 = vmul.f32 %v3322, %v3543
    %v3565 = vrot.slane %v3545, 1
    %v3566 = vrot.slane %v3547, 1
    %v3567 = vsel %vm784, %v3565, %v3566
    %v3568 = vrot.slane %v3546, 1
    %v3569 = vrot.slane %v3548, 1
    %v3570 = vsel %vm784, %v3568, %v3569
    %v3571 = vrot.slane %v3549, 1
    %v3572 = vsel %vm784, %v3566, %v3571
    %v3573 = vrot.slane %v3550, 1
    %v3574 = vsel %vm784, %v3569, %v3573
    %v3575 = vrot.slane %v3551, 1
    %v3576 = vsel %vm784, %v3571, %v3575
    %v3577 = vrot.slane %v3552, 1
    %v3578 = vsel %vm784, %v3573, %v3577
    %v3579 = vrot.slane %v3553, 1
    %v3580 = vsel %vm784, %v3575, %v3579
    %v3581 = vrot.slane %v3554, 1
    %v3582 = vsel %vm784, %v3577, %v3581
    %3583 = vrot.lane.b32.xlu0 %v3567, 127
    %v3584 = vpop.permute.xlu0 %3583
    %3585 = vrot.lane.b32.xlu0 %v3570, 127
    %v3586 = vpop.permute.xlu0 %3585
    %3587 = vrot.lane.b32.xlu0 %v3572, 127
    %v3588 = vpop.permute.xlu0 %3587
    %3589 = vrot.lane.b32.xlu0 %v3574, 127
    %v3590 = vpop.permute.xlu0 %3589
    %3591 = vrot.lane.b32.xlu0 %v3576, 127
    %v3592 = vpop.permute.xlu0 %3591
    %3593 = vrot.lane.b32.xlu0 %v3578, 127
    %v3594 = vpop.permute.xlu0 %3593
    %3595 = vrot.lane.b32.xlu0 %v3580, 127
    %v3596 = vpop.permute.xlu0 %3595
    %3597 = vrot.lane.b32.xlu0 %v3582, 127
    %v3598 = vpop.permute.xlu0 %3597
    %v3599 = vsel %vm207, %v3584, %v3586
    %v3600 = vsel %vm207, %v3588, %v3590
    %v3601 = vsel %vm207, %v3592, %v3594
    %v3602 = vsel %vm207, %v3596, %v3598
    %v3607 = vadd.f32 %v3280, %v3599
    %v3608 = vadd.f32 %v3281, %v3600
    %v3609 = vadd.f32 %v3282, %v3601
    %v3610 = vadd.f32 %v3283, %v3602
    %v3611 = vld [vmem:[%s1 + $0x45] sm:$0x1]
    %v3612 = vperm.slane %v3611, 0
    %3614 = vrot.lane.b32.xlu0 %v3612, 1
    %v3615 = vpop.permute.xlu0 %3614
    %v3617 = vmul.f32 %v3313, %v3615
    %v3618 = vmul.f32 %v3314, %v3615
    %v3619 = vmul.f32 %v3315, %v3615
    %v3620 = vmul.f32 %v3316, %v3615
    %v3621 = vmul.f32 %v3317, %v3615
    %v3622 = vmul.f32 %v3318, %v3615
    %v3623 = vmul.f32 %v3319, %v3615
    %v3624 = vmul.f32 %v3320, %v3615
    %v3625 = vmul.f32 %v3321, %v3615
    %v3626 = vmul.f32 %v3322, %v3615
    %v3637 = vrot.slane %v3617, 1
    %v3638 = vrot.slane %v3619, 1
    %v3639 = vsel %vm784, %v3637, %v3638
    %v3640 = vrot.slane %v3618, 1
    %v3641 = vrot.slane %v3620, 1
    %v3642 = vsel %vm784, %v3640, %v3641
    %v3643 = vrot.slane %v3621, 1
    %v3644 = vsel %vm784, %v3638, %v3643
    %v3645 = vrot.slane %v3622, 1
    %v3646 = vsel %vm784, %v3641, %v3645
    %v3647 = vrot.slane %v3623, 1
    %v3648 = vsel %vm784, %v3643, %v3647
    %v3649 = vrot.slane %v3624, 1
    %v3650 = vsel %vm784, %v3645, %v3649
    %v3651 = vrot.slane %v3625, 1
    %v3652 = vsel %vm784, %v3647, %v3651
    %v3653 = vrot.slane %v3626, 1
    %v3654 = vsel %vm784, %v3649, %v3653
    %3655 = vrot.lane.b32.xlu0 %v3639, 127
    %v3656 = vpop.permute.xlu0 %3655
    %3657 = vrot.lane.b32.xlu0 %v3642, 127
    %v3658 = vpop.permute.xlu0 %3657
    %3659 = vrot.lane.b32.xlu0 %v3644, 127
    %v3660 = vpop.permute.xlu0 %3659
    %3661 = vrot.lane.b32.xlu0 %v3646, 127
    %v3662 = vpop.permute.xlu0 %3661
    %3663 = vrot.lane.b32.xlu0 %v3648, 127
    %v3664 = vpop.permute.xlu0 %3663
    %3665 = vrot.lane.b32.xlu0 %v3650, 127
    %v3666 = vpop.permute.xlu0 %3665
    %3667 = vrot.lane.b32.xlu0 %v3652, 127
    %v3668 = vpop.permute.xlu0 %3667
    %3669 = vrot.lane.b32.xlu0 %v3654, 127
    %v3670 = vpop.permute.xlu0 %3669
    %v3671 = vsel %vm207, %v3656, %v3658
    %v3672 = vsel %vm207, %v3660, %v3662
    %v3673 = vsel %vm207, %v3664, %v3666
    %v3674 = vsel %vm207, %v3668, %v3670
    %v3679 = vadd.f32 %v3309, %v3671
    %v3680 = vadd.f32 %v3310, %v3672
    %v3681 = vadd.f32 %v3311, %v3673
    %v3682 = vadd.f32 %v3312, %v3674
    %v3683 = vld [vmem:[%s1 + $0x46] sm:$0x1]
    %v3684 = vperm.slane %v3683, 0
    %3686 = vrot.lane.b32.xlu0 %v3684, 2
    %v3687 = vpop.permute.xlu0 %3686
    %v3689 = vmul.f32 %v3313, %v3687
    %v3690 = vmul.f32 %v3314, %v3687
    %v3691 = vmul.f32 %v3315, %v3687
    %v3692 = vmul.f32 %v3316, %v3687
    %v3693 = vmul.f32 %v3317, %v3687
    %v3694 = vmul.f32 %v3318, %v3687
    %v3695 = vmul.f32 %v3319, %v3687
    %v3696 = vmul.f32 %v3320, %v3687
    %v3697 = vmul.f32 %v3321, %v3687
    %v3698 = vmul.f32 %v3322, %v3687
    %v3709 = vrot.slane %v3689, 1
    %v3710 = vrot.slane %v3691, 1
    %v3711 = vsel %vm784, %v3709, %v3710
    %v3712 = vrot.slane %v3690, 1
    %v3713 = vrot.slane %v3692, 1
    %v3714 = vsel %vm784, %v3712, %v3713
    %v3715 = vrot.slane %v3693, 1
    %v3716 = vsel %vm784, %v3710, %v3715
    %v3717 = vrot.slane %v3694, 1
    %v3718 = vsel %vm784, %v3713, %v3717
    %v3719 = vrot.slane %v3695, 1
    %v3720 = vsel %vm784, %v3715, %v3719
    %v3721 = vrot.slane %v3696, 1
    %v3722 = vsel %vm784, %v3717, %v3721
    %v3723 = vrot.slane %v3697, 1
    %v3724 = vsel %vm784, %v3719, %v3723
    %v3725 = vrot.slane %v3698, 1
    %v3726 = vsel %vm784, %v3721, %v3725
    %3727 = vrot.lane.b32.xlu0 %v3711, 126
    %v3728 = vpop.permute.xlu0 %3727
    %3729 = vrot.lane.b32.xlu0 %v3714, 126
    %v3730 = vpop.permute.xlu0 %3729
    %3731 = vrot.lane.b32.xlu0 %v3716, 126
    %v3732 = vpop.permute.xlu0 %3731
    %3733 = vrot.lane.b32.xlu0 %v3718, 126
    %v3734 = vpop.permute.xlu0 %3733
    %3735 = vrot.lane.b32.xlu0 %v3720, 126
    %v3736 = vpop.permute.xlu0 %3735
    %3737 = vrot.lane.b32.xlu0 %v3722, 126
    %v3738 = vpop.permute.xlu0 %3737
    %3739 = vrot.lane.b32.xlu0 %v3724, 126
    %v3740 = vpop.permute.xlu0 %3739
    %3741 = vrot.lane.b32.xlu0 %v3726, 126
    %v3742 = vpop.permute.xlu0 %3741
    %v3743 = vsel %vm513, %v3728, %v3730
    %v3744 = vsel %vm513, %v3732, %v3734
    %v3745 = vsel %vm513, %v3736, %v3738
    %v3746 = vsel %vm513, %v3740, %v3742
    %v3751 = vadd.f32 %v3391, %v3743
    %v3752 = vadd.f32 %v3392, %v3744
    %v3753 = vadd.f32 %v3393, %v3745
    %v3754 = vadd.f32 %v3394, %v3746
    %v3755 = vld [vmem:[%s1 + $0x47] sm:$0x1]
    %v3756 = vperm.slane %v3755, 0
    %3758 = vrot.lane.b32.xlu0 %v3756, 2
    %v3759 = vpop.permute.xlu0 %3758
    %v3761 = vmul.f32 %v3313, %v3759
    %v3762 = vmul.f32 %v3314, %v3759
    %v3763 = vmul.f32 %v3315, %v3759
    %v3764 = vmul.f32 %v3316, %v3759
    %v3765 = vmul.f32 %v3317, %v3759
    %v3766 = vmul.f32 %v3318, %v3759
    %v3767 = vmul.f32 %v3319, %v3759
    %v3768 = vmul.f32 %v3320, %v3759
    %v3769 = vmul.f32 %v3321, %v3759
    %v3770 = vmul.f32 %v3322, %v3759
    %v3781 = vrot.slane %v3761, 1
    %v3782 = vrot.slane %v3763, 1
    %v3783 = vsel %vm784, %v3781, %v3782
    %v3784 = vrot.slane %v3762, 1
    %v3785 = vrot.slane %v3764, 1
    %v3786 = vsel %vm784, %v3784, %v3785
    %v3787 = vrot.slane %v3765, 1
    %v3788 = vsel %vm784, %v3782, %v3787
    %v3789 = vrot.slane %v3766, 1
    %v3790 = vsel %vm784, %v3785, %v3789
    %v3791 = vrot.slane %v3767, 1
    %v3792 = vsel %vm784, %v3787, %v3791
    %v3793 = vrot.slane %v3768, 1
    %v3794 = vsel %vm784, %v3789, %v3793
    %v3795 = vrot.slane %v3769, 1
    %v3796 = vsel %vm784, %v3791, %v3795
    %v3797 = vrot.slane %v3770, 1
    %v3798 = vsel %vm784, %v3793, %v3797
    %3799 = vrot.lane.b32.xlu0 %v3783, 126
    %v3800 = vpop.permute.xlu0 %3799
    %3801 = vrot.lane.b32.xlu0 %v3786, 126
    %v3802 = vpop.permute.xlu0 %3801
    %3803 = vrot.lane.b32.xlu0 %v3788, 126
    %v3804 = vpop.permute.xlu0 %3803
    %3805 = vrot.lane.b32.xlu0 %v3790, 126
    %v3806 = vpop.permute.xlu0 %3805
    %3807 = vrot.lane.b32.xlu0 %v3792, 126
    %v3808 = vpop.permute.xlu0 %3807
    %3809 = vrot.lane.b32.xlu0 %v3794, 126
    %v3810 = vpop.permute.xlu0 %3809
    %3811 = vrot.lane.b32.xlu0 %v3796, 126
    %v3812 = vpop.permute.xlu0 %3811
    %3813 = vrot.lane.b32.xlu0 %v3798, 126
    %v3814 = vpop.permute.xlu0 %3813
    %v3815 = vsel %vm513, %v3800, %v3802
    %v3816 = vsel %vm513, %v3804, %v3806
    %v3817 = vsel %vm513, %v3808, %v3810
    %v3818 = vsel %vm513, %v3812, %v3814
    %v3823 = vadd.f32 %v3463, %v3815
    %v3824 = vadd.f32 %v3464, %v3816
    %v3825 = vadd.f32 %v3465, %v3817
    %v3826 = vadd.f32 %v3466, %v3818
    %v3827 = vld [vmem:[%s1 + $0x48] sm:$0x1]
    %v3828 = vperm.slane %v3827, 0
    %3830 = vrot.lane.b32.xlu0 %v3828, 2
    %v3831 = vpop.permute.xlu0 %3830
    %v3833 = vmul.f32 %v3313, %v3831
    %v3834 = vmul.f32 %v3314, %v3831
    %v3835 = vmul.f32 %v3315, %v3831
    %v3836 = vmul.f32 %v3316, %v3831
    %v3837 = vmul.f32 %v3317, %v3831
    %v3838 = vmul.f32 %v3318, %v3831
    %v3839 = vmul.f32 %v3319, %v3831
    %v3840 = vmul.f32 %v3320, %v3831
    %v3841 = vmul.f32 %v3321, %v3831
    %v3842 = vmul.f32 %v3322, %v3831
    %v3853 = vrot.slane %v3833, 1
    %v3854 = vrot.slane %v3835, 1
    %v3855 = vsel %vm784, %v3853, %v3854
    %v3856 = vrot.slane %v3834, 1
    %v3857 = vrot.slane %v3836, 1
    %v3858 = vsel %vm784, %v3856, %v3857
    %v3859 = vrot.slane %v3837, 1
    %v3860 = vsel %vm784, %v3854, %v3859
    %v3861 = vrot.slane %v3838, 1
    %v3862 = vsel %vm784, %v3857, %v3861
    %v3863 = vrot.slane %v3839, 1
    %v3864 = vsel %vm784, %v3859, %v3863
    %v3865 = vrot.slane %v3840, 1
    %v3866 = vsel %vm784, %v3861, %v3865
    %v3867 = vrot.slane %v3841, 1
    %v3868 = vsel %vm784, %v3863, %v3867
    %v3869 = vrot.slane %v3842, 1
    %v3870 = vsel %vm784, %v3865, %v3869
    %3871 = vrot.lane.b32.xlu0 %v3855, 126
    %v3872 = vpop.permute.xlu0 %3871
    %3873 = vrot.lane.b32.xlu0 %v3858, 126
    %v3874 = vpop.permute.xlu0 %3873
    %3875 = vrot.lane.b32.xlu0 %v3860, 126
    %v3876 = vpop.permute.xlu0 %3875
    %3877 = vrot.lane.b32.xlu0 %v3862, 126
    %v3878 = vpop.permute.xlu0 %3877
    %3879 = vrot.lane.b32.xlu0 %v3864, 126
    %v3880 = vpop.permute.xlu0 %3879
    %3881 = vrot.lane.b32.xlu0 %v3866, 126
    %v3882 = vpop.permute.xlu0 %3881
    %3883 = vrot.lane.b32.xlu0 %v3868, 126
    %v3884 = vpop.permute.xlu0 %3883
    %3885 = vrot.lane.b32.xlu0 %v3870, 126
    %v3886 = vpop.permute.xlu0 %3885
    %v3887 = vsel %vm513, %v3872, %v3874
    %v3888 = vsel %vm513, %v3876, %v3878
    %v3889 = vsel %vm513, %v3880, %v3882
    %v3890 = vsel %vm513, %v3884, %v3886
    %v3895 = vadd.f32 %v3535, %v3887
    %v3896 = vadd.f32 %v3536, %v3888
    %v3897 = vadd.f32 %v3537, %v3889
    %v3898 = vadd.f32 %v3538, %v3890
    %v3899 = vld [vmem:[%s1 + $0x49] sm:$0x1]
    %v3900 = vperm.slane %v3899, 0
    %3902 = vrot.lane.b32.xlu0 %v3900, 2
    %v3903 = vpop.permute.xlu0 %3902
    %v3905 = vmul.f32 %v3313, %v3903
    %v3906 = vmul.f32 %v3314, %v3903
    %v3907 = vmul.f32 %v3315, %v3903
    %v3908 = vmul.f32 %v3316, %v3903
    %v3909 = vmul.f32 %v3317, %v3903
    %v3910 = vmul.f32 %v3318, %v3903
    %v3911 = vmul.f32 %v3319, %v3903
    %v3912 = vmul.f32 %v3320, %v3903
    %v3913 = vmul.f32 %v3321, %v3903
    %v3914 = vmul.f32 %v3322, %v3903
    %v3925 = vrot.slane %v3905, 1
    %v3926 = vrot.slane %v3907, 1
    %v3927 = vsel %vm784, %v3925, %v3926
    %v3928 = vrot.slane %v3906, 1
    %v3929 = vrot.slane %v3908, 1
    %v3930 = vsel %vm784, %v3928, %v3929
    %v3931 = vrot.slane %v3909, 1
    %v3932 = vsel %vm784, %v3926, %v3931
    %v3933 = vrot.slane %v3910, 1
    %v3934 = vsel %vm784, %v3929, %v3933
    %v3935 = vrot.slane %v3911, 1
    %v3936 = vsel %vm784, %v3931, %v3935
    %v3937 = vrot.slane %v3912, 1
    %v3938 = vsel %vm784, %v3933, %v3937
    %v3939 = vrot.slane %v3913, 1
    %v3940 = vsel %vm784, %v3935, %v3939
    %v3941 = vrot.slane %v3914, 1
    %v3942 = vsel %vm784, %v3937, %v3941
    %3943 = vrot.lane.b32.xlu0 %v3927, 126
    %v3944 = vpop.permute.xlu0 %3943
    %3945 = vrot.lane.b32.xlu0 %v3930, 126
    %v3946 = vpop.permute.xlu0 %3945
    %3947 = vrot.lane.b32.xlu0 %v3932, 126
    %v3948 = vpop.permute.xlu0 %3947
    %3949 = vrot.lane.b32.xlu0 %v3934, 126
    %v3950 = vpop.permute.xlu0 %3949
    %3951 = vrot.lane.b32.xlu0 %v3936, 126
    %v3952 = vpop.permute.xlu0 %3951
    %3953 = vrot.lane.b32.xlu0 %v3938, 126
    %v3954 = vpop.permute.xlu0 %3953
    %3955 = vrot.lane.b32.xlu0 %v3940, 126
    %v3956 = vpop.permute.xlu0 %3955
    %3957 = vrot.lane.b32.xlu0 %v3942, 126
    %v3958 = vpop.permute.xlu0 %3957
    %v3959 = vsel %vm513, %v3944, %v3946
    %v3960 = vsel %vm513, %v3948, %v3950
    %v3961 = vsel %vm513, %v3952, %v3954
    %v3962 = vsel %vm513, %v3956, %v3958
    %v3967 = vadd.f32 %v3607, %v3959
    %v3968 = vadd.f32 %v3608, %v3960
    %v3969 = vadd.f32 %v3609, %v3961
    %v3970 = vadd.f32 %v3610, %v3962
    %v3971 = vld [vmem:[%s1 + $0x4a] sm:$0x1]
    %v3972 = vperm.slane %v3971, 0
    %3974 = vrot.lane.b32.xlu0 %v3972, 2
    %v3975 = vpop.permute.xlu0 %3974
    %v3977 = vmul.f32 %v3313, %v3975
    %v3978 = vmul.f32 %v3314, %v3975
    %v3979 = vmul.f32 %v3315, %v3975
    %v3980 = vmul.f32 %v3316, %v3975
    %v3981 = vmul.f32 %v3317, %v3975
    %v3982 = vmul.f32 %v3318, %v3975
    %v3983 = vmul.f32 %v3319, %v3975
    %v3984 = vmul.f32 %v3320, %v3975
    %v3985 = vmul.f32 %v3321, %v3975
    %v3986 = vmul.f32 %v3322, %v3975
    %v3997 = vrot.slane %v3977, 1
    %v3998 = vrot.slane %v3979, 1
    %v3999 = vsel %vm784, %v3997, %v3998
    %v4000 = vrot.slane %v3978, 1
    %v4001 = vrot.slane %v3980, 1
    %v4002 = vsel %vm784, %v4000, %v4001
    %v4003 = vrot.slane %v3981, 1
    %v4004 = vsel %vm784, %v3998, %v4003
    %v4005 = vrot.slane %v3982, 1
    %v4006 = vsel %vm784, %v4001, %v4005
    %v4007 = vrot.slane %v3983, 1
    %v4008 = vsel %vm784, %v4003, %v4007
    %v4009 = vrot.slane %v3984, 1
    %v4010 = vsel %vm784, %v4005, %v4009
    %v4011 = vrot.slane %v3985, 1
    %v4012 = vsel %vm784, %v4007, %v4011
    %v4013 = vrot.slane %v3986, 1
    %v4014 = vsel %vm784, %v4009, %v4013
    %4015 = vrot.lane.b32.xlu0 %v3999, 126
    %v4016 = vpop.permute.xlu0 %4015
    %4017 = vrot.lane.b32.xlu0 %v4002, 126
    %v4018 = vpop.permute.xlu0 %4017
    %4019 = vrot.lane.b32.xlu0 %v4004, 126
    %v4020 = vpop.permute.xlu0 %4019
    %4021 = vrot.lane.b32.xlu0 %v4006, 126
    %v4022 = vpop.permute.xlu0 %4021
    %4023 = vrot.lane.b32.xlu0 %v4008, 126
    %v4024 = vpop.permute.xlu0 %4023
    %4025 = vrot.lane.b32.xlu0 %v4010, 126
    %v4026 = vpop.permute.xlu0 %4025
    %4027 = vrot.lane.b32.xlu0 %v4012, 126
    %v4028 = vpop.permute.xlu0 %4027
    %4029 = vrot.lane.b32.xlu0 %v4014, 126
    %v4030 = vpop.permute.xlu0 %4029
    %v4031 = vsel %vm513, %v4016, %v4018
    %v4032 = vsel %vm513, %v4020, %v4022
    %v4033 = vsel %vm513, %v4024, %v4026
    %v4034 = vsel %vm513, %v4028, %v4030
    %v4039 = vadd.f32 %v3679, %v4031
    %v4040 = vadd.f32 %v3680, %v4032
    %v4041 = vadd.f32 %v3681, %v4033
    %v4042 = vadd.f32 %v3682, %v4034
    %4043 = vst [vmem:[%s3 + $0x20] sm:$0xff] %v3751
    %4044 = vst [vmem:[%s3 + $0x28] sm:$0xff] %v3752
    %4045 = vst [vmem:[%s3 + $0x30] sm:$0xff] %v3753
    %4046 = vst [vmem:[%s3 + $0x38] sm:$0xff] %v3754
    %4047 = vst [vmem:[%s2584 + $0x20] sm:$0xff] %v3823
    %4048 = vst [vmem:[%s2584 + $0x28] sm:$0xff] %v3824
    %4049 = vst [vmem:[%s2584 + $0x30] sm:$0xff] %v3825
    %4050 = vst [vmem:[%s2584 + $0x38] sm:$0xff] %v3826
    %4051 = vst [vmem:[%s2590 + $0x20] sm:$0xff] %v3895
    %4052 = vst [vmem:[%s2590 + $0x28] sm:$0xff] %v3896
    %4053 = vst [vmem:[%s2590 + $0x30] sm:$0xff] %v3897
    %4054 = vst [vmem:[%s2590 + $0x38] sm:$0xff] %v3898
    %4055 = vst [vmem:[%s2596 + $0x20] sm:$0xff] %v3967
    %4056 = vst [vmem:[%s2596 + $0x28] sm:$0xff] %v3968
    %4057 = vst [vmem:[%s2596 + $0x30] sm:$0xff] %v3969
    %4058 = vst [vmem:[%s2596 + $0x38] sm:$0xff] %v3970
    %4059 = vst [vmem:[%s2602 + $0x20] sm:$0xff] %v4039
    %4060 = vst [vmem:[%s2602 + $0x28] sm:$0xff] %v4040
    %4061 = vst [vmem:[%s2602 + $0x30] sm:$0xff] %v4041
    %4062 = vst [vmem:[%s2602 + $0x38] sm:$0xff] %v4042
    // Predicated region
    $region18: #{_conv_transpose_linear.1} parent=1 // pred_check
      _
    $region19: #{_conv_transpose_linear.1} parent=1 // pred_check_branch
      %4064 = sbr.rel (0) target = $region21
    $region20: #{_conv_transpose_linear.1} parent=1 // pred_region
      _
    $region21: #{_conv_transpose_linear.1} parent=1 // pred_fallthru
      _
    // Predicated region
    $region22: #{_conv_transpose_linear.1} parent=1 // pred_check
      _
    $region23: #{_conv_transpose_linear.1} parent=1 // pred_check_branch
      %4066 = sbr.rel (0) target = $region25
    $region24: #{_conv_transpose_linear.1} parent=1 // pred_region
      _
    $region25: #{_conv_transpose_linear.1} parent=1 // pred_fallthru
      _
    %4067 = vsyncpa [#allocation4], 1

</llo_original>
